<compile_context>
chip_gen: v6e
topology: v6e:2x2x1
jax: 0.10.0
libtpu: 0.0.40
codegen_flags: <defaults>
</compile_context>

<pallas_src>
import jax
import jax.numpy as jnp
from jax.experimental import pallas as pl
from jax.experimental.pallas import tpu as pltpu

LATENT_DIM = 16
STARTING_FILTERS = 16
SEQ_LEN = 256            # 5 stride-2 convs: 256 -> 8; 8 * (16 * 2**4) = 2048 fc in-features
LEAKY_SLOPE = 0.01       # nn.LeakyReLU default
BN_EPS = 1e-5            # nn.BatchNorm1d default


# ----------------------------- fused Pallas kernel ---------------------------

def _encoder_kernel(xt_ref, w1_ref, g1_ref, b1_ref,
                    wc2_ref, g2_ref, b2_ref,
                    wc3_ref, g3_ref, b3_ref,
                    wc4_ref, g4_ref, b4_ref,
                    w5_hbm, g5_ref, b5_ref,
                    wfc_hbm, bfc_ref,
                    out_ref,
                    h1_ref, h2_ref, h3_ref, h4_ref, h5_ref,
                    w5_vmem, wfc_vmem, dma_sem):
    batch = out_ref.shape[0]

    # Kick off DMA of the two big late-layer weights; overlaps layers 1-4 compute.
    cp_w5 = pltpu.make_async_copy(w5_hbm, w5_vmem, dma_sem.at[0])
    cp_wfc = pltpu.make_async_copy(wfc_hbm, wfc_vmem, dma_sem.at[1])
    cp_w5.start()
    cp_wfc.start()

    def bn_lrelu(y, g_ref, b_ref):
        # Training-mode BatchNorm1d (biased batch variance), single-pass statistics,
        # folded to a single scale/shift (conv bias omitted -- cancels exactly).
        inv_n = 1.0 / y.shape[0]
        mu = jnp.sum(y, axis=0, keepdims=True) * inv_n
        var = jnp.sum(y * y, axis=0, keepdims=True) * inv_n - mu * mu
        scale = g_ref[...] * jax.lax.rsqrt(var + BN_EPS)
        yn = scale * y + (b_ref[...] - scale * mu)
        return jnp.where(yn > 0, yn, LEAKY_SLOPE * yn)                    # LeakyReLU(0.01)

    # ---------------- layer 1 (C_in = 1): taps gathered in-kernel ----------------
    l_in = xt_ref.shape[0]                                   # 256, positions on sublanes
    l_out = l_in // 2                                        # 128
    center = xt_ref[pl.ds(0, l_out, stride=2), :]            # x[2i]    (l_out, B)
    right = xt_ref[pl.ds(1, l_out, stride=2), :]             # x[2i+1]  (l_out, B)
    # circular left tap x[2i-1]: pure row roll (batch lives on lanes here).
    left = jnp.concatenate([right[l_out - 1:l_out, :], right[:l_out - 1, :]], axis=0)
    w1m = w1_ref[...]                                        # (3, C1) rows = [left, center, right]
    y1_parts = []
    for b in range(batch):
        y1_parts.append(left[:, b:b + 1] * w1m[0:1, :]
                        + center[:, b:b + 1] * w1m[1:2, :]
                        + right[:, b:b + 1] * w1m[2:3, :])   # (l_out, C1) via VPU broadcasts
    y1 = jnp.concatenate(y1_parts, axis=0)                   # (B*l_out, C1), rows ordered (b, l)
    h1_ref[...] = bn_lrelu(y1, g1_ref, b1_ref)

    # ---- layers 2..5: strided tap loads + three dense (N_out,Cin)@(Cin,Cout) matmuls ----
    def conv_block(hin_ref, wcat_ref, g_ref, b_ref):
        n_in, c_in = hin_ref.shape
        n_out = n_in // 2
        lo = n_out // batch
        right = hin_ref[pl.ds(1, n_out, stride=2), :]        # x[2j+1]  (n_out, c_in)
        # per-batch circular shift of `right` by +1 row -> x[2j-1]
        pieces = []
        for b in range(batch):
            blk = right[b * lo:(b + 1) * lo, :]
            pieces.append(blk[lo - 1:lo, :])
            pieces.append(blk[:lo - 1, :])
        left = jnp.concatenate(pieces, axis=0)
        # weight taps are contiguous row blocks of wcat (bf16); convert just before each dot.
        y = jnp.dot(right, wcat_ref[pl.ds(2 * c_in, c_in), :].astype(jnp.float32),
                    preferred_element_type=jnp.float32)
        y = y + jnp.dot(left, wcat_ref[pl.ds(0, c_in), :].astype(jnp.float32),
                        preferred_element_type=jnp.float32)
        center = hin_ref[pl.ds(0, n_out, stride=2), :]       # x[2j]
        y = y + jnp.dot(center, wcat_ref[pl.ds(c_in, c_in), :].astype(jnp.float32),
                        preferred_element_type=jnp.float32)
        return bn_lrelu(y, g_ref, b_ref)

    h2_ref[...] = conv_block(h1_ref, wc2_ref, g2_ref, b2_ref)
    h3_ref[...] = conv_block(h2_ref, wc3_ref, g3_ref, b3_ref)
    h4_ref[...] = conv_block(h3_ref, wc4_ref, g4_ref, b4_ref)
    cp_w5.wait()                                             # layer-5 weights now in VMEM
    h5_ref[...] = conv_block(h4_ref, w5_vmem, g5_ref, b5_ref)

    # ---------------- fused fc_mu / fc_var head ----------------
    cp_wfc.wait()                                            # fc weights now in VMEM
    c5 = h5_ref.shape[1]                                     # 256
    l5 = h5_ref.shape[0] // batch                            # 8
    two_latent = out_ref.shape[1]

    def fc_step(l, acc):
        # per-position weight slab (rows pre-permuted so this matches PyTorch Flatten)
        wl = wfc_vmem[pl.ds(pl.multiple_of(l * c5, c5), c5), :].astype(jnp.float32)   # (c5, 2*latent)
        rows = jnp.concatenate(
            [h5_ref[pl.ds(b * l5 + l, 1), :] for b in range(batch)], axis=0)          # (B, c5)
        return acc + jnp.dot(rows, wl, preferred_element_type=jnp.float32)

    acc = jax.lax.fori_loop(0, l5, fc_step,
                            jnp.zeros((batch, two_latent), jnp.float32))
    out_ref[...] = acc + bfc_ref[...]                        # (B, 2*latent)


# --------------------------- parameter packing (one-time) --------------------

def prepare_params(params):
    """Pack PyTorch-style params into the layouts the fused kernel consumes (bf16 weights)."""
    convs = params["convs"]
    w1, _, g1, be1 = convs[0]                                # conv bias dropped (BN cancels it)
    prep = {
        "w1": jnp.asarray(w1[:, 0, :].T, jnp.float32),       # (3, C1): rows = taps [x(2i-1), x(2i), x(2i+1)]
        "g1": g1.reshape(1, -1).astype(jnp.float32),
        "b1": be1.reshape(1, -1).astype(jnp.float32),
        "layers": [],
    }
    for k in range(1, 5):
        w, _, g, be = convs[k]                               # w: (C_out, C_in, 3)
        wcat = jnp.concatenate([w[:, :, 0].T, w[:, :, 1].T, w[:, :, 2].T], axis=0)   # (3*C_in, C_out)
        prep["layers"].append((wcat.astype(jnp.bfloat16),
                               g.reshape(1, -1).astype(jnp.float32),
                               be.reshape(1, -1).astype(jnp.float32)))
    wmu, bmu = params["fc_mu"]
    wvar, bvar = params["fc_var"]
    wcat_fc = jnp.concatenate([wmu, wvar], axis=0)           # (2*latent, C5*L5), features ordered (c, l)
    c5 = convs[-1][0].shape[0]
    l5 = SEQ_LEN // 2 ** 5
    two_latent = wcat_fc.shape[0]
    # rows re-ordered to (l, c) so the kernel can take contiguous (C5, 2*latent) slabs per l.
    wfc = wcat_fc.T.reshape(c5, l5, two_latent).transpose(1, 0, 2).reshape(l5 * c5, two_latent)
    prep["wfc"] = wfc.astype(jnp.bfloat16)
    prep["bfc"] = jnp.concatenate([bmu, bvar]).reshape(1, -1).astype(jnp.float32)
    return prep


# ------------------------------- public wrapper -------------------------------

def encoder_forward(x, prep):
    """x: (B, 1, 256) float32 (PyTorch NCL). Returns (mean, log_var), each (B, latent)."""
    batch = x.shape[0]
    two_latent = prep["bfc"].shape[1]
    latent = two_latent // 2
    c1 = prep["w1"].shape[1]
    chan = [c1] + [wc.shape[1] for (wc, _, _) in prep["layers"]]         # [16, 32, 64, 128, 256]
    wc5, g5, b5 = prep["layers"][3]

    xt = jnp.transpose(x[:, 0, :])                                       # (SEQ_LEN, B) -- only wrapper op
    inputs = [xt, prep["w1"], prep["g1"], prep["b1"]]
    for (wc, g, b) in prep["layers"][:3]:
        inputs += [wc, g, b]
    inputs += [wc5, g5, b5, prep["wfc"], prep["bfc"]]

    vmem = pl.BlockSpec(memory_space=pltpu.MemorySpace.VMEM)
    hbm = pl.BlockSpec(memory_space=pl.ANY)
    in_specs = [vmem] * len(inputs)
    in_specs[13] = hbm            # layer-5 weights: stay in HBM, prefetched in-kernel
    in_specs[16] = hbm            # fc weights:      stay in HBM, prefetched in-kernel

    scratch_shapes = [
        pltpu.VMEM((batch * (SEQ_LEN // 2 ** (i + 1)), chan[i]), jnp.float32) for i in range(5)
    ] + [
        pltpu.VMEM(wc5.shape, jnp.bfloat16),          # prefetched layer-5 weights
        pltpu.VMEM(prep["wfc"].shape, jnp.bfloat16),  # prefetched fc weights
        pltpu.SemaphoreType.DMA((2,)),
    ]

    # Advisory cost estimate: conv/fc matmul flops, per-channel rsqrt, total DMA bytes.
    flops = 2 * batch * (SEQ_LEN // 2) * 3 * c1
    seq = SEQ_LEN // 2
    for (wc, _, _) in prep["layers"]:
        seq //= 2
        flops += 2 * batch * seq * wc.shape[0] * wc.shape[1]
    flops += 2 * batch * prep["wfc"].shape[0] * prep["wfc"].shape[1]
    transcendentals = sum(chan)
    bytes_accessed = sum(int(a.size) * a.dtype.itemsize for a in inputs) + batch * two_latent * 4

    out = pl.pallas_call(
        _encoder_kernel,
        out_shape=jax.ShapeDtypeStruct((batch, two_latent), jnp.float32),
        in_specs=in_specs,
        out_specs=vmem,
        scratch_shapes=scratch_shapes,
        cost_estimate=pl.CostEstimate(flops=int(flops), transcendentals=int(transcendentals),
                                      bytes_accessed=int(bytes_accessed)),
    )(*inputs)
    return out[:, :latent], out[:, latent:]


# -------------------------- params & pure-JAX reference ----------------------

def init_params(key, latent_dim=LATENT_DIM, sf=STARTING_FILTERS):
    channels = [1, sf, sf * 2, sf * 4, sf * 8, sf * 16]
    convs = []
    for i in range(5):
        key, kw, kb, kg, kbe = jax.random.split(key, 5)
        c_in, c_out = channels[i], channels[i + 1]
        w = jax.random.normal(kw, (c_out, c_in, 3), jnp.float32) * 0.1
        b = jax.random.normal(kb, (c_out,), jnp.float32) * 0.1
        gamma = 1.0 + 0.1 * jax.random.normal(kg, (c_out,), jnp.float32)
        beta = 0.1 * jax.random.normal(kbe, (c_out,), jnp.float32)
        convs.append((w, b, gamma, beta))
    feat = channels[-1] * (SEQ_LEN // 2 ** 5)                 # 256 * 8 = 2048
    key, k1, k2, k3, k4 = jax.random.split(key, 5)
    wmu = jax.random.normal(k1, (latent_dim, feat), jnp.float32) * 0.02
    bmu = jax.random.normal(k2, (latent_dim,), jnp.float32) * 0.02
    wvar = jax.random.normal(k3, (latent_dim, feat), jnp.float32) * 0.02
    bvar = jax.random.normal(k4, (latent_dim,), jnp.float32) * 0.02
    return {"convs": convs, "fc_mu": (wmu, bmu), "fc_var": (wvar, bvar)}


def reference_forward(x, params):
    """Independent pure-JAX reference of the PyTorch forward (training-mode BN, with bias)."""
    h = x                                                      # (B, C, L)
    for (w, b, gamma, beta) in params["convs"]:
        hp = jnp.concatenate([h[:, :, -1:], h, h[:, :, :1]], axis=2)   # circular pad 1
        h = jax.lax.conv_general_dilated(
            hp, w, window_strides=(2,), padding="VALID",
            dimension_numbers=("NCH", "OIH", "NCH"))
        h = h + b[None, :, None]
        mu = jnp.mean(h, axis=(0, 2), keepdims=True)
        var = jnp.mean((h - mu) ** 2, axis=(0, 2), keepdims=True)
        h = gamma[None, :, None] * (h - mu) * jax.lax.rsqrt(var + BN_EPS) + beta[None, :, None]
        h = jnp.where(h > 0, h, LEAKY_SLOPE * h)
    feat = h.reshape(h.shape[0], -1)
    wmu, bmu = params["fc_mu"]
    wvar, bvar = params["fc_var"]
    return feat @ wmu.T + bmu, feat @ wvar.T + bvar


def _round_weights_like_kernel(params):
    """Round exactly the weights the kernel ships as bf16 (conv layers 2-5, fc)."""
    q = lambda a: a.astype(jnp.bfloat16).astype(jnp.float32)
    convs = [params["convs"][0]] + [(q(w), b, g, be) for (w, b, g, be) in params["convs"][1:]]
    wmu, bmu = params["fc_mu"]
    wvar, bvar = params["fc_var"]
    return {"convs": convs, "fc_mu": (q(wmu), bmu), "fc_var": (q(wvar), bvar)}


# ----------------------------------- main ------------------------------------

if __name__ == "__main__":
    key = jax.random.PRNGKey(0)
    key, kp, kx = jax.random.split(key, 3)
    params = init_params(kp)
    x = jax.random.normal(kx, (2, 1, SEQ_LEN), jnp.float32)    # (B=2, C=1, L=256)

    prep = prepare_params(params)                              # one-time weight packing (bf16)
    fwd = jax.jit(encoder_forward)
    mean, log_var = fwd(x, prep)
    jax.block_until_ready((mean, log_var))

    assert mean.shape == (2, LATENT_DIM) and log_var.shape == (2, LATENT_DIM)

    # Tight check: reference with the same bf16-rounded weights (isolates kernel math).
    params_q = _round_weights_like_kernel(params)
    ref_mean_q, ref_var_q = reference_forward(x, params_q)
    assert jnp.allclose(mean, ref_mean_q, rtol=2e-3, atol=2e-3), "fc_mu mismatch (kernel math)"
    assert jnp.allclose(log_var, ref_var_q, rtol=2e-3, atol=2e-3), "fc_var mismatch (kernel math)"

    # Loose check: full-precision reference (bounds the bf16 weight quantization impact).
    ref_mean, ref_var = reference_forward(x, params)
    assert jnp.allclose(mean, ref_mean, rtol=2e-2, atol=2e-2), "fc_mu mismatch (quantization)"
    assert jnp.allclose(log_var, ref_var, rtol=2e-2, atol=2e-2), "fc_var mismatch (quantization)"

    print("KERNEL_OK")
</pallas_src>

<mosaic_0001>
module attributes {stable_mosaic.version = 11 : i64} {
  func.func @_encoder_kernel(%arg0: memref<256x2xf32, #tpu.memory_space<vmem>>, %arg1: memref<3x16xf32, #tpu.memory_space<vmem>>, %arg2: memref<1x16xf32, #tpu.memory_space<vmem>>, %arg3: memref<1x16xf32, #tpu.memory_space<vmem>>, %arg4: memref<48x32xbf16, #tpu.memory_space<vmem>>, %arg5: memref<1x32xf32, #tpu.memory_space<vmem>>, %arg6: memref<1x32xf32, #tpu.memory_space<vmem>>, %arg7: memref<96x64xbf16, #tpu.memory_space<vmem>>, %arg8: memref<1x64xf32, #tpu.memory_space<vmem>>, %arg9: memref<1x64xf32, #tpu.memory_space<vmem>>, %arg10: memref<192x128xbf16, #tpu.memory_space<vmem>>, %arg11: memref<1x128xf32, #tpu.memory_space<vmem>>, %arg12: memref<1x128xf32, #tpu.memory_space<vmem>>, %arg13: memref<384x256xbf16, #tpu.memory_space<any>>, %arg14: memref<1x256xf32, #tpu.memory_space<vmem>>, %arg15: memref<1x256xf32, #tpu.memory_space<vmem>>, %arg16: memref<2048x32xbf16, #tpu.memory_space<any>>, %arg17: memref<1x32xf32, #tpu.memory_space<vmem>>, %arg18: memref<2x32xf32, #tpu.memory_space<vmem>>, %arg19: memref<256x16xf32, #tpu.memory_space<vmem>>, %arg20: memref<128x32xf32, #tpu.memory_space<vmem>>, %arg21: memref<64x64xf32, #tpu.memory_space<vmem>>, %arg22: memref<32x128xf32, #tpu.memory_space<vmem>>, %arg23: memref<16x256xf32, #tpu.memory_space<vmem>>, %arg24: memref<384x256xbf16, #tpu.memory_space<vmem>>, %arg25: memref<2048x32xbf16, #tpu.memory_space<vmem>>, %arg26: memref<2x!tpu.dma_semaphore, #tpu.memory_space<semaphore_mem>>) attributes {dimension_semantics = [], scalar_prefetch = 0 : i64, scratch_operands = 8 : i64, tpu.core_type = #tpu.core_type<tc>} {
    %c0_i32 = arith.constant 0 : i32
    %0 = tpu.memref_slice %arg26[%c0_i32] : memref<2x!tpu.dma_semaphore, #tpu.memory_space<semaphore_mem>> -> memref<1x!tpu.dma_semaphore, #tpu.memory_space<semaphore_mem>>
    %1 = tpu.memref_squeeze %0 : memref<1x!tpu.dma_semaphore, #tpu.memory_space<semaphore_mem>> -> memref<!tpu.dma_semaphore, #tpu.memory_space<semaphore_mem>>
    tpu.enqueue_dma source(%arg13 : memref<384x256xbf16, #tpu.memory_space<any>>) target(%arg24 : memref<384x256xbf16, #tpu.memory_space<vmem>>) target_semaphore(%1 : memref<!tpu.dma_semaphore, #tpu.memory_space<semaphore_mem>>)
    %c1_i32 = arith.constant 1 : i32
    %2 = tpu.memref_slice %arg26[%c1_i32] : memref<2x!tpu.dma_semaphore, #tpu.memory_space<semaphore_mem>> -> memref<1x!tpu.dma_semaphore, #tpu.memory_space<semaphore_mem>>
    %3 = tpu.memref_squeeze %2 : memref<1x!tpu.dma_semaphore, #tpu.memory_space<semaphore_mem>> -> memref<!tpu.dma_semaphore, #tpu.memory_space<semaphore_mem>>
    tpu.enqueue_dma source(%arg16 : memref<2048x32xbf16, #tpu.memory_space<any>>) target(%arg25 : memref<2048x32xbf16, #tpu.memory_space<vmem>>) target_semaphore(%3 : memref<!tpu.dma_semaphore, #tpu.memory_space<semaphore_mem>>)
    %c0 = arith.constant 0 : index
    %c0_0 = arith.constant 0 : index
    %4 = tpu.strided_load %arg0[%c0, %c0_0] {strides = array<i32: 2, 1>} : memref<256x2xf32, #tpu.memory_space<vmem>>, vector<128x2xf32>
    %c1 = arith.constant 1 : index
    %c0_1 = arith.constant 0 : index
    %5 = tpu.strided_load %arg0[%c1, %c0_1] {strides = array<i32: 2, 1>} : memref<256x2xf32, #tpu.memory_space<vmem>>, vector<128x2xf32>
    %6 = vector.extract_strided_slice %5 {offsets = [127, 0], sizes = [1, 2], strides = [1, 1]} : vector<128x2xf32> to vector<1x2xf32>
    %7 = vector.extract_strided_slice %5 {offsets = [0, 0], sizes = [127, 2], strides = [1, 1]} : vector<128x2xf32> to vector<127x2xf32>
    %8 = tpu.concatenate %6, %7 in 0 : vector<1x2xf32>, vector<127x2xf32> -> vector<128x2xf32>
    %c0_2 = arith.constant 0 : index
    %c0_3 = arith.constant 0 : index
    %9 = vector.load %arg1[%c0_2, %c0_3] : memref<3x16xf32, #tpu.memory_space<vmem>>, vector<3x16xf32>
    %10 = vector.extract_strided_slice %8 {offsets = [0, 0], sizes = [128, 1], strides = [1, 1]} : vector<128x2xf32> to vector<128x1xf32>
    %11 = vector.extract_strided_slice %9 {offsets = [0, 0], sizes = [1, 16], strides = [1, 1]} : vector<3x16xf32> to vector<1x16xf32>
    %12 = vector.broadcast %10 : vector<128x1xf32> to vector<128x16xf32>
    %13 = vector.broadcast %11 : vector<1x16xf32> to vector<128x16xf32>
    %14 = arith.mulf %12, %13 : vector<128x16xf32>
    %15 = vector.extract_strided_slice %4 {offsets = [0, 0], sizes = [128, 1], strides = [1, 1]} : vector<128x2xf32> to vector<128x1xf32>
    %16 = vector.extract_strided_slice %9 {offsets = [1, 0], sizes = [1, 16], strides = [1, 1]} : vector<3x16xf32> to vector<1x16xf32>
    %17 = vector.broadcast %15 : vector<128x1xf32> to vector<128x16xf32>
    %18 = vector.broadcast %16 : vector<1x16xf32> to vector<128x16xf32>
    %19 = arith.mulf %17, %18 : vector<128x16xf32>
    %20 = arith.addf %14, %19 : vector<128x16xf32>
    %21 = vector.extract_strided_slice %5 {offsets = [0, 0], sizes = [128, 1], strides = [1, 1]} : vector<128x2xf32> to vector<128x1xf32>
    %22 = vector.extract_strided_slice %9 {offsets = [2, 0], sizes = [1, 16], strides = [1, 1]} : vector<3x16xf32> to vector<1x16xf32>
    %23 = vector.broadcast %21 : vector<128x1xf32> to vector<128x16xf32>
    %24 = vector.broadcast %22 : vector<1x16xf32> to vector<128x16xf32>
    %25 = arith.mulf %23, %24 : vector<128x16xf32>
    %26 = arith.addf %20, %25 : vector<128x16xf32>
    %27 = vector.extract_strided_slice %8 {offsets = [0, 1], sizes = [128, 1], strides = [1, 1]} : vector<128x2xf32> to vector<128x1xf32>
    %28 = vector.extract_strided_slice %9 {offsets = [0, 0], sizes = [1, 16], strides = [1, 1]} : vector<3x16xf32> to vector<1x16xf32>
    %29 = vector.broadcast %27 : vector<128x1xf32> to vector<128x16xf32>
    %30 = vector.broadcast %28 : vector<1x16xf32> to vector<128x16xf32>
    %31 = arith.mulf %29, %30 : vector<128x16xf32>
    %32 = vector.extract_strided_slice %4 {offsets = [0, 1], sizes = [128, 1], strides = [1, 1]} : vector<128x2xf32> to vector<128x1xf32>
    %33 = vector.extract_strided_slice %9 {offsets = [1, 0], sizes = [1, 16], strides = [1, 1]} : vector<3x16xf32> to vector<1x16xf32>
    %34 = vector.broadcast %32 : vector<128x1xf32> to vector<128x16xf32>
    %35 = vector.broadcast %33 : vector<1x16xf32> to vector<128x16xf32>
    %36 = arith.mulf %34, %35 : vector<128x16xf32>
    %37 = arith.addf %31, %36 : vector<128x16xf32>
    %38 = vector.extract_strided_slice %5 {offsets = [0, 1], sizes = [128, 1], strides = [1, 1]} : vector<128x2xf32> to vector<128x1xf32>
    %39 = vector.extract_strided_slice %9 {offsets = [2, 0], sizes = [1, 16], strides = [1, 1]} : vector<3x16xf32> to vector<1x16xf32>
    %40 = vector.broadcast %38 : vector<128x1xf32> to vector<128x16xf32>
    %41 = vector.broadcast %39 : vector<1x16xf32> to vector<128x16xf32>
    %42 = arith.mulf %40, %41 : vector<128x16xf32>
    %43 = arith.addf %37, %42 : vector<128x16xf32>
    %44 = tpu.concatenate %26, %43 in 0 : vector<128x16xf32>, vector<128x16xf32> -> vector<256x16xf32>
    %cst = arith.constant dense<0.000000e+00> : vector<16xf32>
    %45 = vector.multi_reduction <add>, %44, %cst [0] : vector<256x16xf32> to vector<16xf32>
    %46 = vector.shape_cast %45 : vector<16xf32> to vector<1x16xf32>
    %cst_4 = arith.constant 3.906250e-03 : f32
    %47 = vector.broadcast %cst_4 : f32 to vector<1x16xf32>
    %48 = arith.mulf %46, %47 : vector<1x16xf32>
    %49 = arith.mulf %44, %44 : vector<256x16xf32>
    %cst_5 = arith.constant dense<0.000000e+00> : vector<16xf32>
    %50 = vector.multi_reduction <add>, %49, %cst_5 [0] : vector<256x16xf32> to vector<16xf32>
    %51 = vector.shape_cast %50 : vector<16xf32> to vector<1x16xf32>
    %cst_6 = arith.constant 3.906250e-03 : f32
    %52 = vector.broadcast %cst_6 : f32 to vector<1x16xf32>
    %53 = arith.mulf %51, %52 : vector<1x16xf32>
    %54 = arith.mulf %48, %48 : vector<1x16xf32>
    %55 = arith.subf %53, %54 : vector<1x16xf32>
    %c0_7 = arith.constant 0 : index
    %c0_8 = arith.constant 0 : index
    %56 = vector.load %arg2[%c0_7, %c0_8] : memref<1x16xf32, #tpu.memory_space<vmem>>, vector<1x16xf32>
    %cst_9 = arith.constant 9.99999974E-6 : f32
    %57 = vector.broadcast %cst_9 : f32 to vector<1x16xf32>
    %58 = arith.addf %55, %57 : vector<1x16xf32>
    %59 = math.rsqrt %58 : vector<1x16xf32>
    %60 = arith.mulf %56, %59 : vector<1x16xf32>
    %61 = vector.broadcast %60 : vector<1x16xf32> to vector<256x16xf32>
    %62 = arith.mulf %61, %44 : vector<256x16xf32>
    %c0_10 = arith.constant 0 : index
    %c0_11 = arith.constant 0 : index
    %63 = vector.load %arg3[%c0_10, %c0_11] : memref<1x16xf32, #tpu.memory_space<vmem>>, vector<1x16xf32>
    %64 = arith.mulf %60, %48 : vector<1x16xf32>
    %65 = arith.subf %63, %64 : vector<1x16xf32>
    %66 = vector.broadcast %65 : vector<1x16xf32> to vector<256x16xf32>
    %67 = arith.addf %62, %66 : vector<256x16xf32>
    %cst_12 = arith.constant 0.000000e+00 : f32
    %68 = vector.broadcast %cst_12 : f32 to vector<256x16xf32>
    %69 = arith.cmpf ogt, %67, %68 : vector<256x16xf32>
    %cst_13 = arith.constant 0.00999999977 : f32
    %70 = vector.broadcast %cst_13 : f32 to vector<256x16xf32>
    %71 = arith.mulf %70, %67 : vector<256x16xf32>
    %72 = arith.select %69, %67, %71 : vector<256x16xi1>, vector<256x16xf32>
    %c0_14 = arith.constant 0 : index
    %c0_15 = arith.constant 0 : index
    %73 = vector.load %arg19[%c0_14, %c0_15] : memref<256x16xf32, #tpu.memory_space<vmem>>, vector<256x16xf32>
    tpu.vector_store %arg19[%c0_14, %c0_15], %72 {strides = array<i32>} : memref<256x16xf32, #tpu.memory_space<vmem>>, vector<256x16xf32>,
    %c1_16 = arith.constant 1 : index
    %c0_17 = arith.constant 0 : index
    %74 = tpu.strided_load %arg19[%c1_16, %c0_17] {strides = array<i32: 2, 1>} : memref<256x16xf32, #tpu.memory_space<vmem>>, vector<128x16xf32>
    %75 = vector.extract_strided_slice %74 {offsets = [0, 0], sizes = [64, 16], strides = [1, 1]} : vector<128x16xf32> to vector<64x16xf32>
    %76 = vector.extract_strided_slice %75 {offsets = [63, 0], sizes = [1, 16], strides = [1, 1]} : vector<64x16xf32> to vector<1x16xf32>
    %77 = vector.extract_strided_slice %75 {offsets = [0, 0], sizes = [63, 16], strides = [1, 1]} : vector<64x16xf32> to vector<63x16xf32>
    %78 = vector.extract_strided_slice %74 {offsets = [64, 0], sizes = [64, 16], strides = [1, 1]} : vector<128x16xf32> to vector<64x16xf32>
    %79 = vector.extract_strided_slice %78 {offsets = [63, 0], sizes = [1, 16], strides = [1, 1]} : vector<64x16xf32> to vector<1x16xf32>
    %80 = vector.extract_strided_slice %78 {offsets = [0, 0], sizes = [63, 16], strides = [1, 1]} : vector<64x16xf32> to vector<63x16xf32>
    %81 = tpu.concatenate %76, %77, %79, %80 in 0 : vector<1x16xf32>, vector<63x16xf32>, vector<1x16xf32>, vector<63x16xf32> -> vector<128x16xf32>
    %c32 = arith.constant 32 : index
    %c0_18 = arith.constant 0 : index
    %82 = vector.load %arg4[%c32, %c0_18] : memref<48x32xbf16, #tpu.memory_space<vmem>>, vector<16x32xbf16>
    %83 = arith.extf %82 : vector<16x32xbf16> to vector<16x32xf32>
    %cst_19 = arith.constant dense<0.000000e+00> : vector<128x32xf32>
    %84 = tpu.matmul %74, %83, %cst_19 {dimension_numbers = #tpu.dot_dimension_numbers<[1], [0], [0], [1], [0, 0, 1, 1], [], []>} : vector<128x16xf32>, vector<16x32xf32>, vector<128x32xf32> -> vector<128x32xf32>
    %c0_20 = arith.constant 0 : index
    %c0_21 = arith.constant 0 : index
    %85 = vector.load %arg4[%c0_20, %c0_21] : memref<48x32xbf16, #tpu.memory_space<vmem>>, vector<16x32xbf16>
    %86 = arith.extf %85 : vector<16x32xbf16> to vector<16x32xf32>
    %cst_22 = arith.constant dense<0.000000e+00> : vector<128x32xf32>
    %87 = tpu.matmul %81, %86, %cst_22 {dimension_numbers = #tpu.dot_dimension_numbers<[1], [0], [0], [1], [0, 0, 1, 1], [], []>} : vector<128x16xf32>, vector<16x32xf32>, vector<128x32xf32> -> vector<128x32xf32>
    %88 = arith.addf %84, %87 : vector<128x32xf32>
    %c0_23 = arith.constant 0 : index
    %c0_24 = arith.constant 0 : index
    %89 = tpu.strided_load %arg19[%c0_23, %c0_24] {strides = array<i32: 2, 1>} : memref<256x16xf32, #tpu.memory_space<vmem>>, vector<128x16xf32>
    %c16 = arith.constant 16 : index
    %c0_25 = arith.constant 0 : index
    %90 = vector.load %arg4[%c16, %c0_25] : memref<48x32xbf16, #tpu.memory_space<vmem>>, vector<16x32xbf16>
    %91 = arith.extf %90 : vector<16x32xbf16> to vector<16x32xf32>
    %cst_26 = arith.constant dense<0.000000e+00> : vector<128x32xf32>
    %92 = tpu.matmul %89, %91, %cst_26 {dimension_numbers = #tpu.dot_dimension_numbers<[1], [0], [0], [1], [0, 0, 1, 1], [], []>} : vector<128x16xf32>, vector<16x32xf32>, vector<128x32xf32> -> vector<128x32xf32>
    %93 = arith.addf %88, %92 : vector<128x32xf32>
    %cst_27 = arith.constant dense<0.000000e+00> : vector<32xf32>
    %94 = vector.multi_reduction <add>, %93, %cst_27 [0] : vector<128x32xf32> to vector<32xf32>
    %95 = vector.shape_cast %94 : vector<32xf32> to vector<1x32xf32>
    %cst_28 = arith.constant 7.812500e-03 : f32
    %96 = vector.broadcast %cst_28 : f32 to vector<1x32xf32>
    %97 = arith.mulf %95, %96 : vector<1x32xf32>
    %98 = arith.mulf %93, %93 : vector<128x32xf32>
    %cst_29 = arith.constant dense<0.000000e+00> : vector<32xf32>
    %99 = vector.multi_reduction <add>, %98, %cst_29 [0] : vector<128x32xf32> to vector<32xf32>
    %100 = vector.shape_cast %99 : vector<32xf32> to vector<1x32xf32>
    %cst_30 = arith.constant 7.812500e-03 : f32
    %101 = vector.broadcast %cst_30 : f32 to vector<1x32xf32>
    %102 = arith.mulf %100, %101 : vector<1x32xf32>
    %103 = arith.mulf %97, %97 : vector<1x32xf32>
    %104 = arith.subf %102, %103 : vector<1x32xf32>
    %c0_31 = arith.constant 0 : index
    %c0_32 = arith.constant 0 : index
    %105 = vector.load %arg5[%c0_31, %c0_32] : memref<1x32xf32, #tpu.memory_space<vmem>>, vector<1x32xf32>
    %cst_33 = arith.constant 9.99999974E-6 : f32
    %106 = vector.broadcast %cst_33 : f32 to vector<1x32xf32>
    %107 = arith.addf %104, %106 : vector<1x32xf32>
    %108 = math.rsqrt %107 : vector<1x32xf32>
    %109 = arith.mulf %105, %108 : vector<1x32xf32>
    %110 = vector.broadcast %109 : vector<1x32xf32> to vector<128x32xf32>
    %111 = arith.mulf %110, %93 : vector<128x32xf32>
    %c0_34 = arith.constant 0 : index
    %c0_35 = arith.constant 0 : index
    %112 = vector.load %arg6[%c0_34, %c0_35] : memref<1x32xf32, #tpu.memory_space<vmem>>, vector<1x32xf32>
    %113 = arith.mulf %109, %97 : vector<1x32xf32>
    %114 = arith.subf %112, %113 : vector<1x32xf32>
    %115 = vector.broadcast %114 : vector<1x32xf32> to vector<128x32xf32>
    %116 = arith.addf %111, %115 : vector<128x32xf32>
    %cst_36 = arith.constant 0.000000e+00 : f32
    %117 = vector.broadcast %cst_36 : f32 to vector<128x32xf32>
    %118 = arith.cmpf ogt, %116, %117 : vector<128x32xf32>
    %cst_37 = arith.constant 0.00999999977 : f32
    %119 = vector.broadcast %cst_37 : f32 to vector<128x32xf32>
    %120 = arith.mulf %119, %116 : vector<128x32xf32>
    %121 = arith.select %118, %116, %120 : vector<128x32xi1>, vector<128x32xf32>
    %c0_38 = arith.constant 0 : index
    %c0_39 = arith.constant 0 : index
    %122 = vector.load %arg20[%c0_38, %c0_39] : memref<128x32xf32, #tpu.memory_space<vmem>>, vector<128x32xf32>
    tpu.vector_store %arg20[%c0_38, %c0_39], %121 {strides = array<i32>} : memref<128x32xf32, #tpu.memory_space<vmem>>, vector<128x32xf32>,
    %c1_40 = arith.constant 1 : index
    %c0_41 = arith.constant 0 : index
    %123 = tpu.strided_load %arg20[%c1_40, %c0_41] {strides = array<i32: 2, 1>} : memref<128x32xf32, #tpu.memory_space<vmem>>, vector<64x32xf32>
    %124 = vector.extract_strided_slice %123 {offsets = [0, 0], sizes = [32, 32], strides = [1, 1]} : vector<64x32xf32> to vector<32x32xf32>
    %125 = vector.extract_strided_slice %124 {offsets = [31, 0], sizes = [1, 32], strides = [1, 1]} : vector<32x32xf32> to vector<1x32xf32>
    %126 = vector.extract_strided_slice %124 {offsets = [0, 0], sizes = [31, 32], strides = [1, 1]} : vector<32x32xf32> to vector<31x32xf32>
    %127 = vector.extract_strided_slice %123 {offsets = [32, 0], sizes = [32, 32], strides = [1, 1]} : vector<64x32xf32> to vector<32x32xf32>
    %128 = vector.extract_strided_slice %127 {offsets = [31, 0], sizes = [1, 32], strides = [1, 1]} : vector<32x32xf32> to vector<1x32xf32>
    %129 = vector.extract_strided_slice %127 {offsets = [0, 0], sizes = [31, 32], strides = [1, 1]} : vector<32x32xf32> to vector<31x32xf32>
    %130 = tpu.concatenate %125, %126, %128, %129 in 0 : vector<1x32xf32>, vector<31x32xf32>, vector<1x32xf32>, vector<31x32xf32> -> vector<64x32xf32>
    %c64 = arith.constant 64 : index
    %c0_42 = arith.constant 0 : index
    %131 = vector.load %arg7[%c64, %c0_42] : memref<96x64xbf16, #tpu.memory_space<vmem>>, vector<32x64xbf16>
    %132 = arith.extf %131 : vector<32x64xbf16> to vector<32x64xf32>
    %cst_43 = arith.constant dense<0.000000e+00> : vector<64x64xf32>
    %133 = tpu.matmul %123, %132, %cst_43 {dimension_numbers = #tpu.dot_dimension_numbers<[1], [0], [0], [1], [0, 0, 1, 1], [], []>} : vector<64x32xf32>, vector<32x64xf32>, vector<64x64xf32> -> vector<64x64xf32>
    %c0_44 = arith.constant 0 : index
    %c0_45 = arith.constant 0 : index
    %134 = vector.load %arg7[%c0_44, %c0_45] : memref<96x64xbf16, #tpu.memory_space<vmem>>, vector<32x64xbf16>
    %135 = arith.extf %134 : vector<32x64xbf16> to vector<32x64xf32>
    %cst_46 = arith.constant dense<0.000000e+00> : vector<64x64xf32>
    %136 = tpu.matmul %130, %135, %cst_46 {dimension_numbers = #tpu.dot_dimension_numbers<[1], [0], [0], [1], [0, 0, 1, 1], [], []>} : vector<64x32xf32>, vector<32x64xf32>, vector<64x64xf32> -> vector<64x64xf32>
    %137 = arith.addf %133, %136 : vector<64x64xf32>
    %c0_47 = arith.constant 0 : index
    %c0_48 = arith.constant 0 : index
    %138 = tpu.strided_load %arg20[%c0_47, %c0_48] {strides = array<i32: 2, 1>} : memref<128x32xf32, #tpu.memory_space<vmem>>, vector<64x32xf32>
    %c32_49 = arith.constant 32 : index
    %c0_50 = arith.constant 0 : index
    %139 = vector.load %arg7[%c32_49, %c0_50] : memref<96x64xbf16, #tpu.memory_space<vmem>>, vector<32x64xbf16>
    %140 = arith.extf %139 : vector<32x64xbf16> to vector<32x64xf32>
    %cst_51 = arith.constant dense<0.000000e+00> : vector<64x64xf32>
    %141 = tpu.matmul %138, %140, %cst_51 {dimension_numbers = #tpu.dot_dimension_numbers<[1], [0], [0], [1], [0, 0, 1, 1], [], []>} : vector<64x32xf32>, vector<32x64xf32>, vector<64x64xf32> -> vector<64x64xf32>
    %142 = arith.addf %137, %141 : vector<64x64xf32>
    %cst_52 = arith.constant dense<0.000000e+00> : vector<64xf32>
    %143 = vector.multi_reduction <add>, %142, %cst_52 [0] : vector<64x64xf32> to vector<64xf32>
    %144 = vector.shape_cast %143 : vector<64xf32> to vector<1x64xf32>
    %cst_53 = arith.constant 1.562500e-02 : f32
    %145 = vector.broadcast %cst_53 : f32 to vector<1x64xf32>
    %146 = arith.mulf %144, %145 : vector<1x64xf32>
    %147 = arith.mulf %142, %142 : vector<64x64xf32>
    %cst_54 = arith.constant dense<0.000000e+00> : vector<64xf32>
    %148 = vector.multi_reduction <add>, %147, %cst_54 [0] : vector<64x64xf32> to vector<64xf32>
    %149 = vector.shape_cast %148 : vector<64xf32> to vector<1x64xf32>
    %cst_55 = arith.constant 1.562500e-02 : f32
    %150 = vector.broadcast %cst_55 : f32 to vector<1x64xf32>
    %151 = arith.mulf %149, %150 : vector<1x64xf32>
    %152 = arith.mulf %146, %146 : vector<1x64xf32>
    %153 = arith.subf %151, %152 : vector<1x64xf32>
    %c0_56 = arith.constant 0 : index
    %c0_57 = arith.constant 0 : index
    %154 = vector.load %arg8[%c0_56, %c0_57] : memref<1x64xf32, #tpu.memory_space<vmem>>, vector<1x64xf32>
    %cst_58 = arith.constant 9.99999974E-6 : f32
    %155 = vector.broadcast %cst_58 : f32 to vector<1x64xf32>
    %156 = arith.addf %153, %155 : vector<1x64xf32>
    %157 = math.rsqrt %156 : vector<1x64xf32>
    %158 = arith.mulf %154, %157 : vector<1x64xf32>
    %159 = vector.broadcast %158 : vector<1x64xf32> to vector<64x64xf32>
    %160 = arith.mulf %159, %142 : vector<64x64xf32>
    %c0_59 = arith.constant 0 : index
    %c0_60 = arith.constant 0 : index
    %161 = vector.load %arg9[%c0_59, %c0_60] : memref<1x64xf32, #tpu.memory_space<vmem>>, vector<1x64xf32>
    %162 = arith.mulf %158, %146 : vector<1x64xf32>
    %163 = arith.subf %161, %162 : vector<1x64xf32>
    %164 = vector.broadcast %163 : vector<1x64xf32> to vector<64x64xf32>
    %165 = arith.addf %160, %164 : vector<64x64xf32>
    %cst_61 = arith.constant 0.000000e+00 : f32
    %166 = vector.broadcast %cst_61 : f32 to vector<64x64xf32>
    %167 = arith.cmpf ogt, %165, %166 : vector<64x64xf32>
    %cst_62 = arith.constant 0.00999999977 : f32
    %168 = vector.broadcast %cst_62 : f32 to vector<64x64xf32>
    %169 = arith.mulf %168, %165 : vector<64x64xf32>
    %170 = arith.select %167, %165, %169 : vector<64x64xi1>, vector<64x64xf32>
    %c0_63 = arith.constant 0 : index
    %c0_64 = arith.constant 0 : index
    %171 = vector.load %arg21[%c0_63, %c0_64] : memref<64x64xf32, #tpu.memory_space<vmem>>, vector<64x64xf32>
    tpu.vector_store %arg21[%c0_63, %c0_64], %170 {strides = array<i32>} : memref<64x64xf32, #tpu.memory_space<vmem>>, vector<64x64xf32>,
    %c1_65 = arith.constant 1 : index
    %c0_66 = arith.constant 0 : index
    %172 = tpu.strided_load %arg21[%c1_65, %c0_66] {strides = array<i32: 2, 1>} : memref<64x64xf32, #tpu.memory_space<vmem>>, vector<32x64xf32>
    %173 = vector.extract_strided_slice %172 {offsets = [0, 0], sizes = [16, 64], strides = [1, 1]} : vector<32x64xf32> to vector<16x64xf32>
    %174 = vector.extract_strided_slice %173 {offsets = [15, 0], sizes = [1, 64], strides = [1, 1]} : vector<16x64xf32> to vector<1x64xf32>
    %175 = vector.extract_strided_slice %173 {offsets = [0, 0], sizes = [15, 64], strides = [1, 1]} : vector<16x64xf32> to vector<15x64xf32>
    %176 = vector.extract_strided_slice %172 {offsets = [16, 0], sizes = [16, 64], strides = [1, 1]} : vector<32x64xf32> to vector<16x64xf32>
    %177 = vector.extract_strided_slice %176 {offsets = [15, 0], sizes = [1, 64], strides = [1, 1]} : vector<16x64xf32> to vector<1x64xf32>
    %178 = vector.extract_strided_slice %176 {offsets = [0, 0], sizes = [15, 64], strides = [1, 1]} : vector<16x64xf32> to vector<15x64xf32>
    %179 = tpu.concatenate %174, %175, %177, %178 in 0 : vector<1x64xf32>, vector<15x64xf32>, vector<1x64xf32>, vector<15x64xf32> -> vector<32x64xf32>
    %c128 = arith.constant 128 : index
    %c0_67 = arith.constant 0 : index
    %180 = vector.load %arg10[%c128, %c0_67] : memref<192x128xbf16, #tpu.memory_space<vmem>>, vector<64x128xbf16>
    %181 = arith.extf %180 : vector<64x128xbf16> to vector<64x128xf32>
    %cst_68 = arith.constant dense<0.000000e+00> : vector<32x128xf32>
    %182 = tpu.matmul %172, %181, %cst_68 {dimension_numbers = #tpu.dot_dimension_numbers<[1], [0], [0], [1], [0, 0, 1, 1], [], []>} : vector<32x64xf32>, vector<64x128xf32>, vector<32x128xf32> -> vector<32x128xf32>
    %c0_69 = arith.constant 0 : index
    %c0_70 = arith.constant 0 : index
    %183 = vector.load %arg10[%c0_69, %c0_70] : memref<192x128xbf16, #tpu.memory_space<vmem>>, vector<64x128xbf16>
    %184 = arith.extf %183 : vector<64x128xbf16> to vector<64x128xf32>
    %cst_71 = arith.constant dense<0.000000e+00> : vector<32x128xf32>
    %185 = tpu.matmul %179, %184, %cst_71 {dimension_numbers = #tpu.dot_dimension_numbers<[1], [0], [0], [1], [0, 0, 1, 1], [], []>} : vector<32x64xf32>, vector<64x128xf32>, vector<32x128xf32> -> vector<32x128xf32>
    %186 = arith.addf %182, %185 : vector<32x128xf32>
    %c0_72 = arith.constant 0 : index
    %c0_73 = arith.constant 0 : index
    %187 = tpu.strided_load %arg21[%c0_72, %c0_73] {strides = array<i32: 2, 1>} : memref<64x64xf32, #tpu.memory_space<vmem>>, vector<32x64xf32>
    %c64_74 = arith.constant 64 : index
    %c0_75 = arith.constant 0 : index
    %188 = vector.load %arg10[%c64_74, %c0_75] : memref<192x128xbf16, #tpu.memory_space<vmem>>, vector<64x128xbf16>
    %189 = arith.extf %188 : vector<64x128xbf16> to vector<64x128xf32>
    %cst_76 = arith.constant dense<0.000000e+00> : vector<32x128xf32>
    %190 = tpu.matmul %187, %189, %cst_76 {dimension_numbers = #tpu.dot_dimension_numbers<[1], [0], [0], [1], [0, 0, 1, 1], [], []>} : vector<32x64xf32>, vector<64x128xf32>, vector<32x128xf32> -> vector<32x128xf32>
    %191 = arith.addf %186, %190 : vector<32x128xf32>
    %cst_77 = arith.constant dense<0.000000e+00> : vector<128xf32>
    %192 = vector.multi_reduction <add>, %191, %cst_77 [0] : vector<32x128xf32> to vector<128xf32>
    %193 = vector.shape_cast %192 : vector<128xf32> to vector<1x128xf32>
    %cst_78 = arith.constant 3.125000e-02 : f32
    %194 = vector.broadcast %cst_78 : f32 to vector<1x128xf32>
    %195 = arith.mulf %193, %194 : vector<1x128xf32>
    %196 = arith.mulf %191, %191 : vector<32x128xf32>
    %cst_79 = arith.constant dense<0.000000e+00> : vector<128xf32>
    %197 = vector.multi_reduction <add>, %196, %cst_79 [0] : vector<32x128xf32> to vector<128xf32>
    %198 = vector.shape_cast %197 : vector<128xf32> to vector<1x128xf32>
    %cst_80 = arith.constant 3.125000e-02 : f32
    %199 = vector.broadcast %cst_80 : f32 to vector<1x128xf32>
    %200 = arith.mulf %198, %199 : vector<1x128xf32>
    %201 = arith.mulf %195, %195 : vector<1x128xf32>
    %202 = arith.subf %200, %201 : vector<1x128xf32>
    %c0_81 = arith.constant 0 : index
    %c0_82 = arith.constant 0 : index
    %203 = vector.load %arg11[%c0_81, %c0_82] : memref<1x128xf32, #tpu.memory_space<vmem>>, vector<1x128xf32>
    %cst_83 = arith.constant 9.99999974E-6 : f32
    %204 = vector.broadcast %cst_83 : f32 to vector<1x128xf32>
    %205 = arith.addf %202, %204 : vector<1x128xf32>
    %206 = math.rsqrt %205 : vector<1x128xf32>
    %207 = arith.mulf %203, %206 : vector<1x128xf32>
    %208 = vector.broadcast %207 : vector<1x128xf32> to vector<32x128xf32>
    %209 = arith.mulf %208, %191 : vector<32x128xf32>
    %c0_84 = arith.constant 0 : index
    %c0_85 = arith.constant 0 : index
    %210 = vector.load %arg12[%c0_84, %c0_85] : memref<1x128xf32, #tpu.memory_space<vmem>>, vector<1x128xf32>
    %211 = arith.mulf %207, %195 : vector<1x128xf32>
    %212 = arith.subf %210, %211 : vector<1x128xf32>
    %213 = vector.broadcast %212 : vector<1x128xf32> to vector<32x128xf32>
    %214 = arith.addf %209, %213 : vector<32x128xf32>
    %cst_86 = arith.constant 0.000000e+00 : f32
    %215 = vector.broadcast %cst_86 : f32 to vector<32x128xf32>
    %216 = arith.cmpf ogt, %214, %215 : vector<32x128xf32>
    %cst_87 = arith.constant 0.00999999977 : f32
    %217 = vector.broadcast %cst_87 : f32 to vector<32x128xf32>
    %218 = arith.mulf %217, %214 : vector<32x128xf32>
    %219 = arith.select %216, %214, %218 : vector<32x128xi1>, vector<32x128xf32>
    %c0_88 = arith.constant 0 : index
    %c0_89 = arith.constant 0 : index
    %220 = vector.load %arg22[%c0_88, %c0_89] : memref<32x128xf32, #tpu.memory_space<vmem>>, vector<32x128xf32>
    tpu.vector_store %arg22[%c0_88, %c0_89], %219 {strides = array<i32>} : memref<32x128xf32, #tpu.memory_space<vmem>>, vector<32x128xf32>,
    %c0_i32_90 = arith.constant 0 : i32
    %221 = tpu.memref_slice %arg26[%c0_i32_90] : memref<2x!tpu.dma_semaphore, #tpu.memory_space<semaphore_mem>> -> memref<1x!tpu.dma_semaphore, #tpu.memory_space<semaphore_mem>>
    %222 = tpu.memref_squeeze %221 : memref<1x!tpu.dma_semaphore, #tpu.memory_space<semaphore_mem>> -> memref<!tpu.dma_semaphore, #tpu.memory_space<semaphore_mem>>
    tpu.wait_dma2 semaphore(%222 : memref<!tpu.dma_semaphore, #tpu.memory_space<semaphore_mem>>) src(%arg13 : memref<384x256xbf16, #tpu.memory_space<any>>) dst(%arg24 : memref<384x256xbf16, #tpu.memory_space<vmem>>)
    %c1_91 = arith.constant 1 : index
    %c0_92 = arith.constant 0 : index
    %223 = tpu.strided_load %arg22[%c1_91, %c0_92] {strides = array<i32: 2, 1>} : memref<32x128xf32, #tpu.memory_space<vmem>>, vector<16x128xf32>
    %224 = vector.extract_strided_slice %223 {offsets = [0, 0], sizes = [8, 128], strides = [1, 1]} : vector<16x128xf32> to vector<8x128xf32>
    %225 = vector.extract_strided_slice %224 {offsets = [7, 0], sizes = [1, 128], strides = [1, 1]} : vector<8x128xf32> to vector<1x128xf32>
    %226 = vector.extract_strided_slice %224 {offsets = [0, 0], sizes = [7, 128], strides = [1, 1]} : vector<8x128xf32> to vector<7x128xf32>
    %227 = vector.extract_strided_slice %223 {offsets = [8, 0], sizes = [8, 128], strides = [1, 1]} : vector<16x128xf32> to vector<8x128xf32>
    %228 = vector.extract_strided_slice %227 {offsets = [7, 0], sizes = [1, 128], strides = [1, 1]} : vector<8x128xf32> to vector<1x128xf32>
    %229 = vector.extract_strided_slice %227 {offsets = [0, 0], sizes = [7, 128], strides = [1, 1]} : vector<8x128xf32> to vector<7x128xf32>
    %230 = tpu.concatenate %225, %226, %228, %229 in 0 : vector<1x128xf32>, vector<7x128xf32>, vector<1x128xf32>, vector<7x128xf32> -> vector<16x128xf32>
    %c256 = arith.constant 256 : index
    %c0_93 = arith.constant 0 : index
    %231 = vector.load %arg24[%c256, %c0_93] : memref<384x256xbf16, #tpu.memory_space<vmem>>, vector<128x256xbf16>
    %232 = arith.extf %231 : vector<128x256xbf16> to vector<128x256xf32>
    %cst_94 = arith.constant dense<0.000000e+00> : vector<16x256xf32>
    %233 = tpu.matmul %223, %232, %cst_94 {dimension_numbers = #tpu.dot_dimension_numbers<[1], [0], [0], [1], [0, 0, 1, 1], [], []>} : vector<16x128xf32>, vector<128x256xf32>, vector<16x256xf32> -> vector<16x256xf32>
    %c0_95 = arith.constant 0 : index
    %c0_96 = arith.constant 0 : index
    %234 = vector.load %arg24[%c0_95, %c0_96] : memref<384x256xbf16, #tpu.memory_space<vmem>>, vector<128x256xbf16>
    %235 = arith.extf %234 : vector<128x256xbf16> to vector<128x256xf32>
    %cst_97 = arith.constant dense<0.000000e+00> : vector<16x256xf32>
    %236 = tpu.matmul %230, %235, %cst_97 {dimension_numbers = #tpu.dot_dimension_numbers<[1], [0], [0], [1], [0, 0, 1, 1], [], []>} : vector<16x128xf32>, vector<128x256xf32>, vector<16x256xf32> -> vector<16x256xf32>
    %237 = arith.addf %233, %236 : vector<16x256xf32>
    %c0_98 = arith.constant 0 : index
    %c0_99 = arith.constant 0 : index
    %238 = tpu.strided_load %arg22[%c0_98, %c0_99] {strides = array<i32: 2, 1>} : memref<32x128xf32, #tpu.memory_space<vmem>>, vector<16x128xf32>
    %c128_100 = arith.constant 128 : index
    %c0_101 = arith.constant 0 : index
    %239 = vector.load %arg24[%c128_100, %c0_101] : memref<384x256xbf16, #tpu.memory_space<vmem>>, vector<128x256xbf16>
    %240 = arith.extf %239 : vector<128x256xbf16> to vector<128x256xf32>
    %cst_102 = arith.constant dense<0.000000e+00> : vector<16x256xf32>
    %241 = tpu.matmul %238, %240, %cst_102 {dimension_numbers = #tpu.dot_dimension_numbers<[1], [0], [0], [1], [0, 0, 1, 1], [], []>} : vector<16x128xf32>, vector<128x256xf32>, vector<16x256xf32> -> vector<16x256xf32>
    %242 = arith.addf %237, %241 : vector<16x256xf32>
    %cst_103 = arith.constant dense<0.000000e+00> : vector<256xf32>
    %243 = vector.multi_reduction <add>, %242, %cst_103 [0] : vector<16x256xf32> to vector<256xf32>
    %244 = vector.shape_cast %243 : vector<256xf32> to vector<1x256xf32>
    %cst_104 = arith.constant 6.250000e-02 : f32
    %245 = vector.broadcast %cst_104 : f32 to vector<1x256xf32>
    %246 = arith.mulf %244, %245 : vector<1x256xf32>
    %247 = arith.mulf %242, %242 : vector<16x256xf32>
    %cst_105 = arith.constant dense<0.000000e+00> : vector<256xf32>
    %248 = vector.multi_reduction <add>, %247, %cst_105 [0] : vector<16x256xf32> to vector<256xf32>
    %249 = vector.shape_cast %248 : vector<256xf32> to vector<1x256xf32>
    %cst_106 = arith.constant 6.250000e-02 : f32
    %250 = vector.broadcast %cst_106 : f32 to vector<1x256xf32>
    %251 = arith.mulf %249, %250 : vector<1x256xf32>
    %252 = arith.mulf %246, %246 : vector<1x256xf32>
    %253 = arith.subf %251, %252 : vector<1x256xf32>
    %c0_107 = arith.constant 0 : index
    %c0_108 = arith.constant 0 : index
    %254 = vector.load %arg14[%c0_107, %c0_108] : memref<1x256xf32, #tpu.memory_space<vmem>>, vector<1x256xf32>
    %cst_109 = arith.constant 9.99999974E-6 : f32
    %255 = vector.broadcast %cst_109 : f32 to vector<1x256xf32>
    %256 = arith.addf %253, %255 : vector<1x256xf32>
    %257 = math.rsqrt %256 : vector<1x256xf32>
    %258 = arith.mulf %254, %257 : vector<1x256xf32>
    %259 = vector.broadcast %258 : vector<1x256xf32> to vector<16x256xf32>
    %260 = arith.mulf %259, %242 : vector<16x256xf32>
    %c0_110 = arith.constant 0 : index
    %c0_111 = arith.constant 0 : index
    %261 = vector.load %arg15[%c0_110, %c0_111] : memref<1x256xf32, #tpu.memory_space<vmem>>, vector<1x256xf32>
    %262 = arith.mulf %258, %246 : vector<1x256xf32>
    %263 = arith.subf %261, %262 : vector<1x256xf32>
    %264 = vector.broadcast %263 : vector<1x256xf32> to vector<16x256xf32>
    %265 = arith.addf %260, %264 : vector<16x256xf32>
    %cst_112 = arith.constant 0.000000e+00 : f32
    %266 = vector.broadcast %cst_112 : f32 to vector<16x256xf32>
    %267 = arith.cmpf ogt, %265, %266 : vector<16x256xf32>
    %cst_113 = arith.constant 0.00999999977 : f32
    %268 = vector.broadcast %cst_113 : f32 to vector<16x256xf32>
    %269 = arith.mulf %268, %265 : vector<16x256xf32>
    %270 = arith.select %267, %265, %269 : vector<16x256xi1>, vector<16x256xf32>
    %c0_114 = arith.constant 0 : index
    %c0_115 = arith.constant 0 : index
    %271 = vector.load %arg23[%c0_114, %c0_115] : memref<16x256xf32, #tpu.memory_space<vmem>>, vector<16x256xf32>
    tpu.vector_store %arg23[%c0_114, %c0_115], %270 {strides = array<i32>} : memref<16x256xf32, #tpu.memory_space<vmem>>, vector<16x256xf32>,
    %c1_i32_116 = arith.constant 1 : i32
    %272 = tpu.memref_slice %arg26[%c1_i32_116] : memref<2x!tpu.dma_semaphore, #tpu.memory_space<semaphore_mem>> -> memref<1x!tpu.dma_semaphore, #tpu.memory_space<semaphore_mem>>
    %273 = tpu.memref_squeeze %272 : memref<1x!tpu.dma_semaphore, #tpu.memory_space<semaphore_mem>> -> memref<!tpu.dma_semaphore, #tpu.memory_space<semaphore_mem>>
    tpu.wait_dma2 semaphore(%273 : memref<!tpu.dma_semaphore, #tpu.memory_space<semaphore_mem>>) src(%arg16 : memref<2048x32xbf16, #tpu.memory_space<any>>) dst(%arg25 : memref<2048x32xbf16, #tpu.memory_space<vmem>>)
    %cst_117 = arith.constant 0.000000e+00 : f32
    %274 = vector.broadcast %cst_117 : f32 to vector<2x32xf32>
    %c0_i32_118 = arith.constant 0 : i32
    %c8_i32 = arith.constant 8 : i32
    %275 = arith.addi %c0_i32_118, %c8_i32 : i32
    %c1_i32_119 = arith.constant 1 : i32
    %276 = scf.for %arg27 = %c0_i32_118 to %275 step %c1_i32_119 iter_args(%arg28 = %274) -> (vector<2x32xf32>)  : i32 {
      %c256_i32 = arith.constant 256 : i32
      %281 = arith.muli %arg27, %c256_i32 : i32
      %282 = tpu.assume_multiple %281, 256 : i32
      %283 = arith.index_cast %282 : i32 to index
      %c0_125 = arith.constant 0 : index
      %284 = vector.load %arg25[%283, %c0_125] : memref<2048x32xbf16, #tpu.memory_space<vmem>>, vector<256x32xbf16>
      %285 = arith.extf %284 : vector<256x32xbf16> to vector<256x32xf32>
      %c0_i32_126 = arith.constant 0 : i32
      %286 = arith.addi %c0_i32_126, %arg27 : i32
      %287 = arith.index_cast %286 : i32 to index
      %c0_127 = arith.constant 0 : index
      %288 = vector.load %arg23[%287, %c0_127] : memref<16x256xf32, #tpu.memory_space<vmem>>, vector<1x256xf32>
      %c8_i32_128 = arith.constant 8 : i32
      %289 = arith.addi %c8_i32_128, %arg27 : i32
      %290 = arith.index_cast %289 : i32 to index
      %c0_129 = arith.constant 0 : index
      %291 = vector.load %arg23[%290, %c0_129] : memref<16x256xf32, #tpu.memory_space<vmem>>, vector<1x256xf32>
      %292 = tpu.concatenate %288, %291 in 0 : vector<1x256xf32>, vector<1x256xf32> -> vector<2x256xf32>
      %cst_130 = arith.constant dense<0.000000e+00> : vector<2x32xf32>
      %293 = tpu.matmul %292, %285, %cst_130 {dimension_numbers = #tpu.dot_dimension_numbers<[1], [0], [0], [1], [0, 0, 1, 1], [], []>} : vector<2x256xf32>, vector<256x32xf32>, vector<2x32xf32> -> vector<2x32xf32>
      %294 = arith.addf %arg28, %293 : vector<2x32xf32>
      scf.yield %294 : vector<2x32xf32>
    }
    %c8_i32_120 = arith.constant 8 : i32
    %c0_121 = arith.constant 0 : index
    %c0_122 = arith.constant 0 : index
    %277 = vector.load %arg17[%c0_121, %c0_122] : memref<1x32xf32, #tpu.memory_space<vmem>>, vector<1x32xf32>
    %278 = vector.broadcast %277 : vector<1x32xf32> to vector<2x32xf32>
    %279 = arith.addf %276, %278 : vector<2x32xf32>
    %c0_123 = arith.constant 0 : index
    %c0_124 = arith.constant 0 : index
    %280 = vector.load %arg18[%c0_123, %c0_124] : memref<2x32xf32, #tpu.memory_space<vmem>>, vector<2x32xf32>
    tpu.vector_store %arg18[%c0_123, %c0_124], %279 {strides = array<i32>} : memref<2x32xf32, #tpu.memory_space<vmem>>, vector<2x32xf32>,
    return
  }
}

</mosaic_0001>

<llo_original>
// kernel: encoder_forward.1
$region0: #{encoder_forward.1}
  #allocation0 [shape = 'u32[]', space=smem, size = 0x4, offset = 0x4, fixed_abs, tag = 'smem constant byte address 0x4 - core index']
  #allocation1 [shape = 'u32[144,128]{1,0:T(1,128)}', space=vmem, size = 0x12000, scoped, tag = 'internal scratch']
  #allocation2 [shape = 'f32[256,16]{1,0:T(8,128)}', space=vmem, size = 0x20000, scoped, tag = 'scratch operand']
  #allocation3 [shape = 'f32[128,32]{1,0:T(8,128)}', space=vmem, size = 0x10000, scoped, tag = 'scratch operand']
  #allocation4 [shape = 'f32[64,64]{1,0:T(8,128)}', space=vmem, size = 0x8000, scoped, tag = 'scratch operand']
  #allocation5 [shape = 'f32[32,128]{1,0:T(8,128)}', space=vmem, size = 0x4000, scoped, tag = 'scratch operand']
  #allocation6 [shape = 'f32[16,256]{1,0:T(8,128)}', space=vmem, size = 0x4000, scoped, tag = 'scratch operand']
  #allocation7 [shape = 'bf16[384,256]{1,0:T(8,128)(2,1)}', space=vmem, size = 0x30000, scoped, tag = 'scratch operand']
  #allocation8 [shape = 'bf16[2048,32]{1,0:T(8,128)(2,1)}', space=vmem, size = 0x80000, scoped, tag = 'scratch operand']
  #allocation9 [shape = 's32[2]{0}', space=sflag, size = 0x8, scoped, tag = 'scratch operand']
  #allocation10 [shape = 's32[]', space=sflag, size = 0x4, offset = 0, fixed_abs, tag = 'sflag constant byte address 0x0 - dummy sync flag']
  #allocation11 [shape = 's32[]', space=sflag, size = 0x4, offset = 0, fixed_abs, tag = 'sflag constant byte address 0x0 - dummy sync flag']
  %s0 = inlined_call_operand.vmem [shape: f32[256,2], index: 0, kind: input, shape index: {}]
  %s1 = inlined_call_operand.vmem [shape: f32[3,16], index: 1, kind: input, shape index: {}]
  %s2 = inlined_call_operand.vmem [shape: f32[1,16], index: 2, kind: input, shape index: {}]
  %s3 = inlined_call_operand.vmem [shape: f32[1,16], index: 3, kind: input, shape index: {}]
  %s4 = inlined_call_operand.vmem [shape: bf16[48,32], index: 4, kind: input, shape index: {}]
  %s5 = inlined_call_operand.vmem [shape: f32[1,32], index: 5, kind: input, shape index: {}]
  %s6 = inlined_call_operand.vmem [shape: f32[1,32], index: 6, kind: input, shape index: {}]
  %s7 = inlined_call_operand.vmem [shape: bf16[96,64], index: 7, kind: input, shape index: {}]
  %s8 = inlined_call_operand.vmem [shape: f32[1,64], index: 8, kind: input, shape index: {}]
  %s9 = inlined_call_operand.vmem [shape: f32[1,64], index: 9, kind: input, shape index: {}]
  %s10 = inlined_call_operand.vmem [shape: bf16[192,128], index: 10, kind: input, shape index: {}]
  %s11 = inlined_call_operand.vmem [shape: f32[1,128], index: 11, kind: input, shape index: {}]
  %s12 = inlined_call_operand.vmem [shape: f32[1,128], index: 12, kind: input, shape index: {}]
  %s13 = inlined_call_operand.vmem [shape: bf16[384,256], index: 13, kind: input, shape index: {}]
  %s14 = inlined_call_operand.vmem [shape: f32[1,256], index: 14, kind: input, shape index: {}]
  %s15 = inlined_call_operand.vmem [shape: f32[1,256], index: 15, kind: input, shape index: {}]
  %s16 = inlined_call_operand.vmem [shape: bf16[2048,32], index: 16, kind: input, shape index: {}]
  %s17 = inlined_call_operand.vmem [shape: f32[1,32], index: 17, kind: input, shape index: {}]
  %s18 = inlined_call_operand.vmem [shape: f32[2,32], index: 18, kind: output, shape index: {}]
  %s19 = sld [smem:[#allocation0]]
  $region149: #{encoder_forward.1} parent=0
    _
  %s21 = ssub.s32 1, %s19
  %s22 = scalar_select 0, %s21, %s19
  // Predicated region
  $region2: #{encoder_forward.1} parent=0 // pred_check
    _
  $region3: #{encoder_forward.1} parent=0 // pred_check_branch
    %24 = sbr.rel (0) target = $region5
  $region4: #{encoder_forward.1} parent=0 // pred_region
    _
  $region5: #{encoder_forward.1} parent=0 // pred_fallthru
    _
  // Predicated region
  $region6: #{encoder_forward.1} parent=0 // pred_check
    _
  $region7: #{encoder_forward.1} parent=0 // pred_check_branch
    %26 = sbr.rel (0) target = $region9
  $region8: #{encoder_forward.1} parent=0 // pred_region
    _
  $region9: #{encoder_forward.1} parent=0 // pred_fallthru
    _
  // Predicated region
  $region10: #{encoder_forward.1} parent=0 // pred_check
    _
  $region11: #{encoder_forward.1} parent=0 // pred_check_branch
    %28 = sbr.rel (0) target = $region13
  $region12: #{encoder_forward.1} parent=0 // pred_region
    _
  $region13: #{encoder_forward.1} parent=0 // pred_fallthru
    _
  // Predicated region
  $region14: #{encoder_forward.1} parent=0 // pred_check
    _
  $region15: #{encoder_forward.1} parent=0 // pred_check_branch
    %30 = sbr.rel (0) target = $region17
  $region16: #{encoder_forward.1} parent=0 // pred_region
    _
  $region17: #{encoder_forward.1} parent=0 // pred_fallthru
    _
  // Predicated region
  $region18: #{encoder_forward.1} parent=0 // pred_check
    _
  $region19: #{encoder_forward.1} parent=0 // pred_check_branch
    %32 = sbr.rel (0) target = $region21
  $region20: #{encoder_forward.1} parent=0 // pred_region
    _
  $region21: #{encoder_forward.1} parent=0 // pred_fallthru
    _
  // Predicated region
  $region22: #{encoder_forward.1} parent=0 // pred_check
    _
  $region23: #{encoder_forward.1} parent=0 // pred_check_branch
    %34 = sbr.rel (0) target = $region25
  $region24: #{encoder_forward.1} parent=0 // pred_region
    _
  $region25: #{encoder_forward.1} parent=0 // pred_fallthru
    _
  // Predicated region
  $region26: #{encoder_forward.1} parent=0 // pred_check
    _
  $region27: #{encoder_forward.1} parent=0 // pred_check_branch
    %36 = sbr.rel (0) target = $region29
  $region28: #{encoder_forward.1} parent=0 // pred_region
    _
  $region29: #{encoder_forward.1} parent=0 // pred_fallthru
    _
  // Predicated region
  $region30: #{encoder_forward.1} parent=0 // pred_check
    _
  $region31: #{encoder_forward.1} parent=0 // pred_check_branch
    %38 = sbr.rel (0) target = $region33
  $region32: #{encoder_forward.1} parent=0 // pred_region
    _
  $region33: #{encoder_forward.1} parent=0 // pred_fallthru
    _
  // Predicated region
  $region34: #{encoder_forward.1} parent=0 // pred_check
    _
  $region35: #{encoder_forward.1} parent=0 // pred_check_branch
    %40 = sbr.rel (0) target = $region37
  $region36: #{encoder_forward.1} parent=0 // pred_region
    _
  $region37: #{encoder_forward.1} parent=0 // pred_fallthru
    _
  // Predicated region
  $region38: #{encoder_forward.1} parent=0 // pred_check
    _
  $region39: #{encoder_forward.1} parent=0 // pred_check_branch
    %42 = sbr.rel (0) target = $region41
  $region40: #{encoder_forward.1} parent=0 // pred_region
    _
  $region41: #{encoder_forward.1} parent=0 // pred_fallthru
    _
  // Predicated region
  $region42: #{encoder_forward.1} parent=0 // pred_check
    _
  $region43: #{encoder_forward.1} parent=0 // pred_check_branch
    %44 = sbr.rel (0) target = $region45
  $region44: #{encoder_forward.1} parent=0 // pred_region
    _
  $region45: #{encoder_forward.1} parent=0 // pred_fallthru
    _
  // Predicated region
  $region46: #{encoder_forward.1} parent=0 // pred_check
    _
  $region47: #{encoder_forward.1} parent=0 // pred_check_branch
    %46 = sbr.rel (0) target = $region49
  $region48: #{encoder_forward.1} parent=0 // pred_region
    _
  $region49: #{encoder_forward.1} parent=0 // pred_fallthru
    _
  // Predicated region
  $region50: #{encoder_forward.1} parent=0 // pred_check
    _
  $region51: #{encoder_forward.1} parent=0 // pred_check_branch
    %48 = sbr.rel (0) target = $region53
  $region52: #{encoder_forward.1} parent=0 // pred_region
    _
  $region53: #{encoder_forward.1} parent=0 // pred_fallthru
    _
  // Predicated region
  $region54: #{encoder_forward.1} parent=0 // pred_check
    _
  $region55: #{encoder_forward.1} parent=0 // pred_check_branch
    %50 = sbr.rel (0) target = $region57
  $region56: #{encoder_forward.1} parent=0 // pred_region
    _
  $region57: #{encoder_forward.1} parent=0 // pred_fallthru
    _
  // Predicated region
  $region58: #{encoder_forward.1} parent=0 // pred_check
    _
  $region59: #{encoder_forward.1} parent=0 // pred_check_branch
    %52 = sbr.rel (0) target = $region61
  $region60: #{encoder_forward.1} parent=0 // pred_region
    _
  $region61: #{encoder_forward.1} parent=0 // pred_fallthru
    _
  // Predicated region
  $region62: #{encoder_forward.1} parent=0 // pred_check
    _
  $region63: #{encoder_forward.1} parent=0 // pred_check_branch
    %54 = sbr.rel (0) target = $region65
  $region64: #{encoder_forward.1} parent=0 // pred_region
    _
  $region65: #{encoder_forward.1} parent=0 // pred_fallthru
    _
  %p56 = scmp.lt.u32.totalorder 384, 8
  %p57 = pneg %p56
  // Predicated region
  $region66: #{encoder_forward.1} parent=0 // pred_check
    _
  $region67: #{encoder_forward.1} parent=0 // pred_check_branch
    %59 = sbr.rel (%p56) target = $region69
  $region68: #{encoder_forward.1} parent=0 // pred_region
    %s75 = sand.u32 384, 7
    %p76 = scmp.eq.s32.totalorder %s75, 0
    // Predicated region
    $region81: #{encoder_forward.1} parent=68 // pred_check
      %p77 = pneg %p76
    $region82: #{encoder_forward.1} parent=68 // pred_check_branch
      %79 = sbr.rel (%p77) target = $region84
    $region83: #{encoder_forward.1} parent=68 // pred_region
      loop: start=0, step=1, limit=1
      $region85: #{encoder_forward.1} parent=83 // loop_pre_header
        _
      $region86: #{encoder_forward.1} parent=83 // loop_header
        %s81 = sphi 0, %s85
        %p82 = scmp.ge.s32.totalorder %s81, 1
        %s86 = sphi %s13, %s13
        %s87 = sphi [#allocation7], [#allocation7]
      $region87: #{encoder_forward.1} parent=83 // loop_header_branch
        %84 = sbr.rel (%p82) target = $region91
      $region88: #{encoder_forward.1} parent=83 // loop_body
        %v88 = vld [vmem:[%s86] sm:$0xff]
        %89 = vst [vmem:[%s87] sm:$0xff] %v88
        %v90 = vld [vmem:[%s86 + $0x8] sm:$0xff]
        %91 = vst [vmem:[%s87 + $0x8] sm:$0xff] %v90
        %v92 = vld [vmem:[%s86 + $0x10] sm:$0xff]
        %93 = vst [vmem:[%s87 + $0x10] sm:$0xff] %v92
        %v94 = vld [vmem:[%s86 + $0x18] sm:$0xff]
        %95 = vst [vmem:[%s87 + $0x18] sm:$0xff] %v94
        %v96 = vld [vmem:[%s86 + $0x20] sm:$0xff]
        %97 = vst [vmem:[%s87 + $0x20] sm:$0xff] %v96
        %v98 = vld [vmem:[%s86 + $0x28] sm:$0xff]
        %99 = vst [vmem:[%s87 + $0x28] sm:$0xff] %v98
        %v100 = vld [vmem:[%s86 + $0x30] sm:$0xff]
        %101 = vst [vmem:[%s87 + $0x30] sm:$0xff] %v100
        %v102 = vld [vmem:[%s86 + $0x38] sm:$0xff]
        %103 = vst [vmem:[%s87 + $0x38] sm:$0xff] %v102
        %v104 = vld [vmem:[%s86 + $0x40] sm:$0xff]
        %105 = vst [vmem:[%s87 + $0x40] sm:$0xff] %v104
        %v106 = vld [vmem:[%s86 + $0x48] sm:$0xff]
        %107 = vst [vmem:[%s87 + $0x48] sm:$0xff] %v106
        %v108 = vld [vmem:[%s86 + $0x50] sm:$0xff]
        %109 = vst [vmem:[%s87 + $0x50] sm:$0xff] %v108
        %v110 = vld [vmem:[%s86 + $0x58] sm:$0xff]
        %111 = vst [vmem:[%s87 + $0x58] sm:$0xff] %v110
        %v112 = vld [vmem:[%s86 + $0x60] sm:$0xff]
        %113 = vst [vmem:[%s87 + $0x60] sm:$0xff] %v112
        %v114 = vld [vmem:[%s86 + $0x68] sm:$0xff]
        %115 = vst [vmem:[%s87 + $0x68] sm:$0xff] %v114
        %v116 = vld [vmem:[%s86 + $0x70] sm:$0xff]
        %117 = vst [vmem:[%s87 + $0x70] sm:$0xff] %v116
        %v118 = vld [vmem:[%s86 + $0x78] sm:$0xff]
        %119 = vst [vmem:[%s87 + $0x78] sm:$0xff] %v118
        %v120 = vld [vmem:[%s86 + $0x80] sm:$0xff]
        %121 = vst [vmem:[%s87 + $0x80] sm:$0xff] %v120
        %v122 = vld [vmem:[%s86 + $0x88] sm:$0xff]
        %123 = vst [vmem:[%s87 + $0x88] sm:$0xff] %v122
        %v124 = vld [vmem:[%s86 + $0x90] sm:$0xff]
        %125 = vst [vmem:[%s87 + $0x90] sm:$0xff] %v124
        %v126 = vld [vmem:[%s86 + $0x98] sm:$0xff]
        %127 = vst [vmem:[%s87 + $0x98] sm:$0xff] %v126
        %v128 = vld [vmem:[%s86 + $0xa0] sm:$0xff]
        %129 = vst [vmem:[%s87 + $0xa0] sm:$0xff] %v128
        %v130 = vld [vmem:[%s86 + $0xa8] sm:$0xff]
        %131 = vst [vmem:[%s87 + $0xa8] sm:$0xff] %v130
        %v132 = vld [vmem:[%s86 + $0xb0] sm:$0xff]
        %133 = vst [vmem:[%s87 + $0xb0] sm:$0xff] %v132
        %v134 = vld [vmem:[%s86 + $0xb8] sm:$0xff]
        %135 = vst [vmem:[%s87 + $0xb8] sm:$0xff] %v134
        %v136 = vld [vmem:[%s86 + $0xc0] sm:$0xff]
        %137 = vst [vmem:[%s87 + $0xc0] sm:$0xff] %v136
        %v138 = vld [vmem:[%s86 + $0xc8] sm:$0xff]
        %139 = vst [vmem:[%s87 + $0xc8] sm:$0xff] %v138
        %v140 = vld [vmem:[%s86 + $0xd0] sm:$0xff]
        %141 = vst [vmem:[%s87 + $0xd0] sm:$0xff] %v140
        %v142 = vld [vmem:[%s86 + $0xd8] sm:$0xff]
        %143 = vst [vmem:[%s87 + $0xd8] sm:$0xff] %v142
        %v144 = vld [vmem:[%s86 + $0xe0] sm:$0xff]
        %145 = vst [vmem:[%s87 + $0xe0] sm:$0xff] %v144
        %v146 = vld [vmem:[%s86 + $0xe8] sm:$0xff]
        %147 = vst [vmem:[%s87 + $0xe8] sm:$0xff] %v146
        %v148 = vld [vmem:[%s86 + $0xf0] sm:$0xff]
        %149 = vst [vmem:[%s87 + $0xf0] sm:$0xff] %v148
        %v150 = vld [vmem:[%s86 + $0xf8] sm:$0xff]
        %151 = vst [vmem:[%s87 + $0xf8] sm:$0xff] %v150
        %v152 = vld [vmem:[%s86 + $0x100] sm:$0xff]
        %153 = vst [vmem:[%s87 + $0x100] sm:$0xff] %v152
        %v154 = vld [vmem:[%s86 + $0x108] sm:$0xff]
        %155 = vst [vmem:[%s87 + $0x108] sm:$0xff] %v154
        %v156 = vld [vmem:[%s86 + $0x110] sm:$0xff]
        %157 = vst [vmem:[%s87 + $0x110] sm:$0xff] %v156
        %v158 = vld [vmem:[%s86 + $0x118] sm:$0xff]
        %159 = vst [vmem:[%s87 + $0x118] sm:$0xff] %v158
        %v160 = vld [vmem:[%s86 + $0x120] sm:$0xff]
        %161 = vst [vmem:[%s87 + $0x120] sm:$0xff] %v160
        %v162 = vld [vmem:[%s86 + $0x128] sm:$0xff]
        %163 = vst [vmem:[%s87 + $0x128] sm:$0xff] %v162
        %v164 = vld [vmem:[%s86 + $0x130] sm:$0xff]
        %165 = vst [vmem:[%s87 + $0x130] sm:$0xff] %v164
        %v166 = vld [vmem:[%s86 + $0x138] sm:$0xff]
        %167 = vst [vmem:[%s87 + $0x138] sm:$0xff] %v166
        %v168 = vld [vmem:[%s86 + $0x140] sm:$0xff]
        %169 = vst [vmem:[%s87 + $0x140] sm:$0xff] %v168
        %v170 = vld [vmem:[%s86 + $0x148] sm:$0xff]
        %171 = vst [vmem:[%s87 + $0x148] sm:$0xff] %v170
        %v172 = vld [vmem:[%s86 + $0x150] sm:$0xff]
        %173 = vst [vmem:[%s87 + $0x150] sm:$0xff] %v172
        %v174 = vld [vmem:[%s86 + $0x158] sm:$0xff]
        %175 = vst [vmem:[%s87 + $0x158] sm:$0xff] %v174
        %v176 = vld [vmem:[%s86 + $0x160] sm:$0xff]
        %177 = vst [vmem:[%s87 + $0x160] sm:$0xff] %v176
        %v178 = vld [vmem:[%s86 + $0x168] sm:$0xff]
        %179 = vst [vmem:[%s87 + $0x168] sm:$0xff] %v178
        %v180 = vld [vmem:[%s86 + $0x170] sm:$0xff]
        %181 = vst [vmem:[%s87 + $0x170] sm:$0xff] %v180
        %v182 = vld [vmem:[%s86 + $0x178] sm:$0xff]
        %183 = vst [vmem:[%s87 + $0x178] sm:$0xff] %v182
      $region89: #{encoder_forward.1} parent=83 // loop_footer
        %s85 = sadd.s32 1, %s81
      $region90: #{encoder_forward.1} parent=83 // loop_footer_branch
        %80 = sbr.rel target = $region86
      $region91: #{encoder_forward.1} parent=83 // loop_exit
        _
    $region84: #{encoder_forward.1} parent=68 // pred_fallthru
      _
    %p184 = pneg %p76
    // Predicated region
    $region92: #{encoder_forward.1} parent=68 // pred_check
      _
    $region93: #{encoder_forward.1} parent=68 // pred_check_branch
      %186 = sbr.rel (%p76) target = $region95
    $region94: #{encoder_forward.1} parent=68 // pred_region
      %s187 = sand.u32 384, 7
    $region95: #{encoder_forward.1} parent=68 // pred_fallthru
      _
  $region69: #{encoder_forward.1} parent=0 // pred_fallthru
    _
  // Predicated region
  $region70: #{encoder_forward.1} parent=0 // pred_check
    %p60 = pneg %p56
  $region71: #{encoder_forward.1} parent=0 // pred_check_branch
    %62 = sbr.rel (%p60) target = $region73
  $region72: #{encoder_forward.1} parent=0 // pred_region
    %s63 = sshll.u32 1, 384
    %s64 = ssub.s32 %s63, 1
    loop: start=0, step=1, limit=1
    $region74: #{encoder_forward.1} parent=72 // loop_pre_header
      _
    $region75: #{encoder_forward.1} parent=72 // loop_header
      %s66 = sphi 0, %s70
      %p67 = scmp.ge.s32.totalorder %s66, 1
      %s71 = sphi %s13, %s13
      %s72 = sphi [#allocation7], [#allocation7]
    $region76: #{encoder_forward.1} parent=72 // loop_header_branch
      %69 = sbr.rel (%p67) target = $region80
    $region77: #{encoder_forward.1} parent=72 // loop_body
      %v73 = vld [vmem:[%s71] sm:%s64]
      %74 = vst [vmem:[%s72] sm:%s64] %v73
    $region78: #{encoder_forward.1} parent=72 // loop_footer
      %s70 = sadd.s32 1, %s66
    $region79: #{encoder_forward.1} parent=72 // loop_footer_branch
      %65 = sbr.rel target = $region75
    $region80: #{encoder_forward.1} parent=72 // loop_exit
      _
  $region73: #{encoder_forward.1} parent=0 // pred_fallthru
    _
  // Predicated region
  $region96: #{encoder_forward.1} parent=0 // pred_check
    _
  $region97: #{encoder_forward.1} parent=0 // pred_check_branch
    %190 = sbr.rel (0) target = $region99
  $region98: #{encoder_forward.1} parent=0 // pred_region
    %191 = vsyncadd [#allocation9], 6144
  $region99: #{encoder_forward.1} parent=0 // pred_fallthru
    _
  %s192 = scalar_lea.sflag [#allocation9], 1
  %p194 = scmp.lt.u32.totalorder 1024, 8
  %p195 = pneg %p194
  // Predicated region
  $region100: #{encoder_forward.1} parent=0 // pred_check
    _
  $region101: #{encoder_forward.1} parent=0 // pred_check_branch
    %197 = sbr.rel (%p194) target = $region103
  $region102: #{encoder_forward.1} parent=0 // pred_region
    %s213 = sand.u32 1024, 7
    %p214 = scmp.eq.s32.totalorder %s213, 0
    // Predicated region
    $region115: #{encoder_forward.1} parent=102 // pred_check
      %p215 = pneg %p214
    $region116: #{encoder_forward.1} parent=102 // pred_check_branch
      %217 = sbr.rel (%p215) target = $region118
    $region117: #{encoder_forward.1} parent=102 // pred_region
      loop: start=0, step=1, limit=1
      $region119: #{encoder_forward.1} parent=117 // loop_pre_header
        _
      $region120: #{encoder_forward.1} parent=117 // loop_header
        %s219 = sphi 0, %s223
        %p220 = scmp.ge.s32.totalorder %s219, 1
        %s224 = sphi %s16, %s16
        %s225 = sphi [#allocation8], [#allocation8]
      $region121: #{encoder_forward.1} parent=117 // loop_header_branch
        %222 = sbr.rel (%p220) target = $region125
      $region122: #{encoder_forward.1} parent=117 // loop_body
        %v226 = vld [vmem:[%s224] sm:$0xff]
        %227 = vst [vmem:[%s225] sm:$0xff] %v226
        %v228 = vld [vmem:[%s224 + $0x8] sm:$0xff]
        %229 = vst [vmem:[%s225 + $0x8] sm:$0xff] %v228
        %v230 = vld [vmem:[%s224 + $0x10] sm:$0xff]
        %231 = vst [vmem:[%s225 + $0x10] sm:$0xff] %v230
        %v232 = vld [vmem:[%s224 + $0x18] sm:$0xff]
        %233 = vst [vmem:[%s225 + $0x18] sm:$0xff] %v232
        %v234 = vld [vmem:[%s224 + $0x20] sm:$0xff]
        %235 = vst [vmem:[%s225 + $0x20] sm:$0xff] %v234
        %v236 = vld [vmem:[%s224 + $0x28] sm:$0xff]
        %237 = vst [vmem:[%s225 + $0x28] sm:$0xff] %v236
        %v238 = vld [vmem:[%s224 + $0x30] sm:$0xff]
        %239 = vst [vmem:[%s225 + $0x30] sm:$0xff] %v238
        %v240 = vld [vmem:[%s224 + $0x38] sm:$0xff]
        %241 = vst [vmem:[%s225 + $0x38] sm:$0xff] %v240
        %v242 = vld [vmem:[%s224 + $0x40] sm:$0xff]
        %243 = vst [vmem:[%s225 + $0x40] sm:$0xff] %v242
        %v244 = vld [vmem:[%s224 + $0x48] sm:$0xff]
        %245 = vst [vmem:[%s225 + $0x48] sm:$0xff] %v244
        %v246 = vld [vmem:[%s224 + $0x50] sm:$0xff]
        %247 = vst [vmem:[%s225 + $0x50] sm:$0xff] %v246
        %v248 = vld [vmem:[%s224 + $0x58] sm:$0xff]
        %249 = vst [vmem:[%s225 + $0x58] sm:$0xff] %v248
        %v250 = vld [vmem:[%s224 + $0x60] sm:$0xff]
        %251 = vst [vmem:[%s225 + $0x60] sm:$0xff] %v250
        %v252 = vld [vmem:[%s224 + $0x68] sm:$0xff]
        %253 = vst [vmem:[%s225 + $0x68] sm:$0xff] %v252
        %v254 = vld [vmem:[%s224 + $0x70] sm:$0xff]
        %255 = vst [vmem:[%s225 + $0x70] sm:$0xff] %v254
        %v256 = vld [vmem:[%s224 + $0x78] sm:$0xff]
        %257 = vst [vmem:[%s225 + $0x78] sm:$0xff] %v256
        %v258 = vld [vmem:[%s224 + $0x80] sm:$0xff]
        %259 = vst [vmem:[%s225 + $0x80] sm:$0xff] %v258
        %v260 = vld [vmem:[%s224 + $0x88] sm:$0xff]
        %261 = vst [vmem:[%s225 + $0x88] sm:$0xff] %v260
        %v262 = vld [vmem:[%s224 + $0x90] sm:$0xff]
        %263 = vst [vmem:[%s225 + $0x90] sm:$0xff] %v262
        %v264 = vld [vmem:[%s224 + $0x98] sm:$0xff]
        %265 = vst [vmem:[%s225 + $0x98] sm:$0xff] %v264
        %v266 = vld [vmem:[%s224 + $0xa0] sm:$0xff]
        %267 = vst [vmem:[%s225 + $0xa0] sm:$0xff] %v266
        %v268 = vld [vmem:[%s224 + $0xa8] sm:$0xff]
        %269 = vst [vmem:[%s225 + $0xa8] sm:$0xff] %v268
        %v270 = vld [vmem:[%s224 + $0xb0] sm:$0xff]
        %271 = vst [vmem:[%s225 + $0xb0] sm:$0xff] %v270
        %v272 = vld [vmem:[%s224 + $0xb8] sm:$0xff]
        %273 = vst [vmem:[%s225 + $0xb8] sm:$0xff] %v272
        %v274 = vld [vmem:[%s224 + $0xc0] sm:$0xff]
        %275 = vst [vmem:[%s225 + $0xc0] sm:$0xff] %v274
        %v276 = vld [vmem:[%s224 + $0xc8] sm:$0xff]
        %277 = vst [vmem:[%s225 + $0xc8] sm:$0xff] %v276
        %v278 = vld [vmem:[%s224 + $0xd0] sm:$0xff]
        %279 = vst [vmem:[%s225 + $0xd0] sm:$0xff] %v278
        %v280 = vld [vmem:[%s224 + $0xd8] sm:$0xff]
        %281 = vst [vmem:[%s225 + $0xd8] sm:$0xff] %v280
        %v282 = vld [vmem:[%s224 + $0xe0] sm:$0xff]
        %283 = vst [vmem:[%s225 + $0xe0] sm:$0xff] %v282
        %v284 = vld [vmem:[%s224 + $0xe8] sm:$0xff]
        %285 = vst [vmem:[%s225 + $0xe8] sm:$0xff] %v284
        %v286 = vld [vmem:[%s224 + $0xf0] sm:$0xff]
        %287 = vst [vmem:[%s225 + $0xf0] sm:$0xff] %v286
        %v288 = vld [vmem:[%s224 + $0xf8] sm:$0xff]
        %289 = vst [vmem:[%s225 + $0xf8] sm:$0xff] %v288
        %v290 = vld [vmem:[%s224 + $0x100] sm:$0xff]
        %291 = vst [vmem:[%s225 + $0x100] sm:$0xff] %v290
        %v292 = vld [vmem:[%s224 + $0x108] sm:$0xff]
        %293 = vst [vmem:[%s225 + $0x108] sm:$0xff] %v292
        %v294 = vld [vmem:[%s224 + $0x110] sm:$0xff]
        %295 = vst [vmem:[%s225 + $0x110] sm:$0xff] %v294
        %v296 = vld [vmem:[%s224 + $0x118] sm:$0xff]
        %297 = vst [vmem:[%s225 + $0x118] sm:$0xff] %v296
        %v298 = vld [vmem:[%s224 + $0x120] sm:$0xff]
        %299 = vst [vmem:[%s225 + $0x120] sm:$0xff] %v298
        %v300 = vld [vmem:[%s224 + $0x128] sm:$0xff]
        %301 = vst [vmem:[%s225 + $0x128] sm:$0xff] %v300
        %v302 = vld [vmem:[%s224 + $0x130] sm:$0xff]
        %303 = vst [vmem:[%s225 + $0x130] sm:$0xff] %v302
        %v304 = vld [vmem:[%s224 + $0x138] sm:$0xff]
        %305 = vst [vmem:[%s225 + $0x138] sm:$0xff] %v304
        %v306 = vld [vmem:[%s224 + $0x140] sm:$0xff]
        %307 = vst [vmem:[%s225 + $0x140] sm:$0xff] %v306
        %v308 = vld [vmem:[%s224 + $0x148] sm:$0xff]
        %309 = vst [vmem:[%s225 + $0x148] sm:$0xff] %v308
        %v310 = vld [vmem:[%s224 + $0x150] sm:$0xff]
        %311 = vst [vmem:[%s225 + $0x150] sm:$0xff] %v310
        %v312 = vld [vmem:[%s224 + $0x158] sm:$0xff]
        %313 = vst [vmem:[%s225 + $0x158] sm:$0xff] %v312
        %v314 = vld [vmem:[%s224 + $0x160] sm:$0xff]
        %315 = vst [vmem:[%s225 + $0x160] sm:$0xff] %v314
        %v316 = vld [vmem:[%s224 + $0x168] sm:$0xff]
        %317 = vst [vmem:[%s225 + $0x168] sm:$0xff] %v316
        %v318 = vld [vmem:[%s224 + $0x170] sm:$0xff]
        %319 = vst [vmem:[%s225 + $0x170] sm:$0xff] %v318
        %v320 = vld [vmem:[%s224 + $0x178] sm:$0xff]
        %321 = vst [vmem:[%s225 + $0x178] sm:$0xff] %v320
        %v322 = vld [vmem:[%s224 + $0x180] sm:$0xff]
        %323 = vst [vmem:[%s225 + $0x180] sm:$0xff] %v322
        %v324 = vld [vmem:[%s224 + $0x188] sm:$0xff]
        %325 = vst [vmem:[%s225 + $0x188] sm:$0xff] %v324
        %v326 = vld [vmem:[%s224 + $0x190] sm:$0xff]
        %327 = vst [vmem:[%s225 + $0x190] sm:$0xff] %v326
        %v328 = vld [vmem:[%s224 + $0x198] sm:$0xff]
        %329 = vst [vmem:[%s225 + $0x198] sm:$0xff] %v328
        %v330 = vld [vmem:[%s224 + $0x1a0] sm:$0xff]
        %331 = vst [vmem:[%s225 + $0x1a0] sm:$0xff] %v330
        %v332 = vld [vmem:[%s224 + $0x1a8] sm:$0xff]
        %333 = vst [vmem:[%s225 + $0x1a8] sm:$0xff] %v332
        %v334 = vld [vmem:[%s224 + $0x1b0] sm:$0xff]
        %335 = vst [vmem:[%s225 + $0x1b0] sm:$0xff] %v334
        %v336 = vld [vmem:[%s224 + $0x1b8] sm:$0xff]
        %337 = vst [vmem:[%s225 + $0x1b8] sm:$0xff] %v336
        %v338 = vld [vmem:[%s224 + $0x1c0] sm:$0xff]
        %339 = vst [vmem:[%s225 + $0x1c0] sm:$0xff] %v338
        %v340 = vld [vmem:[%s224 + $0x1c8] sm:$0xff]
        %341 = vst [vmem:[%s225 + $0x1c8] sm:$0xff] %v340
        %v342 = vld [vmem:[%s224 + $0x1d0] sm:$0xff]
        %343 = vst [vmem:[%s225 + $0x1d0] sm:$0xff] %v342
        %v344 = vld [vmem:[%s224 + $0x1d8] sm:$0xff]
        %345 = vst [vmem:[%s225 + $0x1d8] sm:$0xff] %v344
        %v346 = vld [vmem:[%s224 + $0x1e0] sm:$0xff]
        %347 = vst [vmem:[%s225 + $0x1e0] sm:$0xff] %v346
        %v348 = vld [vmem:[%s224 + $0x1e8] sm:$0xff]
        %349 = vst [vmem:[%s225 + $0x1e8] sm:$0xff] %v348
        %v350 = vld [vmem:[%s224 + $0x1f0] sm:$0xff]
        %351 = vst [vmem:[%s225 + $0x1f0] sm:$0xff] %v350
        %v352 = vld [vmem:[%s224 + $0x1f8] sm:$0xff]
        %353 = vst [vmem:[%s225 + $0x1f8] sm:$0xff] %v352
        %v354 = vld [vmem:[%s224 + $0x200] sm:$0xff]
        %355 = vst [vmem:[%s225 + $0x200] sm:$0xff] %v354
        %v356 = vld [vmem:[%s224 + $0x208] sm:$0xff]
        %357 = vst [vmem:[%s225 + $0x208] sm:$0xff] %v356
        %v358 = vld [vmem:[%s224 + $0x210] sm:$0xff]
        %359 = vst [vmem:[%s225 + $0x210] sm:$0xff] %v358
        %v360 = vld [vmem:[%s224 + $0x218] sm:$0xff]
        %361 = vst [vmem:[%s225 + $0x218] sm:$0xff] %v360
        %v362 = vld [vmem:[%s224 + $0x220] sm:$0xff]
        %363 = vst [vmem:[%s225 + $0x220] sm:$0xff] %v362
        %v364 = vld [vmem:[%s224 + $0x228] sm:$0xff]
        %365 = vst [vmem:[%s225 + $0x228] sm:$0xff] %v364
        %v366 = vld [vmem:[%s224 + $0x230] sm:$0xff]
        %367 = vst [vmem:[%s225 + $0x230] sm:$0xff] %v366
        %v368 = vld [vmem:[%s224 + $0x238] sm:$0xff]
        %369 = vst [vmem:[%s225 + $0x238] sm:$0xff] %v368
        %v370 = vld [vmem:[%s224 + $0x240] sm:$0xff]
        %371 = vst [vmem:[%s225 + $0x240] sm:$0xff] %v370
        %v372 = vld [vmem:[%s224 + $0x248] sm:$0xff]
        %373 = vst [vmem:[%s225 + $0x248] sm:$0xff] %v372
        %v374 = vld [vmem:[%s224 + $0x250] sm:$0xff]
        %375 = vst [vmem:[%s225 + $0x250] sm:$0xff] %v374
        %v376 = vld [vmem:[%s224 + $0x258] sm:$0xff]
        %377 = vst [vmem:[%s225 + $0x258] sm:$0xff] %v376
        %v378 = vld [vmem:[%s224 + $0x260] sm:$0xff]
        %379 = vst [vmem:[%s225 + $0x260] sm:$0xff] %v378
        %v380 = vld [vmem:[%s224 + $0x268] sm:$0xff]
        %381 = vst [vmem:[%s225 + $0x268] sm:$0xff] %v380
        %v382 = vld [vmem:[%s224 + $0x270] sm:$0xff]
        %383 = vst [vmem:[%s225 + $0x270] sm:$0xff] %v382
        %v384 = vld [vmem:[%s224 + $0x278] sm:$0xff]
        %385 = vst [vmem:[%s225 + $0x278] sm:$0xff] %v384
        %v386 = vld [vmem:[%s224 + $0x280] sm:$0xff]
        %387 = vst [vmem:[%s225 + $0x280] sm:$0xff] %v386
        %v388 = vld [vmem:[%s224 + $0x288] sm:$0xff]
        %389 = vst [vmem:[%s225 + $0x288] sm:$0xff] %v388
        %v390 = vld [vmem:[%s224 + $0x290] sm:$0xff]
        %391 = vst [vmem:[%s225 + $0x290] sm:$0xff] %v390
        %v392 = vld [vmem:[%s224 + $0x298] sm:$0xff]
        %393 = vst [vmem:[%s225 + $0x298] sm:$0xff] %v392
        %v394 = vld [vmem:[%s224 + $0x2a0] sm:$0xff]
        %395 = vst [vmem:[%s225 + $0x2a0] sm:$0xff] %v394
        %v396 = vld [vmem:[%s224 + $0x2a8] sm:$0xff]
        %397 = vst [vmem:[%s225 + $0x2a8] sm:$0xff] %v396
        %v398 = vld [vmem:[%s224 + $0x2b0] sm:$0xff]
        %399 = vst [vmem:[%s225 + $0x2b0] sm:$0xff] %v398
        %v400 = vld [vmem:[%s224 + $0x2b8] sm:$0xff]
        %401 = vst [vmem:[%s225 + $0x2b8] sm:$0xff] %v400
        %v402 = vld [vmem:[%s224 + $0x2c0] sm:$0xff]
        %403 = vst [vmem:[%s225 + $0x2c0] sm:$0xff] %v402
        %v404 = vld [vmem:[%s224 + $0x2c8] sm:$0xff]
        %405 = vst [vmem:[%s225 + $0x2c8] sm:$0xff] %v404
        %v406 = vld [vmem:[%s224 + $0x2d0] sm:$0xff]
        %407 = vst [vmem:[%s225 + $0x2d0] sm:$0xff] %v406
        %v408 = vld [vmem:[%s224 + $0x2d8] sm:$0xff]
        %409 = vst [vmem:[%s225 + $0x2d8] sm:$0xff] %v408
        %v410 = vld [vmem:[%s224 + $0x2e0] sm:$0xff]
        %411 = vst [vmem:[%s225 + $0x2e0] sm:$0xff] %v410
        %v412 = vld [vmem:[%s224 + $0x2e8] sm:$0xff]
        %413 = vst [vmem:[%s225 + $0x2e8] sm:$0xff] %v412
        %v414 = vld [vmem:[%s224 + $0x2f0] sm:$0xff]
        %415 = vst [vmem:[%s225 + $0x2f0] sm:$0xff] %v414
        %v416 = vld [vmem:[%s224 + $0x2f8] sm:$0xff]
        %417 = vst [vmem:[%s225 + $0x2f8] sm:$0xff] %v416
        %v418 = vld [vmem:[%s224 + $0x300] sm:$0xff]
        %419 = vst [vmem:[%s225 + $0x300] sm:$0xff] %v418
        %v420 = vld [vmem:[%s224 + $0x308] sm:$0xff]
        %421 = vst [vmem:[%s225 + $0x308] sm:$0xff] %v420
        %v422 = vld [vmem:[%s224 + $0x310] sm:$0xff]
        %423 = vst [vmem:[%s225 + $0x310] sm:$0xff] %v422
        %v424 = vld [vmem:[%s224 + $0x318] sm:$0xff]
        %425 = vst [vmem:[%s225 + $0x318] sm:$0xff] %v424
        %v426 = vld [vmem:[%s224 + $0x320] sm:$0xff]
        %427 = vst [vmem:[%s225 + $0x320] sm:$0xff] %v426
        %v428 = vld [vmem:[%s224 + $0x328] sm:$0xff]
        %429 = vst [vmem:[%s225 + $0x328] sm:$0xff] %v428
        %v430 = vld [vmem:[%s224 + $0x330] sm:$0xff]
        %431 = vst [vmem:[%s225 + $0x330] sm:$0xff] %v430
        %v432 = vld [vmem:[%s224 + $0x338] sm:$0xff]
        %433 = vst [vmem:[%s225 + $0x338] sm:$0xff] %v432
        %v434 = vld [vmem:[%s224 + $0x340] sm:$0xff]
        %435 = vst [vmem:[%s225 + $0x340] sm:$0xff] %v434
        %v436 = vld [vmem:[%s224 + $0x348] sm:$0xff]
        %437 = vst [vmem:[%s225 + $0x348] sm:$0xff] %v436
        %v438 = vld [vmem:[%s224 + $0x350] sm:$0xff]
        %439 = vst [vmem:[%s225 + $0x350] sm:$0xff] %v438
        %v440 = vld [vmem:[%s224 + $0x358] sm:$0xff]
        %441 = vst [vmem:[%s225 + $0x358] sm:$0xff] %v440
        %v442 = vld [vmem:[%s224 + $0x360] sm:$0xff]
        %443 = vst [vmem:[%s225 + $0x360] sm:$0xff] %v442
        %v444 = vld [vmem:[%s224 + $0x368] sm:$0xff]
        %445 = vst [vmem:[%s225 + $0x368] sm:$0xff] %v444
        %v446 = vld [vmem:[%s224 + $0x370] sm:$0xff]
        %447 = vst [vmem:[%s225 + $0x370] sm:$0xff] %v446
        %v448 = vld [vmem:[%s224 + $0x378] sm:$0xff]
        %449 = vst [vmem:[%s225 + $0x378] sm:$0xff] %v448
        %v450 = vld [vmem:[%s224 + $0x380] sm:$0xff]
        %451 = vst [vmem:[%s225 + $0x380] sm:$0xff] %v450
        %v452 = vld [vmem:[%s224 + $0x388] sm:$0xff]
        %453 = vst [vmem:[%s225 + $0x388] sm:$0xff] %v452
        %v454 = vld [vmem:[%s224 + $0x390] sm:$0xff]
        %455 = vst [vmem:[%s225 + $0x390] sm:$0xff] %v454
        %v456 = vld [vmem:[%s224 + $0x398] sm:$0xff]
        %457 = vst [vmem:[%s225 + $0x398] sm:$0xff] %v456
        %v458 = vld [vmem:[%s224 + $0x3a0] sm:$0xff]
        %459 = vst [vmem:[%s225 + $0x3a0] sm:$0xff] %v458
        %v460 = vld [vmem:[%s224 + $0x3a8] sm:$0xff]
        %461 = vst [vmem:[%s225 + $0x3a8] sm:$0xff] %v460
        %v462 = vld [vmem:[%s224 + $0x3b0] sm:$0xff]
        %463 = vst [vmem:[%s225 + $0x3b0] sm:$0xff] %v462
        %v464 = vld [vmem:[%s224 + $0x3b8] sm:$0xff]
        %465 = vst [vmem:[%s225 + $0x3b8] sm:$0xff] %v464
        %v466 = vld [vmem:[%s224 + $0x3c0] sm:$0xff]
        %467 = vst [vmem:[%s225 + $0x3c0] sm:$0xff] %v466
        %v468 = vld [vmem:[%s224 + $0x3c8] sm:$0xff]
        %469 = vst [vmem:[%s225 + $0x3c8] sm:$0xff] %v468
        %v470 = vld [vmem:[%s224 + $0x3d0] sm:$0xff]
        %471 = vst [vmem:[%s225 + $0x3d0] sm:$0xff] %v470
        %v472 = vld [vmem:[%s224 + $0x3d8] sm:$0xff]
        %473 = vst [vmem:[%s225 + $0x3d8] sm:$0xff] %v472
        %v474 = vld [vmem:[%s224 + $0x3e0] sm:$0xff]
        %475 = vst [vmem:[%s225 + $0x3e0] sm:$0xff] %v474
        %v476 = vld [vmem:[%s224 + $0x3e8] sm:$0xff]
        %477 = vst [vmem:[%s225 + $0x3e8] sm:$0xff] %v476
        %v478 = vld [vmem:[%s224 + $0x3f0] sm:$0xff]
        %479 = vst [vmem:[%s225 + $0x3f0] sm:$0xff] %v478
        %v480 = vld [vmem:[%s224 + $0x3f8] sm:$0xff]
        %481 = vst [vmem:[%s225 + $0x3f8] sm:$0xff] %v480
      $region123: #{encoder_forward.1} parent=117 // loop_footer
        %s223 = sadd.s32 1, %s219
      $region124: #{encoder_forward.1} parent=117 // loop_footer_branch
        %218 = sbr.rel target = $region120
      $region125: #{encoder_forward.1} parent=117 // loop_exit
        _
    $region118: #{encoder_forward.1} parent=102 // pred_fallthru
      _
    %p482 = pneg %p214
    // Predicated region
    $region126: #{encoder_forward.1} parent=102 // pred_check
      _
    $region127: #{encoder_forward.1} parent=102 // pred_check_branch
      %484 = sbr.rel (%p214) target = $region129
    $region128: #{encoder_forward.1} parent=102 // pred_region
      %s485 = sand.u32 1024, 7
    $region129: #{encoder_forward.1} parent=102 // pred_fallthru
      _
  $region103: #{encoder_forward.1} parent=0 // pred_fallthru
    _
  // Predicated region
  $region104: #{encoder_forward.1} parent=0 // pred_check
    %p198 = pneg %p194
  $region105: #{encoder_forward.1} parent=0 // pred_check_branch
    %200 = sbr.rel (%p198) target = $region107
  $region106: #{encoder_forward.1} parent=0 // pred_region
    %s201 = sshll.u32 1, 1024
    %s202 = ssub.s32 %s201, 1
    loop: start=0, step=1, limit=1
    $region108: #{encoder_forward.1} parent=106 // loop_pre_header
      _
    $region109: #{encoder_forward.1} parent=106 // loop_header
      %s204 = sphi 0, %s208
      %p205 = scmp.ge.s32.totalorder %s204, 1
      %s209 = sphi %s16, %s16
      %s210 = sphi [#allocation8], [#allocation8]
    $region110: #{encoder_forward.1} parent=106 // loop_header_branch
      %207 = sbr.rel (%p205) target = $region114
    $region111: #{encoder_forward.1} parent=106 // loop_body
      %v211 = vld [vmem:[%s209] sm:%s202]
      %212 = vst [vmem:[%s210] sm:%s202] %v211
    $region112: #{encoder_forward.1} parent=106 // loop_footer
      %s208 = sadd.s32 1, %s204
    $region113: #{encoder_forward.1} parent=106 // loop_footer_branch
      %203 = sbr.rel target = $region109
    $region114: #{encoder_forward.1} parent=106 // loop_exit
      _
  $region107: #{encoder_forward.1} parent=0 // pred_fallthru
    _
  // Predicated region
  $region130: #{encoder_forward.1} parent=0 // pred_check
    _
  $region131: #{encoder_forward.1} parent=0 // pred_check_branch
    %488 = sbr.rel (0) target = $region133
  $region132: #{encoder_forward.1} parent=0 // pred_region
    %489 = vsyncadd %s192, 16384
  $region133: #{encoder_forward.1} parent=0 // pred_fallthru
    _
  %v490 = vld [vmem:[%s0] ss:$2 sm:$0xff]
  %s491 = scalar_lea.vmem %s0, 16
  %v492 = vld [vmem:[%s491] ss:$2 sm:$0xff]
  %s493 = scalar_lea.vmem %s0, 32
  %v494 = vld [vmem:[%s493] ss:$2 sm:$0xff]
  %s495 = scalar_lea.vmem %s0, 48
  %v496 = vld [vmem:[%s495] ss:$2 sm:$0xff]
  %s497 = scalar_lea.vmem %s0, 64
  %v498 = vld [vmem:[%s497] ss:$2 sm:$0xff]
  %s499 = scalar_lea.vmem %s0, 80
  %v500 = vld [vmem:[%s499] ss:$2 sm:$0xff]
  %s501 = scalar_lea.vmem %s0, 96
  %v502 = vld [vmem:[%s501] ss:$2 sm:$0xff]
  %s503 = scalar_lea.vmem %s0, 112
  %v504 = vld [vmem:[%s503] ss:$2 sm:$0xff]
  %s505 = scalar_lea.vmem %s0, 128
  %v506 = vld [vmem:[%s505] ss:$2 sm:$0xff]
  %s507 = scalar_lea.vmem %s0, 144
  %v508 = vld [vmem:[%s507] ss:$2 sm:$0xff]
  %s509 = scalar_lea.vmem %s0, 160
  %v510 = vld [vmem:[%s509] ss:$2 sm:$0xff]
  %s511 = scalar_lea.vmem %s0, 176
  %v512 = vld [vmem:[%s511] ss:$2 sm:$0xff]
  %s513 = scalar_lea.vmem %s0, 192
  %v514 = vld [vmem:[%s513] ss:$2 sm:$0xff]
  %s515 = scalar_lea.vmem %s0, 208
  %v516 = vld [vmem:[%s515] ss:$2 sm:$0xff]
  %s517 = scalar_lea.vmem %s0, 224
  %v518 = vld [vmem:[%s517] ss:$2 sm:$0xff]
  %s519 = scalar_lea.vmem %s0, 240
  %v520 = vld [vmem:[%s519] ss:$2 sm:$0xff]
  %s521 = scalar_lea.vmem %s0, 1
  %v522 = vld [vmem:[%s521] ss:$2 sm:$0xff]
  %s523 = scalar_lea.vmem %s0, 17
  %v524 = vld [vmem:[%s523] ss:$2 sm:$0xff]
  %s525 = scalar_lea.vmem %s0, 33
  %v526 = vld [vmem:[%s525] ss:$2 sm:$0xff]
  %s527 = scalar_lea.vmem %s0, 49
  %v528 = vld [vmem:[%s527] ss:$2 sm:$0xff]
  %s529 = scalar_lea.vmem %s0, 65
  %v530 = vld [vmem:[%s529] ss:$2 sm:$0xff]
  %s531 = scalar_lea.vmem %s0, 81
  %v532 = vld [vmem:[%s531] ss:$2 sm:$0xff]
  %s533 = scalar_lea.vmem %s0, 97
  %v534 = vld [vmem:[%s533] ss:$2 sm:$0xff]
  %s535 = scalar_lea.vmem %s0, 113
  %v536 = vld [vmem:[%s535] ss:$2 sm:$0xff]
  %s537 = scalar_lea.vmem %s0, 129
  %v538 = vld [vmem:[%s537] ss:$2 sm:$0xff]
  %s539 = scalar_lea.vmem %s0, 145
  %v540 = vld [vmem:[%s539] ss:$2 sm:$0xff]
  %s541 = scalar_lea.vmem %s0, 161
  %v542 = vld [vmem:[%s541] ss:$2 sm:$0xff]
  %s543 = scalar_lea.vmem %s0, 177
  %v544 = vld [vmem:[%s543] ss:$2 sm:$0xff]
  %s545 = scalar_lea.vmem %s0, 193
  %v546 = vld [vmem:[%s545] ss:$2 sm:$0xff]
  %s547 = scalar_lea.vmem %s0, 209
  %v548 = vld [vmem:[%s547] ss:$2 sm:$0xff]
  %s549 = scalar_lea.vmem %s0, 225
  %v550 = vld [vmem:[%s549] ss:$2 sm:$0xff]
  %s551 = scalar_lea.vmem %s0, 241
  %v552 = vld [vmem:[%s551] ss:$2 sm:$0xff]
  %v554 = vrot.slane %v552, 7
  %vm571 = vcmask 1040384
  %v572 = vrot.slane %v522, 7
  %v573 = vrot.slane %v524, 7
  %v574 = vsel %vm571, %v572, %v573
  %v575 = vrot.slane %v526, 7
  %v576 = vsel %vm571, %v573, %v575
  %v577 = vrot.slane %v528, 7
  %v578 = vsel %vm571, %v575, %v577
  %v579 = vrot.slane %v530, 7
  %v580 = vsel %vm571, %v577, %v579
  %v581 = vrot.slane %v532, 7
  %v582 = vsel %vm571, %v579, %v581
  %v583 = vrot.slane %v534, 7
  %v584 = vsel %vm571, %v581, %v583
  %v585 = vrot.slane %v536, 7
  %v586 = vsel %vm571, %v583, %v585
  %v587 = vrot.slane %v538, 7
  %v588 = vsel %vm571, %v585, %v587
  %v589 = vrot.slane %v540, 7
  %v590 = vsel %vm571, %v587, %v589
  %v591 = vrot.slane %v542, 7
  %v592 = vsel %vm571, %v589, %v591
  %v593 = vrot.slane %v544, 7
  %v594 = vsel %vm571, %v591, %v593
  %v595 = vrot.slane %v546, 7
  %v596 = vsel %vm571, %v593, %v595
  %v597 = vrot.slane %v548, 7
  %v598 = vsel %vm571, %v595, %v597
  %v599 = vrot.slane %v550, 7
  %v600 = vsel %vm571, %v597, %v599
  %v601 = vsel %vm571, %v599, %v554
  %v603 = vsel %vm571, %v554, %v572
  %v604 = vld [vmem:[%s1] sm:$0x7]
  %606 = vset.pattern.permute.xlu0 0
  %607 = vperm.xlu0 %606, %v603
  %v608 = vpop.permute.xlu0 %607
  %610 = vset.pattern.permute.xlu0 0
  %611 = vperm.xlu0 %610, %v574
  %v612 = vpop.permute.xlu0 %611
  %614 = vset.pattern.permute.xlu0 0
  %615 = vperm.xlu0 %614, %v576
  %v616 = vpop.permute.xlu0 %615
  %618 = vset.pattern.permute.xlu0 0
  %619 = vperm.xlu0 %618, %v578
  %v620 = vpop.permute.xlu0 %619
  %622 = vset.pattern.permute.xlu0 0
  %623 = vperm.xlu0 %622, %v580
  %v624 = vpop.permute.xlu0 %623
  %626 = vset.pattern.permute.xlu0 0
  %627 = vperm.xlu0 %626, %v582
  %v628 = vpop.permute.xlu0 %627
  %630 = vset.pattern.permute.xlu0 0
  %631 = vperm.xlu0 %630, %v584
  %v632 = vpop.permute.xlu0 %631
  %634 = vset.pattern.permute.xlu0 0
  %635 = vperm.xlu0 %634, %v586
  %v636 = vpop.permute.xlu0 %635
  %638 = vset.pattern.permute.xlu0 0
  %639 = vperm.xlu0 %638, %v588
  %v640 = vpop.permute.xlu0 %639
  %642 = vset.pattern.permute.xlu0 0
  %643 = vperm.xlu0 %642, %v590
  %v644 = vpop.permute.xlu0 %643
  %646 = vset.pattern.permute.xlu0 0
  %647 = vperm.xlu0 %646, %v592
  %v648 = vpop.permute.xlu0 %647
  %650 = vset.pattern.permute.xlu0 0
  %651 = vperm.xlu0 %650, %v594
  %v652 = vpop.permute.xlu0 %651
  %654 = vset.pattern.permute.xlu0 0
  %655 = vperm.xlu0 %654, %v596
  %v656 = vpop.permute.xlu0 %655
  %658 = vset.pattern.permute.xlu0 0
  %659 = vperm.xlu0 %658, %v598
  %v660 = vpop.permute.xlu0 %659
  %662 = vset.pattern.permute.xlu0 0
  %663 = vperm.xlu0 %662, %v600
  %v664 = vpop.permute.xlu0 %663
  %666 = vset.pattern.permute.xlu0 0
  %667 = vperm.xlu0 %666, %v601
  %v668 = vpop.permute.xlu0 %667
  %v670 = vlaneseq
  %v671 = vshrl.u32 %v670, 7
  %v672 = vsub.s32 0, %v671
  %v673 = vrot.slane %v604, %v672
  %v674 = vmul.f32 %v608, %v673
  %v675 = vmul.f32 %v612, %v673
  %v676 = vmul.f32 %v616, %v673
  %v677 = vmul.f32 %v620, %v673
  %v678 = vmul.f32 %v624, %v673
  %v679 = vmul.f32 %v628, %v673
  %v680 = vmul.f32 %v632, %v673
  %v681 = vmul.f32 %v636, %v673
  %v682 = vmul.f32 %v640, %v673
  %v683 = vmul.f32 %v644, %v673
  %v684 = vmul.f32 %v648, %v673
  %v685 = vmul.f32 %v652, %v673
  %v686 = vmul.f32 %v656, %v673
  %v687 = vmul.f32 %v660, %v673
  %v688 = vmul.f32 %v664, %v673
  %v689 = vmul.f32 %v668, %v673
  %691 = vset.pattern.permute.xlu0 0
  %692 = vperm.xlu0 %691, %v490
  %v693 = vpop.permute.xlu0 %692
  %696 = vset.pattern.permute.xlu0 0
  %697 = vperm.xlu0 %696, %v492
  %v698 = vpop.permute.xlu0 %697
  %701 = vset.pattern.permute.xlu0 0
  %702 = vperm.xlu0 %701, %v494
  %v703 = vpop.permute.xlu0 %702
  %706 = vset.pattern.permute.xlu0 0
  %707 = vperm.xlu0 %706, %v496
  %v708 = vpop.permute.xlu0 %707
  %711 = vset.pattern.permute.xlu0 0
  %712 = vperm.xlu0 %711, %v498
  %v713 = vpop.permute.xlu0 %712
  %716 = vset.pattern.permute.xlu0 0
  %717 = vperm.xlu0 %716, %v500
  %v718 = vpop.permute.xlu0 %717
  %721 = vset.pattern.permute.xlu0 0
  %722 = vperm.xlu0 %721, %v502
  %v723 = vpop.permute.xlu0 %722
  %726 = vset.pattern.permute.xlu0 0
  %727 = vperm.xlu0 %726, %v504
  %v728 = vpop.permute.xlu0 %727
  %731 = vset.pattern.permute.xlu0 0
  %732 = vperm.xlu0 %731, %v506
  %v733 = vpop.permute.xlu0 %732
  %736 = vset.pattern.permute.xlu0 0
  %737 = vperm.xlu0 %736, %v508
  %v738 = vpop.permute.xlu0 %737
  %741 = vset.pattern.permute.xlu0 0
  %742 = vperm.xlu0 %741, %v510
  %v743 = vpop.permute.xlu0 %742
  %746 = vset.pattern.permute.xlu0 0
  %747 = vperm.xlu0 %746, %v512
  %v748 = vpop.permute.xlu0 %747
  %751 = vset.pattern.permute.xlu0 0
  %752 = vperm.xlu0 %751, %v514
  %v753 = vpop.permute.xlu0 %752
  %756 = vset.pattern.permute.xlu0 0
  %757 = vperm.xlu0 %756, %v516
  %v758 = vpop.permute.xlu0 %757
  %761 = vset.pattern.permute.xlu0 0
  %762 = vperm.xlu0 %761, %v518
  %v763 = vpop.permute.xlu0 %762
  %766 = vset.pattern.permute.xlu0 0
  %767 = vperm.xlu0 %766, %v520
  %v768 = vpop.permute.xlu0 %767
  %v770 = vlaneseq
  %v771 = vshrl.u32 %v770, 7
  %v772 = vsub.s32 1, %v771
  %v773 = vrot.slane %v604, %v772
  %v774 = vmul.f32 %v693, %v773
  %v775 = vmul.f32 %v698, %v773
  %v776 = vmul.f32 %v703, %v773
  %v777 = vmul.f32 %v708, %v773
  %v778 = vmul.f32 %v713, %v773
  %v779 = vmul.f32 %v718, %v773
  %v780 = vmul.f32 %v723, %v773
  %v781 = vmul.f32 %v728, %v773
  %v782 = vmul.f32 %v733, %v773
  %v783 = vmul.f32 %v738, %v773
  %v784 = vmul.f32 %v743, %v773
  %v785 = vmul.f32 %v748, %v773
  %v786 = vmul.f32 %v753, %v773
  %v787 = vmul.f32 %v758, %v773
  %v788 = vmul.f32 %v763, %v773
  %v789 = vmul.f32 %v768, %v773
  %v790 = vadd.f32 %v674, %v774
  %v791 = vadd.f32 %v675, %v775
  %v792 = vadd.f32 %v676, %v776
  %v793 = vadd.f32 %v677, %v777
  %v794 = vadd.f32 %v678, %v778
  %v795 = vadd.f32 %v679, %v779
  %v796 = vadd.f32 %v680, %v780
  %v797 = vadd.f32 %v681, %v781
  %v798 = vadd.f32 %v682, %v782
  %v799 = vadd.f32 %v683, %v783
  %v800 = vadd.f32 %v684, %v784
  %v801 = vadd.f32 %v685, %v785
  %v802 = vadd.f32 %v686, %v786
  %v803 = vadd.f32 %v687, %v787
  %v804 = vadd.f32 %v688, %v788
  %v805 = vadd.f32 %v689, %v789
  %806 = vset.pattern.permute.xlu0 0
  %807 = vperm.xlu0 %806, %v522
  %v808 = vpop.permute.xlu0 %807
  %810 = vset.pattern.permute.xlu0 0
  %811 = vperm.xlu0 %810, %v524
  %v812 = vpop.permute.xlu0 %811
  %814 = vset.pattern.permute.xlu0 0
  %815 = vperm.xlu0 %814, %v526
  %v816 = vpop.permute.xlu0 %815
  %818 = vset.pattern.permute.xlu0 0
  %819 = vperm.xlu0 %818, %v528
  %v820 = vpop.permute.xlu0 %819
  %822 = vset.pattern.permute.xlu0 0
  %823 = vperm.xlu0 %822, %v530
  %v824 = vpop.permute.xlu0 %823
  %826 = vset.pattern.permute.xlu0 0
  %827 = vperm.xlu0 %826, %v532
  %v828 = vpop.permute.xlu0 %827
  %830 = vset.pattern.permute.xlu0 0
  %831 = vperm.xlu0 %830, %v534
  %v832 = vpop.permute.xlu0 %831
  %834 = vset.pattern.permute.xlu0 0
  %835 = vperm.xlu0 %834, %v536
  %v836 = vpop.permute.xlu0 %835
  %838 = vset.pattern.permute.xlu0 0
  %839 = vperm.xlu0 %838, %v538
  %v840 = vpop.permute.xlu0 %839
  %842 = vset.pattern.permute.xlu0 0
  %843 = vperm.xlu0 %842, %v540
  %v844 = vpop.permute.xlu0 %843
  %846 = vset.pattern.permute.xlu0 0
  %847 = vperm.xlu0 %846, %v542
  %v848 = vpop.permute.xlu0 %847
  %850 = vset.pattern.permute.xlu0 0
  %851 = vperm.xlu0 %850, %v544
  %v852 = vpop.permute.xlu0 %851
  %854 = vset.pattern.permute.xlu0 0
  %855 = vperm.xlu0 %854, %v546
  %v856 = vpop.permute.xlu0 %855
  %858 = vset.pattern.permute.xlu0 0
  %859 = vperm.xlu0 %858, %v548
  %v860 = vpop.permute.xlu0 %859
  %862 = vset.pattern.permute.xlu0 0
  %863 = vperm.xlu0 %862, %v550
  %v864 = vpop.permute.xlu0 %863
  %866 = vset.pattern.permute.xlu0 0
  %867 = vperm.xlu0 %866, %v552
  %v868 = vpop.permute.xlu0 %867
  %v870 = vlaneseq
  %v871 = vshrl.u32 %v870, 7
  %v872 = vsub.s32 2, %v871
  %v873 = vrot.slane %v604, %v872
  %v874 = vmul.f32 %v808, %v873
  %v875 = vmul.f32 %v812, %v873
  %v876 = vmul.f32 %v816, %v873
  %v877 = vmul.f32 %v820, %v873
  %v878 = vmul.f32 %v824, %v873
  %v879 = vmul.f32 %v828, %v873
  %v880 = vmul.f32 %v832, %v873
  %v881 = vmul.f32 %v836, %v873
  %v882 = vmul.f32 %v840, %v873
  %v883 = vmul.f32 %v844, %v873
  %v884 = vmul.f32 %v848, %v873
  %v885 = vmul.f32 %v852, %v873
  %v886 = vmul.f32 %v856, %v873
  %v887 = vmul.f32 %v860, %v873
  %v888 = vmul.f32 %v864, %v873
  %v889 = vmul.f32 %v868, %v873
  %v890 = vadd.f32 %v790, %v874
  %v891 = vadd.f32 %v791, %v875
  %v892 = vadd.f32 %v792, %v876
  %v893 = vadd.f32 %v793, %v877
  %v894 = vadd.f32 %v794, %v878
  %v895 = vadd.f32 %v795, %v879
  %v896 = vadd.f32 %v796, %v880
  %v897 = vadd.f32 %v797, %v881
  %v898 = vadd.f32 %v798, %v882
  %v899 = vadd.f32 %v799, %v883
  %v900 = vadd.f32 %v800, %v884
  %v901 = vadd.f32 %v801, %v885
  %v902 = vadd.f32 %v802, %v886
  %v903 = vadd.f32 %v803, %v887
  %v904 = vadd.f32 %v804, %v888
  %v905 = vadd.f32 %v805, %v889
  %906 = vset.pattern.permute.xlu0 1
  %907 = vperm.xlu0 %906, %v603
  %v908 = vpop.permute.xlu0 %907
  %910 = vset.pattern.permute.xlu0 1
  %911 = vperm.xlu0 %910, %v574
  %v912 = vpop.permute.xlu0 %911
  %914 = vset.pattern.permute.xlu0 1
  %915 = vperm.xlu0 %914, %v576
  %v916 = vpop.permute.xlu0 %915
  %918 = vset.pattern.permute.xlu0 1
  %919 = vperm.xlu0 %918, %v578
  %v920 = vpop.permute.xlu0 %919
  %922 = vset.pattern.permute.xlu0 1
  %923 = vperm.xlu0 %922, %v580
  %v924 = vpop.permute.xlu0 %923
  %926 = vset.pattern.permute.xlu0 1
  %927 = vperm.xlu0 %926, %v582
  %v928 = vpop.permute.xlu0 %927
  %930 = vset.pattern.permute.xlu0 1
  %931 = vperm.xlu0 %930, %v584
  %v932 = vpop.permute.xlu0 %931
  %934 = vset.pattern.permute.xlu0 1
  %935 = vperm.xlu0 %934, %v586
  %v936 = vpop.permute.xlu0 %935
  %938 = vset.pattern.permute.xlu0 1
  %939 = vperm.xlu0 %938, %v588
  %v940 = vpop.permute.xlu0 %939
  %942 = vset.pattern.permute.xlu0 1
  %943 = vperm.xlu0 %942, %v590
  %v944 = vpop.permute.xlu0 %943
  %946 = vset.pattern.permute.xlu0 1
  %947 = vperm.xlu0 %946, %v592
  %v948 = vpop.permute.xlu0 %947
  %950 = vset.pattern.permute.xlu0 1
  %951 = vperm.xlu0 %950, %v594
  %v952 = vpop.permute.xlu0 %951
  %954 = vset.pattern.permute.xlu0 1
  %955 = vperm.xlu0 %954, %v596
  %v956 = vpop.permute.xlu0 %955
  %958 = vset.pattern.permute.xlu0 1
  %959 = vperm.xlu0 %958, %v598
  %v960 = vpop.permute.xlu0 %959
  %962 = vset.pattern.permute.xlu0 1
  %963 = vperm.xlu0 %962, %v600
  %v964 = vpop.permute.xlu0 %963
  %966 = vset.pattern.permute.xlu0 1
  %967 = vperm.xlu0 %966, %v601
  %v968 = vpop.permute.xlu0 %967
  %v970 = vmul.f32 %v908, %v673
  %v971 = vmul.f32 %v912, %v673
  %v972 = vmul.f32 %v916, %v673
  %v973 = vmul.f32 %v920, %v673
  %v974 = vmul.f32 %v924, %v673
  %v975 = vmul.f32 %v928, %v673
  %v976 = vmul.f32 %v932, %v673
  %v977 = vmul.f32 %v936, %v673
  %v978 = vmul.f32 %v940, %v673
  %v979 = vmul.f32 %v944, %v673
  %v980 = vmul.f32 %v948, %v673
  %v981 = vmul.f32 %v952, %v673
  %v982 = vmul.f32 %v956, %v673
  %v983 = vmul.f32 %v960, %v673
  %v984 = vmul.f32 %v964, %v673
  %v985 = vmul.f32 %v968, %v673
  %986 = vset.pattern.permute.xlu0 1
  %987 = vperm.xlu0 %986, %v490
  %v988 = vpop.permute.xlu0 %987
  %990 = vset.pattern.permute.xlu0 1
  %991 = vperm.xlu0 %990, %v492
  %v992 = vpop.permute.xlu0 %991
  %994 = vset.pattern.permute.xlu0 1
  %995 = vperm.xlu0 %994, %v494
  %v996 = vpop.permute.xlu0 %995
  %998 = vset.pattern.permute.xlu0 1
  %999 = vperm.xlu0 %998, %v496
  %v1000 = vpop.permute.xlu0 %999
  %1002 = vset.pattern.permute.xlu0 1
  %1003 = vperm.xlu0 %1002, %v498
  %v1004 = vpop.permute.xlu0 %1003
  %1006 = vset.pattern.permute.xlu0 1
  %1007 = vperm.xlu0 %1006, %v500
  %v1008 = vpop.permute.xlu0 %1007
  %1010 = vset.pattern.permute.xlu0 1
  %1011 = vperm.xlu0 %1010, %v502
  %v1012 = vpop.permute.xlu0 %1011
  %1014 = vset.pattern.permute.xlu0 1
  %1015 = vperm.xlu0 %1014, %v504
  %v1016 = vpop.permute.xlu0 %1015
  %1018 = vset.pattern.permute.xlu0 1
  %1019 = vperm.xlu0 %1018, %v506
  %v1020 = vpop.permute.xlu0 %1019
  %1022 = vset.pattern.permute.xlu0 1
  %1023 = vperm.xlu0 %1022, %v508
  %v1024 = vpop.permute.xlu0 %1023
  %1026 = vset.pattern.permute.xlu0 1
  %1027 = vperm.xlu0 %1026, %v510
  %v1028 = vpop.permute.xlu0 %1027
  %1030 = vset.pattern.permute.xlu0 1
  %1031 = vperm.xlu0 %1030, %v512
  %v1032 = vpop.permute.xlu0 %1031
  %1034 = vset.pattern.permute.xlu0 1
  %1035 = vperm.xlu0 %1034, %v514
  %v1036 = vpop.permute.xlu0 %1035
  %1038 = vset.pattern.permute.xlu0 1
  %1039 = vperm.xlu0 %1038, %v516
  %v1040 = vpop.permute.xlu0 %1039
  %1042 = vset.pattern.permute.xlu0 1
  %1043 = vperm.xlu0 %1042, %v518
  %v1044 = vpop.permute.xlu0 %1043
  %1046 = vset.pattern.permute.xlu0 1
  %1047 = vperm.xlu0 %1046, %v520
  %v1048 = vpop.permute.xlu0 %1047
  %v1050 = vmul.f32 %v988, %v773
  %v1051 = vmul.f32 %v992, %v773
  %v1052 = vmul.f32 %v996, %v773
  %v1053 = vmul.f32 %v1000, %v773
  %v1054 = vmul.f32 %v1004, %v773
  %v1055 = vmul.f32 %v1008, %v773
  %v1056 = vmul.f32 %v1012, %v773
  %v1057 = vmul.f32 %v1016, %v773
  %v1058 = vmul.f32 %v1020, %v773
  %v1059 = vmul.f32 %v1024, %v773
  %v1060 = vmul.f32 %v1028, %v773
  %v1061 = vmul.f32 %v1032, %v773
  %v1062 = vmul.f32 %v1036, %v773
  %v1063 = vmul.f32 %v1040, %v773
  %v1064 = vmul.f32 %v1044, %v773
  %v1065 = vmul.f32 %v1048, %v773
  %v1066 = vadd.f32 %v970, %v1050
  %v1067 = vadd.f32 %v971, %v1051
  %v1068 = vadd.f32 %v972, %v1052
  %v1069 = vadd.f32 %v973, %v1053
  %v1070 = vadd.f32 %v974, %v1054
  %v1071 = vadd.f32 %v975, %v1055
  %v1072 = vadd.f32 %v976, %v1056
  %v1073 = vadd.f32 %v977, %v1057
  %v1074 = vadd.f32 %v978, %v1058
  %v1075 = vadd.f32 %v979, %v1059
  %v1076 = vadd.f32 %v980, %v1060
  %v1077 = vadd.f32 %v981, %v1061
  %v1078 = vadd.f32 %v982, %v1062
  %v1079 = vadd.f32 %v983, %v1063
  %v1080 = vadd.f32 %v984, %v1064
  %v1081 = vadd.f32 %v985, %v1065
  %1082 = vset.pattern.permute.xlu0 1
  %1083 = vperm.xlu0 %1082, %v522
  %v1084 = vpop.permute.xlu0 %1083
  %1086 = vset.pattern.permute.xlu0 1
  %1087 = vperm.xlu0 %1086, %v524
  %v1088 = vpop.permute.xlu0 %1087
  %1090 = vset.pattern.permute.xlu0 1
  %1091 = vperm.xlu0 %1090, %v526
  %v1092 = vpop.permute.xlu0 %1091
  %1094 = vset.pattern.permute.xlu0 1
  %1095 = vperm.xlu0 %1094, %v528
  %v1096 = vpop.permute.xlu0 %1095
  %1098 = vset.pattern.permute.xlu0 1
  %1099 = vperm.xlu0 %1098, %v530
  %v1100 = vpop.permute.xlu0 %1099
  %1102 = vset.pattern.permute.xlu0 1
  %1103 = vperm.xlu0 %1102, %v532
  %v1104 = vpop.permute.xlu0 %1103
  %1106 = vset.pattern.permute.xlu0 1
  %1107 = vperm.xlu0 %1106, %v534
  %v1108 = vpop.permute.xlu0 %1107
  %1110 = vset.pattern.permute.xlu0 1
  %1111 = vperm.xlu0 %1110, %v536
  %v1112 = vpop.permute.xlu0 %1111
  %1114 = vset.pattern.permute.xlu0 1
  %1115 = vperm.xlu0 %1114, %v538
  %v1116 = vpop.permute.xlu0 %1115
  %1118 = vset.pattern.permute.xlu0 1
  %1119 = vperm.xlu0 %1118, %v540
  %v1120 = vpop.permute.xlu0 %1119
  %1122 = vset.pattern.permute.xlu0 1
  %1123 = vperm.xlu0 %1122, %v542
  %v1124 = vpop.permute.xlu0 %1123
  %1126 = vset.pattern.permute.xlu0 1
  %1127 = vperm.xlu0 %1126, %v544
  %v1128 = vpop.permute.xlu0 %1127
  %1130 = vset.pattern.permute.xlu0 1
  %1131 = vperm.xlu0 %1130, %v546
  %v1132 = vpop.permute.xlu0 %1131
  %1134 = vset.pattern.permute.xlu0 1
  %1135 = vperm.xlu0 %1134, %v548
  %v1136 = vpop.permute.xlu0 %1135
  %1138 = vset.pattern.permute.xlu0 1
  %1139 = vperm.xlu0 %1138, %v550
  %v1140 = vpop.permute.xlu0 %1139
  %1142 = vset.pattern.permute.xlu0 1
  %1143 = vperm.xlu0 %1142, %v552
  %v1144 = vpop.permute.xlu0 %1143
  %v1146 = vmul.f32 %v1084, %v873
  %v1147 = vmul.f32 %v1088, %v873
  %v1148 = vmul.f32 %v1092, %v873
  %v1149 = vmul.f32 %v1096, %v873
  %v1150 = vmul.f32 %v1100, %v873
  %v1151 = vmul.f32 %v1104, %v873
  %v1152 = vmul.f32 %v1108, %v873
  %v1153 = vmul.f32 %v1112, %v873
  %v1154 = vmul.f32 %v1116, %v873
  %v1155 = vmul.f32 %v1120, %v873
  %v1156 = vmul.f32 %v1124, %v873
  %v1157 = vmul.f32 %v1128, %v873
  %v1158 = vmul.f32 %v1132, %v873
  %v1159 = vmul.f32 %v1136, %v873
  %v1160 = vmul.f32 %v1140, %v873
  %v1161 = vmul.f32 %v1144, %v873
  %v1162 = vadd.f32 %v1066, %v1146
  %v1163 = vadd.f32 %v1067, %v1147
  %v1164 = vadd.f32 %v1068, %v1148
  %v1165 = vadd.f32 %v1069, %v1149
  %v1166 = vadd.f32 %v1070, %v1150
  %v1167 = vadd.f32 %v1071, %v1151
  %v1168 = vadd.f32 %v1072, %v1152
  %v1169 = vadd.f32 %v1073, %v1153
  %v1170 = vadd.f32 %v1074, %v1154
  %v1171 = vadd.f32 %v1075, %v1155
  %v1172 = vadd.f32 %v1076, %v1156
  %v1173 = vadd.f32 %v1077, %v1157
  %v1174 = vadd.f32 %v1078, %v1158
  %v1175 = vadd.f32 %v1079, %v1159
  %v1176 = vadd.f32 %v1080, %v1160
  %v1177 = vadd.f32 %v1081, %v1161
  %vm1178 = vcmask 130048
  %v1179 = vsel %vm1178, %v890, 0.0
  %v1180 = vsel %vm1178, %v891, 0.0
  %v1181 = vadd.f32 %v1179, %v1180
  %v1182 = vsel %vm1178, %v892, 0.0
  %v1183 = vadd.f32 %v1181, %v1182
  %v1184 = vsel %vm1178, %v893, 0.0
  %v1185 = vadd.f32 %v1183, %v1184
  %v1186 = vsel %vm1178, %v894, 0.0
  %v1187 = vadd.f32 %v1185, %v1186
  %v1188 = vsel %vm1178, %v895, 0.0
  %v1189 = vadd.f32 %v1187, %v1188
  %v1190 = vsel %vm1178, %v896, 0.0
  %v1191 = vadd.f32 %v1189, %v1190
  %v1192 = vsel %vm1178, %v897, 0.0
  %v1193 = vadd.f32 %v1191, %v1192
  %v1194 = vsel %vm1178, %v898, 0.0
  %v1195 = vadd.f32 %v1193, %v1194
  %v1196 = vsel %vm1178, %v899, 0.0
  %v1197 = vadd.f32 %v1195, %v1196
  %v1198 = vsel %vm1178, %v900, 0.0
  %v1199 = vadd.f32 %v1197, %v1198
  %v1200 = vsel %vm1178, %v901, 0.0
  %v1201 = vadd.f32 %v1199, %v1200
  %v1202 = vsel %vm1178, %v902, 0.0
  %v1203 = vadd.f32 %v1201, %v1202
  %v1204 = vsel %vm1178, %v903, 0.0
  %v1205 = vadd.f32 %v1203, %v1204
  %v1206 = vsel %vm1178, %v904, 0.0
  %v1207 = vadd.f32 %v1205, %v1206
  %v1208 = vsel %vm1178, %v905, 0.0
  %v1209 = vadd.f32 %v1207, %v1208
  %v1210 = vsel %vm1178, %v1162, 0.0
  %v1211 = vadd.f32 %v1209, %v1210
  %v1212 = vsel %vm1178, %v1163, 0.0
  %v1213 = vadd.f32 %v1211, %v1212
  %v1214 = vsel %vm1178, %v1164, 0.0
  %v1215 = vadd.f32 %v1213, %v1214
  %v1216 = vsel %vm1178, %v1165, 0.0
  %v1217 = vadd.f32 %v1215, %v1216
  %v1218 = vsel %vm1178, %v1166, 0.0
  %v1219 = vadd.f32 %v1217, %v1218
  %v1220 = vsel %vm1178, %v1167, 0.0
  %v1221 = vadd.f32 %v1219, %v1220
  %v1222 = vsel %vm1178, %v1168, 0.0
  %v1223 = vadd.f32 %v1221, %v1222
  %v1224 = vsel %vm1178, %v1169, 0.0
  %v1225 = vadd.f32 %v1223, %v1224
  %v1226 = vsel %vm1178, %v1170, 0.0
  %v1227 = vadd.f32 %v1225, %v1226
  %v1228 = vsel %vm1178, %v1171, 0.0
  %v1229 = vadd.f32 %v1227, %v1228
  %v1230 = vsel %vm1178, %v1172, 0.0
  %v1231 = vadd.f32 %v1229, %v1230
  %v1232 = vsel %vm1178, %v1173, 0.0
  %v1233 = vadd.f32 %v1231, %v1232
  %v1234 = vsel %vm1178, %v1174, 0.0
  %v1235 = vadd.f32 %v1233, %v1234
  %v1236 = vsel %vm1178, %v1175, 0.0
  %v1237 = vadd.f32 %v1235, %v1236
  %v1238 = vsel %vm1178, %v1176, 0.0
  %v1239 = vadd.f32 %v1237, %v1238
  %v1240 = vsel %vm1178, %v1177, 0.0
  %v1241 = vadd.f32 %v1239, %v1240
  %v1242 = vrot.slane %v1241, 4
  %v1243 = vadd.f32 %v1241, %v1242
  %v1244 = vrot.slane %v1243, 2
  %v1245 = vadd.f32 %v1243, %v1244
  %v1246 = vrot.slane %v1245, 1
  %v1247 = vadd.f32 %v1245, %v1246
  %v1248 = vmul.f32 %v1247, 0.00390625
  %v1249 = vmul.f32 %v890, %v890
  %v1250 = vmul.f32 %v891, %v891
  %v1251 = vmul.f32 %v892, %v892
  %v1252 = vmul.f32 %v893, %v893
  %v1253 = vmul.f32 %v894, %v894
  %v1254 = vmul.f32 %v895, %v895
  %v1255 = vmul.f32 %v896, %v896
  %v1256 = vmul.f32 %v897, %v897
  %v1257 = vmul.f32 %v898, %v898
  %v1258 = vmul.f32 %v899, %v899
  %v1259 = vmul.f32 %v900, %v900
  %v1260 = vmul.f32 %v901, %v901
  %v1261 = vmul.f32 %v902, %v902
  %v1262 = vmul.f32 %v903, %v903
  %v1263 = vmul.f32 %v904, %v904
  %v1264 = vmul.f32 %v905, %v905
  %v1265 = vmul.f32 %v1162, %v1162
  %v1266 = vmul.f32 %v1163, %v1163
  %v1267 = vmul.f32 %v1164, %v1164
  %v1268 = vmul.f32 %v1165, %v1165
  %v1269 = vmul.f32 %v1166, %v1166
  %v1270 = vmul.f32 %v1167, %v1167
  %v1271 = vmul.f32 %v1168, %v1168
  %v1272 = vmul.f32 %v1169, %v1169
  %v1273 = vmul.f32 %v1170, %v1170
  %v1274 = vmul.f32 %v1171, %v1171
  %v1275 = vmul.f32 %v1172, %v1172
  %v1276 = vmul.f32 %v1173, %v1173
  %v1277 = vmul.f32 %v1174, %v1174
  %v1278 = vmul.f32 %v1175, %v1175
  %v1279 = vmul.f32 %v1176, %v1176
  %v1280 = vmul.f32 %v1177, %v1177
  %v1281 = vsel %vm1178, %v1249, 0.0
  %v1282 = vsel %vm1178, %v1250, 0.0
  %v1283 = vadd.f32 %v1281, %v1282
  %v1284 = vsel %vm1178, %v1251, 0.0
  %v1285 = vadd.f32 %v1283, %v1284
  %v1286 = vsel %vm1178, %v1252, 0.0
  %v1287 = vadd.f32 %v1285, %v1286
  %v1288 = vsel %vm1178, %v1253, 0.0
  %v1289 = vadd.f32 %v1287, %v1288
  %v1290 = vsel %vm1178, %v1254, 0.0
  %v1291 = vadd.f32 %v1289, %v1290
  %v1292 = vsel %vm1178, %v1255, 0.0
  %v1293 = vadd.f32 %v1291, %v1292
  %v1294 = vsel %vm1178, %v1256, 0.0
  %v1295 = vadd.f32 %v1293, %v1294
  %v1296 = vsel %vm1178, %v1257, 0.0
  %v1297 = vadd.f32 %v1295, %v1296
  %v1298 = vsel %vm1178, %v1258, 0.0
  %v1299 = vadd.f32 %v1297, %v1298
  %v1300 = vsel %vm1178, %v1259, 0.0
  %v1301 = vadd.f32 %v1299, %v1300
  %v1302 = vsel %vm1178, %v1260, 0.0
  %v1303 = vadd.f32 %v1301, %v1302
  %v1304 = vsel %vm1178, %v1261, 0.0
  %v1305 = vadd.f32 %v1303, %v1304
  %v1306 = vsel %vm1178, %v1262, 0.0
  %v1307 = vadd.f32 %v1305, %v1306
  %v1308 = vsel %vm1178, %v1263, 0.0
  %v1309 = vadd.f32 %v1307, %v1308
  %v1310 = vsel %vm1178, %v1264, 0.0
  %v1311 = vadd.f32 %v1309, %v1310
  %v1312 = vsel %vm1178, %v1265, 0.0
  %v1313 = vadd.f32 %v1311, %v1312
  %v1314 = vsel %vm1178, %v1266, 0.0
  %v1315 = vadd.f32 %v1313, %v1314
  %v1316 = vsel %vm1178, %v1267, 0.0
  %v1317 = vadd.f32 %v1315, %v1316
  %v1318 = vsel %vm1178, %v1268, 0.0
  %v1319 = vadd.f32 %v1317, %v1318
  %v1320 = vsel %vm1178, %v1269, 0.0
  %v1321 = vadd.f32 %v1319, %v1320
  %v1322 = vsel %vm1178, %v1270, 0.0
  %v1323 = vadd.f32 %v1321, %v1322
  %v1324 = vsel %vm1178, %v1271, 0.0
  %v1325 = vadd.f32 %v1323, %v1324
  %v1326 = vsel %vm1178, %v1272, 0.0
  %v1327 = vadd.f32 %v1325, %v1326
  %v1328 = vsel %vm1178, %v1273, 0.0
  %v1329 = vadd.f32 %v1327, %v1328
  %v1330 = vsel %vm1178, %v1274, 0.0
  %v1331 = vadd.f32 %v1329, %v1330
  %v1332 = vsel %vm1178, %v1275, 0.0
  %v1333 = vadd.f32 %v1331, %v1332
  %v1334 = vsel %vm1178, %v1276, 0.0
  %v1335 = vadd.f32 %v1333, %v1334
  %v1336 = vsel %vm1178, %v1277, 0.0
  %v1337 = vadd.f32 %v1335, %v1336
  %v1338 = vsel %vm1178, %v1278, 0.0
  %v1339 = vadd.f32 %v1337, %v1338
  %v1340 = vsel %vm1178, %v1279, 0.0
  %v1341 = vadd.f32 %v1339, %v1340
  %v1342 = vsel %vm1178, %v1280, 0.0
  %v1343 = vadd.f32 %v1341, %v1342
  %v1344 = vrot.slane %v1343, 4
  %v1345 = vadd.f32 %v1343, %v1344
  %v1346 = vrot.slane %v1345, 2
  %v1347 = vadd.f32 %v1345, %v1346
  %v1348 = vrot.slane %v1347, 1
  %v1349 = vadd.f32 %v1347, %v1348
  %v1350 = vmul.f32 %v1349, 0.00390625
  %v1351 = vmul.f32 %v1248, %v1248
  %v1352 = vsub.f32 %v1350, %v1351
  %v1353 = vld [vmem:[%s2] sm:$0x1]
  %v1354 = vadd.f32 %v1352, 1e-05
  %v1355 = vrsqrt.pop %v1354
  %v1356 = vmul.f32 %v1353, %v1355
  %v1358 = vlaneseq
  %v1359 = vshrl.u32 %v1358, 7
  %v1360 = vsub.s32 0, %v1359
  %v1361 = vrot.slane %v1356, %v1360
  %v1363 = vmul.f32 %v1361, %v890
  %v1364 = vmul.f32 %v1361, %v891
  %v1365 = vmul.f32 %v1361, %v892
  %v1366 = vmul.f32 %v1361, %v893
  %v1367 = vmul.f32 %v1361, %v894
  %v1368 = vmul.f32 %v1361, %v895
  %v1369 = vmul.f32 %v1361, %v896
  %v1370 = vmul.f32 %v1361, %v897
  %v1371 = vmul.f32 %v1361, %v898
  %v1372 = vmul.f32 %v1361, %v899
  %v1373 = vmul.f32 %v1361, %v900
  %v1374 = vmul.f32 %v1361, %v901
  %v1375 = vmul.f32 %v1361, %v902
  %v1376 = vmul.f32 %v1361, %v903
  %v1377 = vmul.f32 %v1361, %v904
  %v1378 = vmul.f32 %v1361, %v905
  %v1379 = vmul.f32 %v1361, %v1162
  %v1380 = vmul.f32 %v1361, %v1163
  %v1381 = vmul.f32 %v1361, %v1164
  %v1382 = vmul.f32 %v1361, %v1165
  %v1383 = vmul.f32 %v1361, %v1166
  %v1384 = vmul.f32 %v1361, %v1167
  %v1385 = vmul.f32 %v1361, %v1168
  %v1386 = vmul.f32 %v1361, %v1169
  %v1387 = vmul.f32 %v1361, %v1170
  %v1388 = vmul.f32 %v1361, %v1171
  %v1389 = vmul.f32 %v1361, %v1172
  %v1390 = vmul.f32 %v1361, %v1173
  %v1391 = vmul.f32 %v1361, %v1174
  %v1392 = vmul.f32 %v1361, %v1175
  %v1393 = vmul.f32 %v1361, %v1176
  %v1394 = vmul.f32 %v1361, %v1177
  %v1395 = vld [vmem:[%s3] sm:$0x1]
  %v1396 = vmul.f32 %v1356, %v1248
  %v1397 = vsub.f32 %v1395, %v1396
  %v1399 = vlaneseq
  %v1400 = vshrl.u32 %v1399, 7
  %v1401 = vsub.s32 0, %v1400
  %v1402 = vrot.slane %v1397, %v1401
  %v1404 = vadd.f32 %v1363, %v1402
  %v1405 = vadd.f32 %v1364, %v1402
  %v1406 = vadd.f32 %v1365, %v1402
  %v1407 = vadd.f32 %v1366, %v1402
  %v1408 = vadd.f32 %v1367, %v1402
  %v1409 = vadd.f32 %v1368, %v1402
  %v1410 = vadd.f32 %v1369, %v1402
  %v1411 = vadd.f32 %v1370, %v1402
  %v1412 = vadd.f32 %v1371, %v1402
  %v1413 = vadd.f32 %v1372, %v1402
  %v1414 = vadd.f32 %v1373, %v1402
  %v1415 = vadd.f32 %v1374, %v1402
  %v1416 = vadd.f32 %v1375, %v1402
  %v1417 = vadd.f32 %v1376, %v1402
  %v1418 = vadd.f32 %v1377, %v1402
  %v1419 = vadd.f32 %v1378, %v1402
  %v1420 = vadd.f32 %v1379, %v1402
  %v1421 = vadd.f32 %v1380, %v1402
  %v1422 = vadd.f32 %v1381, %v1402
  %v1423 = vadd.f32 %v1382, %v1402
  %v1424 = vadd.f32 %v1383, %v1402
  %v1425 = vadd.f32 %v1384, %v1402
  %v1426 = vadd.f32 %v1385, %v1402
  %v1427 = vadd.f32 %v1386, %v1402
  %v1428 = vadd.f32 %v1387, %v1402
  %v1429 = vadd.f32 %v1388, %v1402
  %v1430 = vadd.f32 %v1389, %v1402
  %v1431 = vadd.f32 %v1390, %v1402
  %v1432 = vadd.f32 %v1391, %v1402
  %v1433 = vadd.f32 %v1392, %v1402
  %v1434 = vadd.f32 %v1393, %v1402
  %v1435 = vadd.f32 %v1394, %v1402
  %vm1436 = vcmp.gt.f32.partialorder %v1404, 0.0
  %vm1437 = vcmp.gt.f32.partialorder %v1405, 0.0
  %vm1438 = vcmp.gt.f32.partialorder %v1406, 0.0
  %vm1439 = vcmp.gt.f32.partialorder %v1407, 0.0
  %vm1440 = vcmp.gt.f32.partialorder %v1408, 0.0
  %vm1441 = vcmp.gt.f32.partialorder %v1409, 0.0
  %vm1442 = vcmp.gt.f32.partialorder %v1410, 0.0
  %vm1443 = vcmp.gt.f32.partialorder %v1411, 0.0
  %vm1444 = vcmp.gt.f32.partialorder %v1412, 0.0
  %vm1445 = vcmp.gt.f32.partialorder %v1413, 0.0
  %vm1446 = vcmp.gt.f32.partialorder %v1414, 0.0
  %vm1447 = vcmp.gt.f32.partialorder %v1415, 0.0
  %vm1448 = vcmp.gt.f32.partialorder %v1416, 0.0
  %vm1449 = vcmp.gt.f32.partialorder %v1417, 0.0
  %vm1450 = vcmp.gt.f32.partialorder %v1418, 0.0
  %vm1451 = vcmp.gt.f32.partialorder %v1419, 0.0
  %vm1452 = vcmp.gt.f32.partialorder %v1420, 0.0
  %vm1453 = vcmp.gt.f32.partialorder %v1421, 0.0
  %vm1454 = vcmp.gt.f32.partialorder %v1422, 0.0
  %vm1455 = vcmp.gt.f32.partialorder %v1423, 0.0
  %vm1456 = vcmp.gt.f32.partialorder %v1424, 0.0
  %vm1457 = vcmp.gt.f32.partialorder %v1425, 0.0
  %vm1458 = vcmp.gt.f32.partialorder %v1426, 0.0
  %vm1459 = vcmp.gt.f32.partialorder %v1427, 0.0
  %vm1460 = vcmp.gt.f32.partialorder %v1428, 0.0
  %vm1461 = vcmp.gt.f32.partialorder %v1429, 0.0
  %vm1462 = vcmp.gt.f32.partialorder %v1430, 0.0
  %vm1463 = vcmp.gt.f32.partialorder %v1431, 0.0
  %vm1464 = vcmp.gt.f32.partialorder %v1432, 0.0
  %vm1465 = vcmp.gt.f32.partialorder %v1433, 0.0
  %vm1466 = vcmp.gt.f32.partialorder %v1434, 0.0
  %vm1467 = vcmp.gt.f32.partialorder %v1435, 0.0
  %v1468 = vmul.f32 %v1404, 0.01
  %v1469 = vmul.f32 %v1405, 0.01
  %v1470 = vmul.f32 %v1406, 0.01
  %v1471 = vmul.f32 %v1407, 0.01
  %v1472 = vmul.f32 %v1408, 0.01
  %v1473 = vmul.f32 %v1409, 0.01
  %v1474 = vmul.f32 %v1410, 0.01
  %v1475 = vmul.f32 %v1411, 0.01
  %v1476 = vmul.f32 %v1412, 0.01
  %v1477 = vmul.f32 %v1413, 0.01
  %v1478 = vmul.f32 %v1414, 0.01
  %v1479 = vmul.f32 %v1415, 0.01
  %v1480 = vmul.f32 %v1416, 0.01
  %v1481 = vmul.f32 %v1417, 0.01
  %v1482 = vmul.f32 %v1418, 0.01
  %v1483 = vmul.f32 %v1419, 0.01
  %v1484 = vmul.f32 %v1420, 0.01
  %v1485 = vmul.f32 %v1421, 0.01
  %v1486 = vmul.f32 %v1422, 0.01
  %v1487 = vmul.f32 %v1423, 0.01
  %v1488 = vmul.f32 %v1424, 0.01
  %v1489 = vmul.f32 %v1425, 0.01
  %v1490 = vmul.f32 %v1426, 0.01
  %v1491 = vmul.f32 %v1427, 0.01
  %v1492 = vmul.f32 %v1428, 0.01
  %v1493 = vmul.f32 %v1429, 0.01
  %v1494 = vmul.f32 %v1430, 0.01
  %v1495 = vmul.f32 %v1431, 0.01
  %v1496 = vmul.f32 %v1432, 0.01
  %v1497 = vmul.f32 %v1433, 0.01
  %v1498 = vmul.f32 %v1434, 0.01
  %v1499 = vmul.f32 %v1435, 0.01
  %v1500 = vsel %vm1436, %v1404, %v1468
  %v1501 = vsel %vm1437, %v1405, %v1469
  %v1502 = vsel %vm1438, %v1406, %v1470
  %v1503 = vsel %vm1439, %v1407, %v1471
  %v1504 = vsel %vm1440, %v1408, %v1472
  %v1505 = vsel %vm1441, %v1409, %v1473
  %v1506 = vsel %vm1442, %v1410, %v1474
  %v1507 = vsel %vm1443, %v1411, %v1475
  %v1508 = vsel %vm1444, %v1412, %v1476
  %v1509 = vsel %vm1445, %v1413, %v1477
  %v1510 = vsel %vm1446, %v1414, %v1478
  %v1511 = vsel %vm1447, %v1415, %v1479
  %v1512 = vsel %vm1448, %v1416, %v1480
  %v1513 = vsel %vm1449, %v1417, %v1481
  %v1514 = vsel %vm1450, %v1418, %v1482
  %v1515 = vsel %vm1451, %v1419, %v1483
  %v1516 = vsel %vm1452, %v1420, %v1484
  %v1517 = vsel %vm1453, %v1421, %v1485
  %v1518 = vsel %vm1454, %v1422, %v1486
  %v1519 = vsel %vm1455, %v1423, %v1487
  %v1520 = vsel %vm1456, %v1424, %v1488
  %v1521 = vsel %vm1457, %v1425, %v1489
  %v1522 = vsel %vm1458, %v1426, %v1490
  %v1523 = vsel %vm1459, %v1427, %v1491
  %v1524 = vsel %vm1460, %v1428, %v1492
  %v1525 = vsel %vm1461, %v1429, %v1493
  %v1526 = vsel %vm1462, %v1430, %v1494
  %v1527 = vsel %vm1463, %v1431, %v1495
  %v1528 = vsel %vm1464, %v1432, %v1496
  %v1529 = vsel %vm1465, %v1433, %v1497
  %v1530 = vsel %vm1466, %v1434, %v1498
  %v1531 = vsel %vm1467, %v1435, %v1499
  %1532 = vst.msk [vmem:[#allocation2] sm:$0xff] %vm1178, %v1500
  %1533 = vst.msk [vmem:[#allocation2 + $0x8] sm:$0xff] %vm1178, %v1501
  %1534 = vst.msk [vmem:[#allocation2 + $0x10] sm:$0xff] %vm1178, %v1502
  %1535 = vst.msk [vmem:[#allocation2 + $0x18] sm:$0xff] %vm1178, %v1503
  %1536 = vst.msk [vmem:[#allocation2 + $0x20] sm:$0xff] %vm1178, %v1504
  %1537 = vst.msk [vmem:[#allocation2 + $0x28] sm:$0xff] %vm1178, %v1505
  %1538 = vst.msk [vmem:[#allocation2 + $0x30] sm:$0xff] %vm1178, %v1506
  %1539 = vst.msk [vmem:[#allocation2 + $0x38] sm:$0xff] %vm1178, %v1507
  %1540 = vst.msk [vmem:[#allocation2 + $0x40] sm:$0xff] %vm1178, %v1508
  %1541 = vst.msk [vmem:[#allocation2 + $0x48] sm:$0xff] %vm1178, %v1509
  %1542 = vst.msk [vmem:[#allocation2 + $0x50] sm:$0xff] %vm1178, %v1510
  %1543 = vst.msk [vmem:[#allocation2 + $0x58] sm:$0xff] %vm1178, %v1511
  %1544 = vst.msk [vmem:[#allocation2 + $0x60] sm:$0xff] %vm1178, %v1512
  %1545 = vst.msk [vmem:[#allocation2 + $0x68] sm:$0xff] %vm1178, %v1513
  %1546 = vst.msk [vmem:[#allocation2 + $0x70] sm:$0xff] %vm1178, %v1514
  %1547 = vst.msk [vmem:[#allocation2 + $0x78] sm:$0xff] %vm1178, %v1515
  %1548 = vst.msk [vmem:[#allocation2 + $0x80] sm:$0xff] %vm1178, %v1516
  %1549 = vst.msk [vmem:[#allocation2 + $0x88] sm:$0xff] %vm1178, %v1517
  %1550 = vst.msk [vmem:[#allocation2 + $0x90] sm:$0xff] %vm1178, %v1518
  %1551 = vst.msk [vmem:[#allocation2 + $0x98] sm:$0xff] %vm1178, %v1519
  %1552 = vst.msk [vmem:[#allocation2 + $0xa0] sm:$0xff] %vm1178, %v1520
  %1553 = vst.msk [vmem:[#allocation2 + $0xa8] sm:$0xff] %vm1178, %v1521
  %1554 = vst.msk [vmem:[#allocation2 + $0xb0] sm:$0xff] %vm1178, %v1522
  %1555 = vst.msk [vmem:[#allocation2 + $0xb8] sm:$0xff] %vm1178, %v1523
  %1556 = vst.msk [vmem:[#allocation2 + $0xc0] sm:$0xff] %vm1178, %v1524
  %1557 = vst.msk [vmem:[#allocation2 + $0xc8] sm:$0xff] %vm1178, %v1525
  %1558 = vst.msk [vmem:[#allocation2 + $0xd0] sm:$0xff] %vm1178, %v1526
  %1559 = vst.msk [vmem:[#allocation2 + $0xd8] sm:$0xff] %vm1178, %v1527
  %1560 = vst.msk [vmem:[#allocation2 + $0xe0] sm:$0xff] %vm1178, %v1528
  %1561 = vst.msk [vmem:[#allocation2 + $0xe8] sm:$0xff] %vm1178, %v1529
  %1562 = vst.msk [vmem:[#allocation2 + $0xf0] sm:$0xff] %vm1178, %v1530
  %1563 = vst.msk [vmem:[#allocation2 + $0xf8] sm:$0xff] %vm1178, %v1531
  %s1564 = scalar_lea.vmem [#allocation2], 1
  %v1565 = vld [vmem:[%s1564] ss:$2 sm:$0xff]
  %s1566 = scalar_lea.vmem [#allocation2], 17
  %v1567 = vld [vmem:[%s1566] ss:$2 sm:$0xff]
  %s1568 = scalar_lea.vmem [#allocation2], 33
  %v1569 = vld [vmem:[%s1568] ss:$2 sm:$0xff]
  %s1570 = scalar_lea.vmem [#allocation2], 49
  %v1571 = vld [vmem:[%s1570] ss:$2 sm:$0xff]
  %s1572 = scalar_lea.vmem [#allocation2], 65
  %v1573 = vld [vmem:[%s1572] ss:$2 sm:$0xff]
  %s1574 = scalar_lea.vmem [#allocation2], 81
  %v1575 = vld [vmem:[%s1574] ss:$2 sm:$0xff]
  %s1576 = scalar_lea.vmem [#allocation2], 97
  %v1577 = vld [vmem:[%s1576] ss:$2 sm:$0xff]
  %s1578 = scalar_lea.vmem [#allocation2], 113
  %v1579 = vld [vmem:[%s1578] ss:$2 sm:$0xff]
  %s1580 = scalar_lea.vmem [#allocation2], 129
  %v1581 = vld [vmem:[%s1580] ss:$2 sm:$0xff]
  %s1582 = scalar_lea.vmem [#allocation2], 145
  %v1583 = vld [vmem:[%s1582] ss:$2 sm:$0xff]
  %s1584 = scalar_lea.vmem [#allocation2], 161
  %v1585 = vld [vmem:[%s1584] ss:$2 sm:$0xff]
  %s1586 = scalar_lea.vmem [#allocation2], 177
  %v1587 = vld [vmem:[%s1586] ss:$2 sm:$0xff]
  %s1588 = scalar_lea.vmem [#allocation2], 193
  %v1589 = vld [vmem:[%s1588] ss:$2 sm:$0xff]
  %s1590 = scalar_lea.vmem [#allocation2], 209
  %v1591 = vld [vmem:[%s1590] ss:$2 sm:$0xff]
  %s1592 = scalar_lea.vmem [#allocation2], 225
  %v1593 = vld [vmem:[%s1592] ss:$2 sm:$0xff]
  %s1594 = scalar_lea.vmem [#allocation2], 241
  %v1595 = vld [vmem:[%s1594] ss:$2 sm:$0xff]
  %v1597 = vrot.slane %v1579, 7
  %v1606 = vrot.slane %v1565, 7
  %v1607 = vrot.slane %v1567, 7
  %v1608 = vsel %vm571, %v1606, %v1607
  %v1609 = vrot.slane %v1569, 7
  %v1610 = vsel %vm571, %v1607, %v1609
  %v1611 = vrot.slane %v1571, 7
  %v1612 = vsel %vm571, %v1609, %v1611
  %v1613 = vrot.slane %v1573, 7
  %v1614 = vsel %vm571, %v1611, %v1613
  %v1615 = vrot.slane %v1575, 7
  %v1616 = vsel %vm571, %v1613, %v1615
  %v1617 = vrot.slane %v1577, 7
  %v1618 = vsel %vm571, %v1615, %v1617
  %v1619 = vsel %vm571, %v1617, %v1597
  %v1622 = vrot.slane %v1595, 7
  %v1631 = vrot.slane %v1581, 7
  %v1632 = vrot.slane %v1583, 7
  %v1633 = vsel %vm571, %v1631, %v1632
  %v1634 = vrot.slane %v1585, 7
  %v1635 = vsel %vm571, %v1632, %v1634
  %v1636 = vrot.slane %v1587, 7
  %v1637 = vsel %vm571, %v1634, %v1636
  %v1638 = vrot.slane %v1589, 7
  %v1639 = vsel %vm571, %v1636, %v1638
  %v1640 = vrot.slane %v1591, 7
  %v1641 = vsel %vm571, %v1638, %v1640
  %v1642 = vrot.slane %v1593, 7
  %v1643 = vsel %vm571, %v1640, %v1642
  %v1644 = vsel %vm571, %v1642, %v1622
  %v1646 = vsel %vm571, %v1597, %v1606
  %v1647 = vsel %vm571, %v1622, %v1631
  %v1648 = vld [vmem:[%s4 + $0x10] sm:$0xf]
  %v1649 = vld [vmem:[%s4 + $0x14] sm:$0xf]
  %v1650 = vunpack.c.l.bf16 %v1648
  %v1651 = vunpack.c.l.bf16 %v1649
  %v1652 = vld [vmem:[%s4] sm:$0xf]
  %v1653 = vld [vmem:[%s4 + $0x4] sm:$0xf]
  %v1654 = vunpack.c.l.bf16 %v1652
  %v1655 = vunpack.c.l.bf16 %v1653
  %v1657 = vsel %vm1178, %v1646, 0
  %v1659 = vsel %vm1178, %v1608, 0
  %v1661 = vsel %vm1178, %v1610, 0
  %v1663 = vsel %vm1178, %v1612, 0
  %v1665 = vsel %vm1178, %v1614, 0
  %v1667 = vsel %vm1178, %v1616, 0
  %v1669 = vsel %vm1178, %v1618, 0
  %v1671 = vsel %vm1178, %v1619, 0
  %v1674 = vsel %vm1178, %v1647, 0
  %v1676 = vsel %vm1178, %v1633, 0
  %v1678 = vsel %vm1178, %v1635, 0
  %v1680 = vsel %vm1178, %v1637, 0
  %v1682 = vsel %vm1178, %v1639, 0
  %v1684 = vsel %vm1178, %v1641, 0
  %v1686 = vsel %vm1178, %v1643, 0
  %v1688 = vsel %vm1178, %v1644, 0
  %1690 = vmatprep.subr.mxu0 0.0
  %1691 = vmatpush1.msra.mxu0 0.0
  %1692 = vmatprep.subr.mxu0 0.0
  %1693 = vmatpush1.msra.mxu0 0.0
  %1694 = vmatprep.subr.mxu0 0.0
  %1695 = vmatpush1.msra.mxu0 0.0
  %1696 = vmatprep.subr.mxu0 0.0
  %1697 = vmatpush1.msra.mxu0 0.0
  %1698 = vmatprep.subr.mxu0 0.0
  %1699 = vmatpush1.msra.mxu0 0.0
  %1700 = vmatprep.subr.mxu0 0.0
  %1701 = vmatpush1.msra.mxu0 0.0
  %1702 = vmatprep.subr.mxu0 0.0
  %1703 = vmatpush1.msra.mxu0 0.0
  %1704 = vmatprep.subr.mxu0 0.0
  %1705 = vmatpush1.msra.mxu0 0.0
  %1706 = vmatprep.subr.mxu0 0.0
  %1707 = vmatpush1.msra.mxu0 0.0
  %1708 = vmatprep.subr.mxu0 0.0
  %1709 = vmatpush1.msra.mxu0 0.0
  %1710 = vmatprep.subr.mxu0 0.0
  %1711 = vmatpush1.msra.mxu0 0.0
  %1712 = vmatprep.subr.mxu0 0.0
  %1713 = vmatpush1.msra.mxu0 0.0
  %1714 = vmatprep.subr.mxu0 0.0
  %1715 = vmatpush1.msra.mxu0 0.0
  %1716 = vmatprep.subr.mxu0 0.0
  %1717 = vmatpush1.msra.mxu0 0.0
  %1718 = vmatprep.subr.mxu0 0.0
  %1719 = vmatpush1.msra.mxu0 %v1655
  %1720 = vmatprep.subr.mxu0 0.0
  %1721 = vmatpush1.msra.mxu0 %v1654
  %1722 = vmatprep.subr.mxu0 0.0
  %1723 = vmatpush2.msra.mxu0 0.0
  %1724 = vmatprep.subr.mxu0 0.0
  %1725 = vmatpush2.msra.mxu0 0.0
  %1726 = vmatprep.subr.mxu0 0.0
  %1727 = vmatpush2.msra.mxu0 0.0
  %1728 = vmatprep.subr.mxu0 0.0
  %1729 = vmatpush2.msra.mxu0 0.0
  %1730 = vmatprep.subr.mxu0 0.0
  %1731 = vmatpush2.msra.mxu0 0.0
  %1732 = vmatprep.subr.mxu0 0.0
  %1733 = vmatpush2.msra.mxu0 0.0
  %1734 = vmatprep.subr.mxu0 0.0
  %1735 = vmatpush2.msra.mxu0 0.0
  %1736 = vmatprep.subr.mxu0 0.0
  %1737 = vmatpush2.msra.mxu0 0.0
  %1738 = vmatprep.subr.mxu0 0.0
  %1739 = vmatpush2.msra.mxu0 0.0
  %1740 = vmatprep.subr.mxu0 0.0
  %1741 = vmatpush2.msra.mxu0 0.0
  %1742 = vmatprep.subr.mxu0 0.0
  %1743 = vmatpush2.msra.mxu0 0.0
  %1744 = vmatprep.subr.mxu0 0.0
  %1745 = vmatpush2.msra.mxu0 0.0
  %1746 = vmatprep.subr.mxu0 0.0
  %1747 = vmatpush2.msra.mxu0 0.0
  %1748 = vmatprep.subr.mxu0 0.0
  %1749 = vmatpush2.msra.mxu0 0.0
  %1750 = vmatprep.subr.mxu0 0.0
  %1751 = vmatpush2.msra.mxu0 0.0
  %1752 = vmatprep.subr.mxu0 0.0
  %1753 = vmatpush2.msra.mxu0 0.0
  %1754 = vmatprep.mubr.f32.mxu0 0.0
  %1755 = vmatmul.mubr.f32.gmra.mxu0 %v1657
  %v1756 = vpop.f32.mrf.mxu0
  %v1757 = vadd.f32 0.0, %v1756
  %v1758 = vpop.f32.mrf.mxu0
  %1759 = vmatprep.mubr.f32.mxu0 0.0
  %1760 = vmatmul.mubr.f32.gmra.mxu0 %v1659
  %v1761 = vpop.f32.mrf.mxu0
  %v1762 = vadd.f32 0.0, %v1761
  %v1763 = vpop.f32.mrf.mxu0
  %1764 = vmatprep.mubr.f32.mxu0 0.0
  %1765 = vmatmul.mubr.f32.gmra.mxu0 %v1661
  %v1766 = vpop.f32.mrf.mxu0
  %v1767 = vadd.f32 0.0, %v1766
  %v1768 = vpop.f32.mrf.mxu0
  %1769 = vmatprep.mubr.f32.mxu0 0.0
  %1770 = vmatmul.mubr.f32.gmra.mxu0 %v1663
  %v1771 = vpop.f32.mrf.mxu0
  %v1772 = vadd.f32 0.0, %v1771
  %v1773 = vpop.f32.mrf.mxu0
  %1774 = vmatprep.mubr.f32.mxu0 0.0
  %1775 = vmatmul.mubr.f32.gmra.mxu0 %v1665
  %v1776 = vpop.f32.mrf.mxu0
  %v1777 = vadd.f32 0.0, %v1776
  %v1778 = vpop.f32.mrf.mxu0
  %1779 = vmatprep.mubr.f32.mxu0 0.0
  %1780 = vmatmul.mubr.f32.gmra.mxu0 %v1667
  %v1781 = vpop.f32.mrf.mxu0
  %v1782 = vadd.f32 0.0, %v1781
  %v1783 = vpop.f32.mrf.mxu0
  %1784 = vmatprep.mubr.f32.mxu0 0.0
  %1785 = vmatmul.mubr.f32.gmra.mxu0 %v1669
  %v1786 = vpop.f32.mrf.mxu0
  %v1787 = vadd.f32 0.0, %v1786
  %v1788 = vpop.f32.mrf.mxu0
  %1789 = vmatprep.mubr.f32.mxu0 0.0
  %1790 = vmatmul.mubr.f32.gmra.mxu0 %v1671
  %v1791 = vpop.f32.mrf.mxu0
  %v1792 = vadd.f32 0.0, %v1791
  %v1793 = vpop.f32.mrf.mxu0
  %1794 = vmatprep.mubr.f32.mxu0 0.0
  %1795 = vmatmul.mubr.f32.gmra.mxu0 %v1674
  %v1796 = vpop.f32.mrf.mxu0
  %v1797 = vadd.f32 0.0, %v1796
  %v1798 = vpop.f32.mrf.mxu0
  %1799 = vmatprep.mubr.f32.mxu0 0.0
  %1800 = vmatmul.mubr.f32.gmra.mxu0 %v1676
  %v1801 = vpop.f32.mrf.mxu0
  %v1802 = vadd.f32 0.0, %v1801
  %v1803 = vpop.f32.mrf.mxu0
  %1804 = vmatprep.mubr.f32.mxu0 0.0
  %1805 = vmatmul.mubr.f32.gmra.mxu0 %v1678
  %v1806 = vpop.f32.mrf.mxu0
  %v1807 = vadd.f32 0.0, %v1806
  %v1808 = vpop.f32.mrf.mxu0
  %1809 = vmatprep.mubr.f32.mxu0 0.0
  %1810 = vmatmul.mubr.f32.gmra.mxu0 %v1680
  %v1811 = vpop.f32.mrf.mxu0
  %v1812 = vadd.f32 0.0, %v1811
  %v1813 = vpop.f32.mrf.mxu0
  %1814 = vmatprep.mubr.f32.mxu0 0.0
  %1815 = vmatmul.mubr.f32.gmra.mxu0 %v1682
  %v1816 = vpop.f32.mrf.mxu0
  %v1817 = vadd.f32 0.0, %v1816
  %v1818 = vpop.f32.mrf.mxu0
  %1819 = vmatprep.mubr.f32.mxu0 0.0
  %1820 = vmatmul.mubr.f32.gmra.mxu0 %v1684
  %v1821 = vpop.f32.mrf.mxu0
  %v1822 = vadd.f32 0.0, %v1821
  %v1823 = vpop.f32.mrf.mxu0
  %1824 = vmatprep.mubr.f32.mxu0 0.0
  %1825 = vmatmul.mubr.f32.gmra.mxu0 %v1686
  %v1826 = vpop.f32.mrf.mxu0
  %v1827 = vadd.f32 0.0, %v1826
  %v1828 = vpop.f32.mrf.mxu0
  %1829 = vmatprep.mubr.f32.mxu0 0.0
  %1830 = vmatmul.mubr.f32.gmra.mxu0 %v1688
  %v1831 = vpop.f32.mrf.mxu0
  %v1832 = vadd.f32 0.0, %v1831
  %v1833 = vpop.f32.mrf.mxu0
  %1834 = vdwg.mxu0
  %v1835 = vsel %vm1178, %v1565, 0
  %v1837 = vsel %vm1178, %v1567, 0
  %v1839 = vsel %vm1178, %v1569, 0
  %v1841 = vsel %vm1178, %v1571, 0
  %v1843 = vsel %vm1178, %v1573, 0
  %v1845 = vsel %vm1178, %v1575, 0
  %v1847 = vsel %vm1178, %v1577, 0
  %v1849 = vsel %vm1178, %v1579, 0
  %v1851 = vsel %vm1178, %v1581, 0
  %v1853 = vsel %vm1178, %v1583, 0
  %v1855 = vsel %vm1178, %v1585, 0
  %v1857 = vsel %vm1178, %v1587, 0
  %v1859 = vsel %vm1178, %v1589, 0
  %v1861 = vsel %vm1178, %v1591, 0
  %v1863 = vsel %vm1178, %v1593, 0
  %v1865 = vsel %vm1178, %v1595, 0
  %1867 = vmatprep.subr.mxu0 0.0
  %1868 = vmatpush1.msra.mxu0 0.0
  %1869 = vmatprep.subr.mxu0 0.0
  %1870 = vmatpush1.msra.mxu0 0.0
  %1871 = vmatprep.subr.mxu0 0.0
  %1872 = vmatpush1.msra.mxu0 0.0
  %1873 = vmatprep.subr.mxu0 0.0
  %1874 = vmatpush1.msra.mxu0 0.0
  %1875 = vmatprep.subr.mxu0 0.0
  %1876 = vmatpush1.msra.mxu0 0.0
  %1877 = vmatprep.subr.mxu0 0.0
  %1878 = vmatpush1.msra.mxu0 0.0
  %1879 = vmatprep.subr.mxu0 0.0
  %1880 = vmatpush1.msra.mxu0 0.0
  %1881 = vmatprep.subr.mxu0 0.0
  %1882 = vmatpush1.msra.mxu0 0.0
  %1883 = vmatprep.subr.mxu0 0.0
  %1884 = vmatpush1.msra.mxu0 0.0
  %1885 = vmatprep.subr.mxu0 0.0
  %1886 = vmatpush1.msra.mxu0 0.0
  %1887 = vmatprep.subr.mxu0 0.0
  %1888 = vmatpush1.msra.mxu0 0.0
  %1889 = vmatprep.subr.mxu0 0.0
  %1890 = vmatpush1.msra.mxu0 0.0
  %1891 = vmatprep.subr.mxu0 0.0
  %1892 = vmatpush1.msra.mxu0 0.0
  %1893 = vmatprep.subr.mxu0 0.0
  %1894 = vmatpush1.msra.mxu0 0.0
  %1895 = vmatprep.subr.mxu0 0.0
  %1896 = vmatpush1.msra.mxu0 %v1651
  %1897 = vmatprep.subr.mxu0 0.0
  %1898 = vmatpush1.msra.mxu0 %v1650
  %1899 = vmatprep.subr.mxu0 0.0
  %1900 = vmatpush2.msra.mxu0 0.0
  %1901 = vmatprep.subr.mxu0 0.0
  %1902 = vmatpush2.msra.mxu0 0.0
  %1903 = vmatprep.subr.mxu0 0.0
  %1904 = vmatpush2.msra.mxu0 0.0
  %1905 = vmatprep.subr.mxu0 0.0
  %1906 = vmatpush2.msra.mxu0 0.0
  %1907 = vmatprep.subr.mxu0 0.0
  %1908 = vmatpush2.msra.mxu0 0.0
  %1909 = vmatprep.subr.mxu0 0.0
  %1910 = vmatpush2.msra.mxu0 0.0
  %1911 = vmatprep.subr.mxu0 0.0
  %1912 = vmatpush2.msra.mxu0 0.0
  %1913 = vmatprep.subr.mxu0 0.0
  %1914 = vmatpush2.msra.mxu0 0.0
  %1915 = vmatprep.subr.mxu0 0.0
  %1916 = vmatpush2.msra.mxu0 0.0
  %1917 = vmatprep.subr.mxu0 0.0
  %1918 = vmatpush2.msra.mxu0 0.0
  %1919 = vmatprep.subr.mxu0 0.0
  %1920 = vmatpush2.msra.mxu0 0.0
  %1921 = vmatprep.subr.mxu0 0.0
  %1922 = vmatpush2.msra.mxu0 0.0
  %1923 = vmatprep.subr.mxu0 0.0
  %1924 = vmatpush2.msra.mxu0 0.0
  %1925 = vmatprep.subr.mxu0 0.0
  %1926 = vmatpush2.msra.mxu0 0.0
  %1927 = vmatprep.subr.mxu0 0.0
  %1928 = vmatpush2.msra.mxu0 0.0
  %1929 = vmatprep.subr.mxu0 0.0
  %1930 = vmatpush2.msra.mxu0 0.0
  %1931 = vmatprep.mubr.f32.mxu0 0.0
  %1932 = vmatmul.mubr.f32.gmra.mxu0 %v1835
  %v1933 = vpop.f32.mrf.mxu0
  %v1934 = vadd.f32 %v1757, %v1933
  %v1935 = vpop.f32.mrf.mxu0
  %1936 = vmatprep.mubr.f32.mxu0 0.0
  %1937 = vmatmul.mubr.f32.gmra.mxu0 %v1837
  %v1938 = vpop.f32.mrf.mxu0
  %v1939 = vadd.f32 %v1762, %v1938
  %v1940 = vpop.f32.mrf.mxu0
  %1941 = vmatprep.mubr.f32.mxu0 0.0
  %1942 = vmatmul.mubr.f32.gmra.mxu0 %v1839
  %v1943 = vpop.f32.mrf.mxu0
  %v1944 = vadd.f32 %v1767, %v1943
  %v1945 = vpop.f32.mrf.mxu0
  %1946 = vmatprep.mubr.f32.mxu0 0.0
  %1947 = vmatmul.mubr.f32.gmra.mxu0 %v1841
  %v1948 = vpop.f32.mrf.mxu0
  %v1949 = vadd.f32 %v1772, %v1948
  %v1950 = vpop.f32.mrf.mxu0
  %1951 = vmatprep.mubr.f32.mxu0 0.0
  %1952 = vmatmul.mubr.f32.gmra.mxu0 %v1843
  %v1953 = vpop.f32.mrf.mxu0
  %v1954 = vadd.f32 %v1777, %v1953
  %v1955 = vpop.f32.mrf.mxu0
  %1956 = vmatprep.mubr.f32.mxu0 0.0
  %1957 = vmatmul.mubr.f32.gmra.mxu0 %v1845
  %v1958 = vpop.f32.mrf.mxu0
  %v1959 = vadd.f32 %v1782, %v1958
  %v1960 = vpop.f32.mrf.mxu0
  %1961 = vmatprep.mubr.f32.mxu0 0.0
  %1962 = vmatmul.mubr.f32.gmra.mxu0 %v1847
  %v1963 = vpop.f32.mrf.mxu0
  %v1964 = vadd.f32 %v1787, %v1963
  %v1965 = vpop.f32.mrf.mxu0
  %1966 = vmatprep.mubr.f32.mxu0 0.0
  %1967 = vmatmul.mubr.f32.gmra.mxu0 %v1849
  %v1968 = vpop.f32.mrf.mxu0
  %v1969 = vadd.f32 %v1792, %v1968
  %v1970 = vpop.f32.mrf.mxu0
  %1971 = vmatprep.mubr.f32.mxu0 0.0
  %1972 = vmatmul.mubr.f32.gmra.mxu0 %v1851
  %v1973 = vpop.f32.mrf.mxu0
  %v1974 = vadd.f32 %v1797, %v1973
  %v1975 = vpop.f32.mrf.mxu0
  %1976 = vmatprep.mubr.f32.mxu0 0.0
  %1977 = vmatmul.mubr.f32.gmra.mxu0 %v1853
  %v1978 = vpop.f32.mrf.mxu0
  %v1979 = vadd.f32 %v1802, %v1978
  %v1980 = vpop.f32.mrf.mxu0
  %1981 = vmatprep.mubr.f32.mxu0 0.0
  %1982 = vmatmul.mubr.f32.gmra.mxu0 %v1855
  %v1983 = vpop.f32.mrf.mxu0
  %v1984 = vadd.f32 %v1807, %v1983
  %v1985 = vpop.f32.mrf.mxu0
  %1986 = vmatprep.mubr.f32.mxu0 0.0
  %1987 = vmatmul.mubr.f32.gmra.mxu0 %v1857
  %v1988 = vpop.f32.mrf.mxu0
  %v1989 = vadd.f32 %v1812, %v1988
  %v1990 = vpop.f32.mrf.mxu0
  %1991 = vmatprep.mubr.f32.mxu0 0.0
  %1992 = vmatmul.mubr.f32.gmra.mxu0 %v1859
  %v1993 = vpop.f32.mrf.mxu0
  %v1994 = vadd.f32 %v1817, %v1993
  %v1995 = vpop.f32.mrf.mxu0
  %1996 = vmatprep.mubr.f32.mxu0 0.0
  %1997 = vmatmul.mubr.f32.gmra.mxu0 %v1861
  %v1998 = vpop.f32.mrf.mxu0
  %v1999 = vadd.f32 %v1822, %v1998
  %v2000 = vpop.f32.mrf.mxu0
  %2001 = vmatprep.mubr.f32.mxu0 0.0
  %2002 = vmatmul.mubr.f32.gmra.mxu0 %v1863
  %v2003 = vpop.f32.mrf.mxu0
  %v2004 = vadd.f32 %v1827, %v2003
  %v2005 = vpop.f32.mrf.mxu0
  %2006 = vmatprep.mubr.f32.mxu0 0.0
  %2007 = vmatmul.mubr.f32.gmra.mxu0 %v1865
  %v2008 = vpop.f32.mrf.mxu0
  %v2009 = vadd.f32 %v1832, %v2008
  %v2010 = vpop.f32.mrf.mxu0
  %2011 = vdwg.mxu0
  %v2012 = vld [vmem:[#allocation2] ss:$2 sm:$0xff]
  %s2013 = scalar_lea.vmem [#allocation2], 16
  %v2014 = vld [vmem:[%s2013] ss:$2 sm:$0xff]
  %s2015 = scalar_lea.vmem [#allocation2], 32
  %v2016 = vld [vmem:[%s2015] ss:$2 sm:$0xff]
  %s2017 = scalar_lea.vmem [#allocation2], 48
  %v2018 = vld [vmem:[%s2017] ss:$2 sm:$0xff]
  %s2019 = scalar_lea.vmem [#allocation2], 64
  %v2020 = vld [vmem:[%s2019] ss:$2 sm:$0xff]
  %s2021 = scalar_lea.vmem [#allocation2], 80
  %v2022 = vld [vmem:[%s2021] ss:$2 sm:$0xff]
  %s2023 = scalar_lea.vmem [#allocation2], 96
  %v2024 = vld [vmem:[%s2023] ss:$2 sm:$0xff]
  %s2025 = scalar_lea.vmem [#allocation2], 112
  %v2026 = vld [vmem:[%s2025] ss:$2 sm:$0xff]
  %s2027 = scalar_lea.vmem [#allocation2], 128
  %v2028 = vld [vmem:[%s2027] ss:$2 sm:$0xff]
  %s2029 = scalar_lea.vmem [#allocation2], 144
  %v2030 = vld [vmem:[%s2029] ss:$2 sm:$0xff]
  %s2031 = scalar_lea.vmem [#allocation2], 160
  %v2032 = vld [vmem:[%s2031] ss:$2 sm:$0xff]
  %s2033 = scalar_lea.vmem [#allocation2], 176
  %v2034 = vld [vmem:[%s2033] ss:$2 sm:$0xff]
  %s2035 = scalar_lea.vmem [#allocation2], 192
  %v2036 = vld [vmem:[%s2035] ss:$2 sm:$0xff]
  %s2037 = scalar_lea.vmem [#allocation2], 208
  %v2038 = vld [vmem:[%s2037] ss:$2 sm:$0xff]
  %s2039 = scalar_lea.vmem [#allocation2], 224
  %v2040 = vld [vmem:[%s2039] ss:$2 sm:$0xff]
  %s2041 = scalar_lea.vmem [#allocation2], 240
  %v2042 = vld [vmem:[%s2041] ss:$2 sm:$0xff]
  %v2043 = vld [vmem:[%s4 + $0x8] sm:$0xf]
  %v2044 = vld [vmem:[%s4 + $0xc] sm:$0xf]
  %v2045 = vunpack.c.l.bf16 %v2043
  %v2046 = vunpack.c.l.bf16 %v2044
  %v2048 = vsel %vm1178, %v2012, 0
  %v2051 = vsel %vm1178, %v2014, 0
  %v2054 = vsel %vm1178, %v2016, 0
  %v2057 = vsel %vm1178, %v2018, 0
  %v2060 = vsel %vm1178, %v2020, 0
  %v2063 = vsel %vm1178, %v2022, 0
  %v2066 = vsel %vm1178, %v2024, 0
  %v2069 = vsel %vm1178, %v2026, 0
  %v2072 = vsel %vm1178, %v2028, 0
  %v2075 = vsel %vm1178, %v2030, 0
  %v2078 = vsel %vm1178, %v2032, 0
  %v2081 = vsel %vm1178, %v2034, 0
  %v2084 = vsel %vm1178, %v2036, 0
  %v2087 = vsel %vm1178, %v2038, 0
  %v2090 = vsel %vm1178, %v2040, 0
  %v2093 = vsel %vm1178, %v2042, 0
  %2095 = vmatprep.subr.mxu0 0.0
  %2096 = vmatpush1.msra.mxu0 0.0
  %2097 = vmatprep.subr.mxu0 0.0
  %2098 = vmatpush1.msra.mxu0 0.0
  %2099 = vmatprep.subr.mxu0 0.0
  %2100 = vmatpush1.msra.mxu0 0.0
  %2101 = vmatprep.subr.mxu0 0.0
  %2102 = vmatpush1.msra.mxu0 0.0
  %2103 = vmatprep.subr.mxu0 0.0
  %2104 = vmatpush1.msra.mxu0 0.0
  %2105 = vmatprep.subr.mxu0 0.0
  %2106 = vmatpush1.msra.mxu0 0.0
  %2107 = vmatprep.subr.mxu0 0.0
  %2108 = vmatpush1.msra.mxu0 0.0
  %2109 = vmatprep.subr.mxu0 0.0
  %2110 = vmatpush1.msra.mxu0 0.0
  %2111 = vmatprep.subr.mxu0 0.0
  %2112 = vmatpush1.msra.mxu0 0.0
  %2113 = vmatprep.subr.mxu0 0.0
  %2114 = vmatpush1.msra.mxu0 0.0
  %2115 = vmatprep.subr.mxu0 0.0
  %2116 = vmatpush1.msra.mxu0 0.0
  %2117 = vmatprep.subr.mxu0 0.0
  %2118 = vmatpush1.msra.mxu0 0.0
  %2119 = vmatprep.subr.mxu0 0.0
  %2120 = vmatpush1.msra.mxu0 0.0
  %2121 = vmatprep.subr.mxu0 0.0
  %2122 = vmatpush1.msra.mxu0 0.0
  %2123 = vmatprep.subr.mxu0 0.0
  %2124 = vmatpush1.msra.mxu0 %v2046
  %2125 = vmatprep.subr.mxu0 0.0
  %2126 = vmatpush1.msra.mxu0 %v2045
  %2127 = vmatprep.subr.mxu0 0.0
  %2128 = vmatpush2.msra.mxu0 0.0
  %2129 = vmatprep.subr.mxu0 0.0
  %2130 = vmatpush2.msra.mxu0 0.0
  %2131 = vmatprep.subr.mxu0 0.0
  %2132 = vmatpush2.msra.mxu0 0.0
  %2133 = vmatprep.subr.mxu0 0.0
  %2134 = vmatpush2.msra.mxu0 0.0
  %2135 = vmatprep.subr.mxu0 0.0
  %2136 = vmatpush2.msra.mxu0 0.0
  %2137 = vmatprep.subr.mxu0 0.0
  %2138 = vmatpush2.msra.mxu0 0.0
  %2139 = vmatprep.subr.mxu0 0.0
  %2140 = vmatpush2.msra.mxu0 0.0
  %2141 = vmatprep.subr.mxu0 0.0
  %2142 = vmatpush2.msra.mxu0 0.0
  %2143 = vmatprep.subr.mxu0 0.0
  %2144 = vmatpush2.msra.mxu0 0.0
  %2145 = vmatprep.subr.mxu0 0.0
  %2146 = vmatpush2.msra.mxu0 0.0
  %2147 = vmatprep.subr.mxu0 0.0
  %2148 = vmatpush2.msra.mxu0 0.0
  %2149 = vmatprep.subr.mxu0 0.0
  %2150 = vmatpush2.msra.mxu0 0.0
  %2151 = vmatprep.subr.mxu0 0.0
  %2152 = vmatpush2.msra.mxu0 0.0
  %2153 = vmatprep.subr.mxu0 0.0
  %2154 = vmatpush2.msra.mxu0 0.0
  %2155 = vmatprep.subr.mxu0 0.0
  %2156 = vmatpush2.msra.mxu0 0.0
  %2157 = vmatprep.subr.mxu0 0.0
  %2158 = vmatpush2.msra.mxu0 0.0
  %2159 = vmatprep.mubr.f32.mxu0 0.0
  %2160 = vmatmul.mubr.f32.gmra.mxu0 %v2048
  %v2161 = vpop.f32.mrf.mxu0
  %v2162 = vadd.f32 0.0, %v2161
  %v2163 = vpop.f32.mrf.mxu0
  %2164 = vmatprep.mubr.f32.mxu0 0.0
  %2165 = vmatmul.mubr.f32.gmra.mxu0 %v2051
  %v2166 = vpop.f32.mrf.mxu0
  %v2167 = vadd.f32 0.0, %v2166
  %v2168 = vpop.f32.mrf.mxu0
  %2169 = vmatprep.mubr.f32.mxu0 0.0
  %2170 = vmatmul.mubr.f32.gmra.mxu0 %v2054
  %v2171 = vpop.f32.mrf.mxu0
  %v2172 = vadd.f32 0.0, %v2171
  %v2173 = vpop.f32.mrf.mxu0
  %2174 = vmatprep.mubr.f32.mxu0 0.0
  %2175 = vmatmul.mubr.f32.gmra.mxu0 %v2057
  %v2176 = vpop.f32.mrf.mxu0
  %v2177 = vadd.f32 0.0, %v2176
  %v2178 = vpop.f32.mrf.mxu0
  %2179 = vmatprep.mubr.f32.mxu0 0.0
  %2180 = vmatmul.mubr.f32.gmra.mxu0 %v2060
  %v2181 = vpop.f32.mrf.mxu0
  %v2182 = vadd.f32 0.0, %v2181
  %v2183 = vpop.f32.mrf.mxu0
  %2184 = vmatprep.mubr.f32.mxu0 0.0
  %2185 = vmatmul.mubr.f32.gmra.mxu0 %v2063
  %v2186 = vpop.f32.mrf.mxu0
  %v2187 = vadd.f32 0.0, %v2186
  %v2188 = vpop.f32.mrf.mxu0
  %2189 = vmatprep.mubr.f32.mxu0 0.0
  %2190 = vmatmul.mubr.f32.gmra.mxu0 %v2066
  %v2191 = vpop.f32.mrf.mxu0
  %v2192 = vadd.f32 0.0, %v2191
  %v2193 = vpop.f32.mrf.mxu0
  %2194 = vmatprep.mubr.f32.mxu0 0.0
  %2195 = vmatmul.mubr.f32.gmra.mxu0 %v2069
  %v2196 = vpop.f32.mrf.mxu0
  %v2197 = vadd.f32 0.0, %v2196
  %v2198 = vpop.f32.mrf.mxu0
  %2199 = vmatprep.mubr.f32.mxu0 0.0
  %2200 = vmatmul.mubr.f32.gmra.mxu0 %v2072
  %v2201 = vpop.f32.mrf.mxu0
  %v2202 = vadd.f32 0.0, %v2201
  %v2203 = vpop.f32.mrf.mxu0
  %2204 = vmatprep.mubr.f32.mxu0 0.0
  %2205 = vmatmul.mubr.f32.gmra.mxu0 %v2075
  %v2206 = vpop.f32.mrf.mxu0
  %v2207 = vadd.f32 0.0, %v2206
  %v2208 = vpop.f32.mrf.mxu0
  %2209 = vmatprep.mubr.f32.mxu0 0.0
  %2210 = vmatmul.mubr.f32.gmra.mxu0 %v2078
  %v2211 = vpop.f32.mrf.mxu0
  %v2212 = vadd.f32 0.0, %v2211
  %v2213 = vpop.f32.mrf.mxu0
  %2214 = vmatprep.mubr.f32.mxu0 0.0
  %2215 = vmatmul.mubr.f32.gmra.mxu0 %v2081
  %v2216 = vpop.f32.mrf.mxu0
  %v2217 = vadd.f32 0.0, %v2216
  %v2218 = vpop.f32.mrf.mxu0
  %2219 = vmatprep.mubr.f32.mxu0 0.0
  %2220 = vmatmul.mubr.f32.gmra.mxu0 %v2084
  %v2221 = vpop.f32.mrf.mxu0
  %v2222 = vadd.f32 0.0, %v2221
  %v2223 = vpop.f32.mrf.mxu0
  %2224 = vmatprep.mubr.f32.mxu0 0.0
  %2225 = vmatmul.mubr.f32.gmra.mxu0 %v2087
  %v2226 = vpop.f32.mrf.mxu0
  %v2227 = vadd.f32 0.0, %v2226
  %v2228 = vpop.f32.mrf.mxu0
  %2229 = vmatprep.mubr.f32.mxu0 0.0
  %2230 = vmatmul.mubr.f32.gmra.mxu0 %v2090
  %v2231 = vpop.f32.mrf.mxu0
  %v2232 = vadd.f32 0.0, %v2231
  %v2233 = vpop.f32.mrf.mxu0
  %2234 = vmatprep.mubr.f32.mxu0 0.0
  %2235 = vmatmul.mubr.f32.gmra.mxu0 %v2093
  %v2236 = vpop.f32.mrf.mxu0
  %v2237 = vadd.f32 0.0, %v2236
  %v2238 = vpop.f32.mrf.mxu0
  %2239 = vdwg.mxu0
  %v2240 = vadd.f32 %v1934, %v2162
  %v2241 = vadd.f32 %v1939, %v2167
  %v2242 = vadd.f32 %v1944, %v2172
  %v2243 = vadd.f32 %v1949, %v2177
  %v2244 = vadd.f32 %v1954, %v2182
  %v2245 = vadd.f32 %v1959, %v2187
  %v2246 = vadd.f32 %v1964, %v2192
  %v2247 = vadd.f32 %v1969, %v2197
  %v2248 = vadd.f32 %v1974, %v2202
  %v2249 = vadd.f32 %v1979, %v2207
  %v2250 = vadd.f32 %v1984, %v2212
  %v2251 = vadd.f32 %v1989, %v2217
  %v2252 = vadd.f32 %v1994, %v2222
  %v2253 = vadd.f32 %v1999, %v2227
  %v2254 = vadd.f32 %v2004, %v2232
  %v2255 = vadd.f32 %v2009, %v2237
  %vm2256 = vcmask 261120
  %v2257 = vsel %vm2256, %v2240, 0.0
  %v2258 = vsel %vm2256, %v2241, 0.0
  %v2259 = vadd.f32 %v2257, %v2258
  %v2260 = vsel %vm2256, %v2242, 0.0
  %v2261 = vadd.f32 %v2259, %v2260
  %v2262 = vsel %vm2256, %v2243, 0.0
  %v2263 = vadd.f32 %v2261, %v2262
  %v2264 = vsel %vm2256, %v2244, 0.0
  %v2265 = vadd.f32 %v2263, %v2264
  %v2266 = vsel %vm2256, %v2245, 0.0
  %v2267 = vadd.f32 %v2265, %v2266
  %v2268 = vsel %vm2256, %v2246, 0.0
  %v2269 = vadd.f32 %v2267, %v2268
  %v2270 = vsel %vm2256, %v2247, 0.0
  %v2271 = vadd.f32 %v2269, %v2270
  %v2272 = vsel %vm2256, %v2248, 0.0
  %v2273 = vadd.f32 %v2271, %v2272
  %v2274 = vsel %vm2256, %v2249, 0.0
  %v2275 = vadd.f32 %v2273, %v2274
  %v2276 = vsel %vm2256, %v2250, 0.0
  %v2277 = vadd.f32 %v2275, %v2276
  %v2278 = vsel %vm2256, %v2251, 0.0
  %v2279 = vadd.f32 %v2277, %v2278
  %v2280 = vsel %vm2256, %v2252, 0.0
  %v2281 = vadd.f32 %v2279, %v2280
  %v2282 = vsel %vm2256, %v2253, 0.0
  %v2283 = vadd.f32 %v2281, %v2282
  %v2284 = vsel %vm2256, %v2254, 0.0
  %v2285 = vadd.f32 %v2283, %v2284
  %v2286 = vsel %vm2256, %v2255, 0.0
  %v2287 = vadd.f32 %v2285, %v2286
  %v2288 = vrot.slane %v2287, 4
  %v2289 = vadd.f32 %v2287, %v2288
  %v2290 = vrot.slane %v2289, 2
  %v2291 = vadd.f32 %v2289, %v2290
  %v2292 = vrot.slane %v2291, 1
  %v2293 = vadd.f32 %v2291, %v2292
  %v2294 = vmul.f32 %v2293, 0.0078125
  %v2295 = vmul.f32 %v2240, %v2240
  %v2296 = vmul.f32 %v2241, %v2241
  %v2297 = vmul.f32 %v2242, %v2242
  %v2298 = vmul.f32 %v2243, %v2243
  %v2299 = vmul.f32 %v2244, %v2244
  %v2300 = vmul.f32 %v2245, %v2245
  %v2301 = vmul.f32 %v2246, %v2246
  %v2302 = vmul.f32 %v2247, %v2247
  %v2303 = vmul.f32 %v2248, %v2248
  %v2304 = vmul.f32 %v2249, %v2249
  %v2305 = vmul.f32 %v2250, %v2250
  %v2306 = vmul.f32 %v2251, %v2251
  %v2307 = vmul.f32 %v2252, %v2252
  %v2308 = vmul.f32 %v2253, %v2253
  %v2309 = vmul.f32 %v2254, %v2254
  %v2310 = vmul.f32 %v2255, %v2255
  %v2311 = vsel %vm2256, %v2295, 0.0
  %v2312 = vsel %vm2256, %v2296, 0.0
  %v2313 = vadd.f32 %v2311, %v2312
  %v2314 = vsel %vm2256, %v2297, 0.0
  %v2315 = vadd.f32 %v2313, %v2314
  %v2316 = vsel %vm2256, %v2298, 0.0
  %v2317 = vadd.f32 %v2315, %v2316
  %v2318 = vsel %vm2256, %v2299, 0.0
  %v2319 = vadd.f32 %v2317, %v2318
  %v2320 = vsel %vm2256, %v2300, 0.0
  %v2321 = vadd.f32 %v2319, %v2320
  %v2322 = vsel %vm2256, %v2301, 0.0
  %v2323 = vadd.f32 %v2321, %v2322
  %v2324 = vsel %vm2256, %v2302, 0.0
  %v2325 = vadd.f32 %v2323, %v2324
  %v2326 = vsel %vm2256, %v2303, 0.0
  %v2327 = vadd.f32 %v2325, %v2326
  %v2328 = vsel %vm2256, %v2304, 0.0
  %v2329 = vadd.f32 %v2327, %v2328
  %v2330 = vsel %vm2256, %v2305, 0.0
  %v2331 = vadd.f32 %v2329, %v2330
  %v2332 = vsel %vm2256, %v2306, 0.0
  %v2333 = vadd.f32 %v2331, %v2332
  %v2334 = vsel %vm2256, %v2307, 0.0
  %v2335 = vadd.f32 %v2333, %v2334
  %v2336 = vsel %vm2256, %v2308, 0.0
  %v2337 = vadd.f32 %v2335, %v2336
  %v2338 = vsel %vm2256, %v2309, 0.0
  %v2339 = vadd.f32 %v2337, %v2338
  %v2340 = vsel %vm2256, %v2310, 0.0
  %v2341 = vadd.f32 %v2339, %v2340
  %v2342 = vrot.slane %v2341, 4
  %v2343 = vadd.f32 %v2341, %v2342
  %v2344 = vrot.slane %v2343, 2
  %v2345 = vadd.f32 %v2343, %v2344
  %v2346 = vrot.slane %v2345, 1
  %v2347 = vadd.f32 %v2345, %v2346
  %v2348 = vmul.f32 %v2347, 0.0078125
  %v2349 = vmul.f32 %v2294, %v2294
  %v2350 = vsub.f32 %v2348, %v2349
  %v2351 = vld [vmem:[%s5] sm:$0x1]
  %v2352 = vadd.f32 %v2350, 1e-05
  %v2353 = vrsqrt.pop %v2352
  %v2354 = vmul.f32 %v2351, %v2353
  %v2356 = vlaneseq
  %v2357 = vshrl.u32 %v2356, 7
  %v2358 = vsub.s32 0, %v2357
  %v2359 = vrot.slane %v2354, %v2358
  %v2361 = vmul.f32 %v2359, %v2240
  %v2362 = vmul.f32 %v2359, %v2241
  %v2363 = vmul.f32 %v2359, %v2242
  %v2364 = vmul.f32 %v2359, %v2243
  %v2365 = vmul.f32 %v2359, %v2244
  %v2366 = vmul.f32 %v2359, %v2245
  %v2367 = vmul.f32 %v2359, %v2246
  %v2368 = vmul.f32 %v2359, %v2247
  %v2369 = vmul.f32 %v2359, %v2248
  %v2370 = vmul.f32 %v2359, %v2249
  %v2371 = vmul.f32 %v2359, %v2250
  %v2372 = vmul.f32 %v2359, %v2251
  %v2373 = vmul.f32 %v2359, %v2252
  %v2374 = vmul.f32 %v2359, %v2253
  %v2375 = vmul.f32 %v2359, %v2254
  %v2376 = vmul.f32 %v2359, %v2255
  %v2377 = vld [vmem:[%s6] sm:$0x1]
  %v2378 = vmul.f32 %v2354, %v2294
  %v2379 = vsub.f32 %v2377, %v2378
  %v2381 = vlaneseq
  %v2382 = vshrl.u32 %v2381, 7
  %v2383 = vsub.s32 0, %v2382
  %v2384 = vrot.slane %v2379, %v2383
  %v2386 = vadd.f32 %v2361, %v2384
  %v2387 = vadd.f32 %v2362, %v2384
  %v2388 = vadd.f32 %v2363, %v2384
  %v2389 = vadd.f32 %v2364, %v2384
  %v2390 = vadd.f32 %v2365, %v2384
  %v2391 = vadd.f32 %v2366, %v2384
  %v2392 = vadd.f32 %v2367, %v2384
  %v2393 = vadd.f32 %v2368, %v2384
  %v2394 = vadd.f32 %v2369, %v2384
  %v2395 = vadd.f32 %v2370, %v2384
  %v2396 = vadd.f32 %v2371, %v2384
  %v2397 = vadd.f32 %v2372, %v2384
  %v2398 = vadd.f32 %v2373, %v2384
  %v2399 = vadd.f32 %v2374, %v2384
  %v2400 = vadd.f32 %v2375, %v2384
  %v2401 = vadd.f32 %v2376, %v2384
  %vm2402 = vcmp.gt.f32.partialorder %v2386, 0.0
  %vm2403 = vcmp.gt.f32.partialorder %v2387, 0.0
  %vm2404 = vcmp.gt.f32.partialorder %v2388, 0.0
  %vm2405 = vcmp.gt.f32.partialorder %v2389, 0.0
  %vm2406 = vcmp.gt.f32.partialorder %v2390, 0.0
  %vm2407 = vcmp.gt.f32.partialorder %v2391, 0.0
  %vm2408 = vcmp.gt.f32.partialorder %v2392, 0.0
  %vm2409 = vcmp.gt.f32.partialorder %v2393, 0.0
  %vm2410 = vcmp.gt.f32.partialorder %v2394, 0.0
  %vm2411 = vcmp.gt.f32.partialorder %v2395, 0.0
  %vm2412 = vcmp.gt.f32.partialorder %v2396, 0.0
  %vm2413 = vcmp.gt.f32.partialorder %v2397, 0.0
  %vm2414 = vcmp.gt.f32.partialorder %v2398, 0.0
  %vm2415 = vcmp.gt.f32.partialorder %v2399, 0.0
  %vm2416 = vcmp.gt.f32.partialorder %v2400, 0.0
  %vm2417 = vcmp.gt.f32.partialorder %v2401, 0.0
  %v2418 = vmul.f32 %v2386, 0.01
  %v2419 = vmul.f32 %v2387, 0.01
  %v2420 = vmul.f32 %v2388, 0.01
  %v2421 = vmul.f32 %v2389, 0.01
  %v2422 = vmul.f32 %v2390, 0.01
  %v2423 = vmul.f32 %v2391, 0.01
  %v2424 = vmul.f32 %v2392, 0.01
  %v2425 = vmul.f32 %v2393, 0.01
  %v2426 = vmul.f32 %v2394, 0.01
  %v2427 = vmul.f32 %v2395, 0.01
  %v2428 = vmul.f32 %v2396, 0.01
  %v2429 = vmul.f32 %v2397, 0.01
  %v2430 = vmul.f32 %v2398, 0.01
  %v2431 = vmul.f32 %v2399, 0.01
  %v2432 = vmul.f32 %v2400, 0.01
  %v2433 = vmul.f32 %v2401, 0.01
  %v2434 = vsel %vm2402, %v2386, %v2418
  %v2435 = vsel %vm2403, %v2387, %v2419
  %v2436 = vsel %vm2404, %v2388, %v2420
  %v2437 = vsel %vm2405, %v2389, %v2421
  %v2438 = vsel %vm2406, %v2390, %v2422
  %v2439 = vsel %vm2407, %v2391, %v2423
  %v2440 = vsel %vm2408, %v2392, %v2424
  %v2441 = vsel %vm2409, %v2393, %v2425
  %v2442 = vsel %vm2410, %v2394, %v2426
  %v2443 = vsel %vm2411, %v2395, %v2427
  %v2444 = vsel %vm2412, %v2396, %v2428
  %v2445 = vsel %vm2413, %v2397, %v2429
  %v2446 = vsel %vm2414, %v2398, %v2430
  %v2447 = vsel %vm2415, %v2399, %v2431
  %v2448 = vsel %vm2416, %v2400, %v2432
  %v2449 = vsel %vm2417, %v2401, %v2433
  %2450 = vst.msk [vmem:[#allocation3] sm:$0xff] %vm2256, %v2434
  %2451 = vst.msk [vmem:[#allocation3 + $0x8] sm:$0xff] %vm2256, %v2435
  %2452 = vst.msk [vmem:[#allocation3 + $0x10] sm:$0xff] %vm2256, %v2436
  %2453 = vst.msk [vmem:[#allocation3 + $0x18] sm:$0xff] %vm2256, %v2437
  %2454 = vst.msk [vmem:[#allocation3 + $0x20] sm:$0xff] %vm2256, %v2438
  %2455 = vst.msk [vmem:[#allocation3 + $0x28] sm:$0xff] %vm2256, %v2439
  %2456 = vst.msk [vmem:[#allocation3 + $0x30] sm:$0xff] %vm2256, %v2440
  %2457 = vst.msk [vmem:[#allocation3 + $0x38] sm:$0xff] %vm2256, %v2441
  %2458 = vst.msk [vmem:[#allocation3 + $0x40] sm:$0xff] %vm2256, %v2442
  %2459 = vst.msk [vmem:[#allocation3 + $0x48] sm:$0xff] %vm2256, %v2443
  %2460 = vst.msk [vmem:[#allocation3 + $0x50] sm:$0xff] %vm2256, %v2444
  %2461 = vst.msk [vmem:[#allocation3 + $0x58] sm:$0xff] %vm2256, %v2445
  %2462 = vst.msk [vmem:[#allocation3 + $0x60] sm:$0xff] %vm2256, %v2446
  %2463 = vst.msk [vmem:[#allocation3 + $0x68] sm:$0xff] %vm2256, %v2447
  %2464 = vst.msk [vmem:[#allocation3 + $0x70] sm:$0xff] %vm2256, %v2448
  %2465 = vst.msk [vmem:[#allocation3 + $0x78] sm:$0xff] %vm2256, %v2449
  %s2466 = scalar_lea.vmem [#allocation3], 1
  %v2467 = vld [vmem:[%s2466] ss:$2 sm:$0xff]
  %s2468 = scalar_lea.vmem [#allocation3], 17
  %v2469 = vld [vmem:[%s2468] ss:$2 sm:$0xff]
  %s2470 = scalar_lea.vmem [#allocation3], 33
  %v2471 = vld [vmem:[%s2470] ss:$2 sm:$0xff]
  %s2472 = scalar_lea.vmem [#allocation3], 49
  %v2473 = vld [vmem:[%s2472] ss:$2 sm:$0xff]
  %s2474 = scalar_lea.vmem [#allocation3], 65
  %v2475 = vld [vmem:[%s2474] ss:$2 sm:$0xff]
  %s2476 = scalar_lea.vmem [#allocation3], 81
  %v2477 = vld [vmem:[%s2476] ss:$2 sm:$0xff]
  %s2478 = scalar_lea.vmem [#allocation3], 97
  %v2479 = vld [vmem:[%s2478] ss:$2 sm:$0xff]
  %s2480 = scalar_lea.vmem [#allocation3], 113
  %v2481 = vld [vmem:[%s2480] ss:$2 sm:$0xff]
  %v2483 = vrot.slane %v2473, 7
  %v2488 = vrot.slane %v2467, 7
  %v2489 = vrot.slane %v2469, 7
  %v2490 = vsel %vm571, %v2488, %v2489
  %v2491 = vrot.slane %v2471, 7
  %v2492 = vsel %vm571, %v2489, %v2491
  %v2493 = vsel %vm571, %v2491, %v2483
  %v2496 = vrot.slane %v2481, 7
  %v2501 = vrot.slane %v2475, 7
  %v2502 = vrot.slane %v2477, 7
  %v2503 = vsel %vm571, %v2501, %v2502
  %v2504 = vrot.slane %v2479, 7
  %v2505 = vsel %vm571, %v2502, %v2504
  %v2506 = vsel %vm571, %v2504, %v2496
  %v2508 = vsel %vm571, %v2483, %v2488
  %v2509 = vsel %vm571, %v2496, %v2501
  %v2510 = vld [vmem:[%s7 + $0x20] sm:$0xf]
  %v2511 = vld [vmem:[%s7 + $0x24] sm:$0xf]
  %v2512 = vld [vmem:[%s7 + $0x28] sm:$0xf]
  %v2513 = vld [vmem:[%s7 + $0x2c] sm:$0xf]
  %v2514 = vunpack.c.l.bf16 %v2510
  %v2515 = vunpack.c.l.bf16 %v2511
  %v2516 = vunpack.c.l.bf16 %v2512
  %v2517 = vunpack.c.l.bf16 %v2513
  %v2518 = vld [vmem:[%s7] sm:$0xf]
  %v2519 = vld [vmem:[%s7 + $0x4] sm:$0xf]
  %v2520 = vld [vmem:[%s7 + $0x8] sm:$0xf]
  %v2521 = vld [vmem:[%s7 + $0xc] sm:$0xf]
  %v2522 = vunpack.c.l.bf16 %v2518
  %v2523 = vunpack.c.l.bf16 %v2519
  %v2524 = vunpack.c.l.bf16 %v2520
  %v2525 = vunpack.c.l.bf16 %v2521
  %v2527 = vsel %vm2256, %v2508, 0
  %v2529 = vsel %vm2256, %v2490, 0
  %v2531 = vsel %vm2256, %v2492, 0
  %v2533 = vsel %vm2256, %v2493, 0
  %v2536 = vsel %vm2256, %v2509, 0
  %v2538 = vsel %vm2256, %v2503, 0
  %v2540 = vsel %vm2256, %v2505, 0
  %v2542 = vsel %vm2256, %v2506, 0
  %2544 = vmatprep.subr.mxu0 0.0
  %2545 = vmatpush1.msra.mxu0 0.0
  %2546 = vmatprep.subr.mxu0 0.0
  %2547 = vmatpush1.msra.mxu0 0.0
  %2548 = vmatprep.subr.mxu0 0.0
  %2549 = vmatpush1.msra.mxu0 0.0
  %2550 = vmatprep.subr.mxu0 0.0
  %2551 = vmatpush1.msra.mxu0 0.0
  %2552 = vmatprep.subr.mxu0 0.0
  %2553 = vmatpush1.msra.mxu0 0.0
  %2554 = vmatprep.subr.mxu0 0.0
  %2555 = vmatpush1.msra.mxu0 0.0
  %2556 = vmatprep.subr.mxu0 0.0
  %2557 = vmatpush1.msra.mxu0 0.0
  %2558 = vmatprep.subr.mxu0 0.0
  %2559 = vmatpush1.msra.mxu0 0.0
  %2560 = vmatprep.subr.mxu0 0.0
  %2561 = vmatpush1.msra.mxu0 0.0
  %2562 = vmatprep.subr.mxu0 0.0
  %2563 = vmatpush1.msra.mxu0 0.0
  %2564 = vmatprep.subr.mxu0 0.0
  %2565 = vmatpush1.msra.mxu0 0.0
  %2566 = vmatprep.subr.mxu0 0.0
  %2567 = vmatpush1.msra.mxu0 0.0
  %2568 = vmatprep.subr.mxu0 0.0
  %2569 = vmatpush1.msra.mxu0 %v2525
  %2570 = vmatprep.subr.mxu0 0.0
  %2571 = vmatpush1.msra.mxu0 %v2524
  %2572 = vmatprep.subr.mxu0 0.0
  %2573 = vmatpush1.msra.mxu0 %v2523
  %2574 = vmatprep.subr.mxu0 0.0
  %2575 = vmatpush1.msra.mxu0 %v2522
  %2576 = vmatprep.subr.mxu0 0.0
  %2577 = vmatpush2.msra.mxu0 0.0
  %2578 = vmatprep.subr.mxu0 0.0
  %2579 = vmatpush2.msra.mxu0 0.0
  %2580 = vmatprep.subr.mxu0 0.0
  %2581 = vmatpush2.msra.mxu0 0.0
  %2582 = vmatprep.subr.mxu0 0.0
  %2583 = vmatpush2.msra.mxu0 0.0
  %2584 = vmatprep.subr.mxu0 0.0
  %2585 = vmatpush2.msra.mxu0 0.0
  %2586 = vmatprep.subr.mxu0 0.0
  %2587 = vmatpush2.msra.mxu0 0.0
  %2588 = vmatprep.subr.mxu0 0.0
  %2589 = vmatpush2.msra.mxu0 0.0
  %2590 = vmatprep.subr.mxu0 0.0
  %2591 = vmatpush2.msra.mxu0 0.0
  %2592 = vmatprep.subr.mxu0 0.0
  %2593 = vmatpush2.msra.mxu0 0.0
  %2594 = vmatprep.subr.mxu0 0.0
  %2595 = vmatpush2.msra.mxu0 0.0
  %2596 = vmatprep.subr.mxu0 0.0
  %2597 = vmatpush2.msra.mxu0 0.0
  %2598 = vmatprep.subr.mxu0 0.0
  %2599 = vmatpush2.msra.mxu0 0.0
  %2600 = vmatprep.subr.mxu0 0.0
  %2601 = vmatpush2.msra.mxu0 0.0
  %2602 = vmatprep.subr.mxu0 0.0
  %2603 = vmatpush2.msra.mxu0 0.0
  %2604 = vmatprep.subr.mxu0 0.0
  %2605 = vmatpush2.msra.mxu0 0.0
  %2606 = vmatprep.subr.mxu0 0.0
  %2607 = vmatpush2.msra.mxu0 0.0
  %2608 = vmatprep.mubr.f32.mxu0 0.0
  %2609 = vmatmul.mubr.f32.gmra.mxu0 %v2527
  %v2610 = vpop.f32.mrf.mxu0
  %v2611 = vadd.f32 0.0, %v2610
  %v2612 = vpop.f32.mrf.mxu0
  %2613 = vmatprep.mubr.f32.mxu0 0.0
  %2614 = vmatmul.mubr.f32.gmra.mxu0 %v2529
  %v2615 = vpop.f32.mrf.mxu0
  %v2616 = vadd.f32 0.0, %v2615
  %v2617 = vpop.f32.mrf.mxu0
  %2618 = vmatprep.mubr.f32.mxu0 0.0
  %2619 = vmatmul.mubr.f32.gmra.mxu0 %v2531
  %v2620 = vpop.f32.mrf.mxu0
  %v2621 = vadd.f32 0.0, %v2620
  %v2622 = vpop.f32.mrf.mxu0
  %2623 = vmatprep.mubr.f32.mxu0 0.0
  %2624 = vmatmul.mubr.f32.gmra.mxu0 %v2533
  %v2625 = vpop.f32.mrf.mxu0
  %v2626 = vadd.f32 0.0, %v2625
  %v2627 = vpop.f32.mrf.mxu0
  %2628 = vmatprep.mubr.f32.mxu0 0.0
  %2629 = vmatmul.mubr.f32.gmra.mxu0 %v2536
  %v2630 = vpop.f32.mrf.mxu0
  %v2631 = vadd.f32 0.0, %v2630
  %v2632 = vpop.f32.mrf.mxu0
  %2633 = vmatprep.mubr.f32.mxu0 0.0
  %2634 = vmatmul.mubr.f32.gmra.mxu0 %v2538
  %v2635 = vpop.f32.mrf.mxu0
  %v2636 = vadd.f32 0.0, %v2635
  %v2637 = vpop.f32.mrf.mxu0
  %2638 = vmatprep.mubr.f32.mxu0 0.0
  %2639 = vmatmul.mubr.f32.gmra.mxu0 %v2540
  %v2640 = vpop.f32.mrf.mxu0
  %v2641 = vadd.f32 0.0, %v2640
  %v2642 = vpop.f32.mrf.mxu0
  %2643 = vmatprep.mubr.f32.mxu0 0.0
  %2644 = vmatmul.mubr.f32.gmra.mxu0 %v2542
  %v2645 = vpop.f32.mrf.mxu0
  %v2646 = vadd.f32 0.0, %v2645
  %v2647 = vpop.f32.mrf.mxu0
  %2648 = vdwg.mxu0
  %v2649 = vsel %vm2256, %v2467, 0
  %v2651 = vsel %vm2256, %v2469, 0
  %v2653 = vsel %vm2256, %v2471, 0
  %v2655 = vsel %vm2256, %v2473, 0
  %v2657 = vsel %vm2256, %v2475, 0
  %v2659 = vsel %vm2256, %v2477, 0
  %v2661 = vsel %vm2256, %v2479, 0
  %v2663 = vsel %vm2256, %v2481, 0
  %2665 = vmatprep.subr.mxu0 0.0
  %2666 = vmatpush1.msra.mxu0 0.0
  %2667 = vmatprep.subr.mxu0 0.0
  %2668 = vmatpush1.msra.mxu0 0.0
  %2669 = vmatprep.subr.mxu0 0.0
  %2670 = vmatpush1.msra.mxu0 0.0
  %2671 = vmatprep.subr.mxu0 0.0
  %2672 = vmatpush1.msra.mxu0 0.0
  %2673 = vmatprep.subr.mxu0 0.0
  %2674 = vmatpush1.msra.mxu0 0.0
  %2675 = vmatprep.subr.mxu0 0.0
  %2676 = vmatpush1.msra.mxu0 0.0
  %2677 = vmatprep.subr.mxu0 0.0
  %2678 = vmatpush1.msra.mxu0 0.0
  %2679 = vmatprep.subr.mxu0 0.0
  %2680 = vmatpush1.msra.mxu0 0.0
  %2681 = vmatprep.subr.mxu0 0.0
  %2682 = vmatpush1.msra.mxu0 0.0
  %2683 = vmatprep.subr.mxu0 0.0
  %2684 = vmatpush1.msra.mxu0 0.0
  %2685 = vmatprep.subr.mxu0 0.0
  %2686 = vmatpush1.msra.mxu0 0.0
  %2687 = vmatprep.subr.mxu0 0.0
  %2688 = vmatpush1.msra.mxu0 0.0
  %2689 = vmatprep.subr.mxu0 0.0
  %2690 = vmatpush1.msra.mxu0 %v2517
  %2691 = vmatprep.subr.mxu0 0.0
  %2692 = vmatpush1.msra.mxu0 %v2516
  %2693 = vmatprep.subr.mxu0 0.0
  %2694 = vmatpush1.msra.mxu0 %v2515
  %2695 = vmatprep.subr.mxu0 0.0
  %2696 = vmatpush1.msra.mxu0 %v2514
  %2697 = vmatprep.subr.mxu0 0.0
  %2698 = vmatpush2.msra.mxu0 0.0
  %2699 = vmatprep.subr.mxu0 0.0
  %2700 = vmatpush2.msra.mxu0 0.0
  %2701 = vmatprep.subr.mxu0 0.0
  %2702 = vmatpush2.msra.mxu0 0.0
  %2703 = vmatprep.subr.mxu0 0.0
  %2704 = vmatpush2.msra.mxu0 0.0
  %2705 = vmatprep.subr.mxu0 0.0
  %2706 = vmatpush2.msra.mxu0 0.0
  %2707 = vmatprep.subr.mxu0 0.0
  %2708 = vmatpush2.msra.mxu0 0.0
  %2709 = vmatprep.subr.mxu0 0.0
  %2710 = vmatpush2.msra.mxu0 0.0
  %2711 = vmatprep.subr.mxu0 0.0
  %2712 = vmatpush2.msra.mxu0 0.0
  %2713 = vmatprep.subr.mxu0 0.0
  %2714 = vmatpush2.msra.mxu0 0.0
  %2715 = vmatprep.subr.mxu0 0.0
  %2716 = vmatpush2.msra.mxu0 0.0
  %2717 = vmatprep.subr.mxu0 0.0
  %2718 = vmatpush2.msra.mxu0 0.0
  %2719 = vmatprep.subr.mxu0 0.0
  %2720 = vmatpush2.msra.mxu0 0.0
  %2721 = vmatprep.subr.mxu0 0.0
  %2722 = vmatpush2.msra.mxu0 0.0
  %2723 = vmatprep.subr.mxu0 0.0
  %2724 = vmatpush2.msra.mxu0 0.0
  %2725 = vmatprep.subr.mxu0 0.0
  %2726 = vmatpush2.msra.mxu0 0.0
  %2727 = vmatprep.subr.mxu0 0.0
  %2728 = vmatpush2.msra.mxu0 0.0
  %2729 = vmatprep.mubr.f32.mxu0 0.0
  %2730 = vmatmul.mubr.f32.gmra.mxu0 %v2649
  %v2731 = vpop.f32.mrf.mxu0
  %v2732 = vadd.f32 %v2611, %v2731
  %v2733 = vpop.f32.mrf.mxu0
  %2734 = vmatprep.mubr.f32.mxu0 0.0
  %2735 = vmatmul.mubr.f32.gmra.mxu0 %v2651
  %v2736 = vpop.f32.mrf.mxu0
  %v2737 = vadd.f32 %v2616, %v2736
  %v2738 = vpop.f32.mrf.mxu0
  %2739 = vmatprep.mubr.f32.mxu0 0.0
  %2740 = vmatmul.mubr.f32.gmra.mxu0 %v2653
  %v2741 = vpop.f32.mrf.mxu0
  %v2742 = vadd.f32 %v2621, %v2741
  %v2743 = vpop.f32.mrf.mxu0
  %2744 = vmatprep.mubr.f32.mxu0 0.0
  %2745 = vmatmul.mubr.f32.gmra.mxu0 %v2655
  %v2746 = vpop.f32.mrf.mxu0
  %v2747 = vadd.f32 %v2626, %v2746
  %v2748 = vpop.f32.mrf.mxu0
  %2749 = vmatprep.mubr.f32.mxu0 0.0
  %2750 = vmatmul.mubr.f32.gmra.mxu0 %v2657
  %v2751 = vpop.f32.mrf.mxu0
  %v2752 = vadd.f32 %v2631, %v2751
  %v2753 = vpop.f32.mrf.mxu0
  %2754 = vmatprep.mubr.f32.mxu0 0.0
  %2755 = vmatmul.mubr.f32.gmra.mxu0 %v2659
  %v2756 = vpop.f32.mrf.mxu0
  %v2757 = vadd.f32 %v2636, %v2756
  %v2758 = vpop.f32.mrf.mxu0
  %2759 = vmatprep.mubr.f32.mxu0 0.0
  %2760 = vmatmul.mubr.f32.gmra.mxu0 %v2661
  %v2761 = vpop.f32.mrf.mxu0
  %v2762 = vadd.f32 %v2641, %v2761
  %v2763 = vpop.f32.mrf.mxu0
  %2764 = vmatprep.mubr.f32.mxu0 0.0
  %2765 = vmatmul.mubr.f32.gmra.mxu0 %v2663
  %v2766 = vpop.f32.mrf.mxu0
  %v2767 = vadd.f32 %v2646, %v2766
  %v2768 = vpop.f32.mrf.mxu0
  %2769 = vdwg.mxu0
  %v2770 = vld [vmem:[#allocation3] ss:$2 sm:$0xff]
  %s2771 = scalar_lea.vmem [#allocation3], 16
  %v2772 = vld [vmem:[%s2771] ss:$2 sm:$0xff]
  %s2773 = scalar_lea.vmem [#allocation3], 32
  %v2774 = vld [vmem:[%s2773] ss:$2 sm:$0xff]
  %s2775 = scalar_lea.vmem [#allocation3], 48
  %v2776 = vld [vmem:[%s2775] ss:$2 sm:$0xff]
  %s2777 = scalar_lea.vmem [#allocation3], 64
  %v2778 = vld [vmem:[%s2777] ss:$2 sm:$0xff]
  %s2779 = scalar_lea.vmem [#allocation3], 80
  %v2780 = vld [vmem:[%s2779] ss:$2 sm:$0xff]
  %s2781 = scalar_lea.vmem [#allocation3], 96
  %v2782 = vld [vmem:[%s2781] ss:$2 sm:$0xff]
  %s2783 = scalar_lea.vmem [#allocation3], 112
  %v2784 = vld [vmem:[%s2783] ss:$2 sm:$0xff]
  %v2785 = vld [vmem:[%s7 + $0x10] sm:$0xf]
  %v2786 = vld [vmem:[%s7 + $0x14] sm:$0xf]
  %v2787 = vld [vmem:[%s7 + $0x18] sm:$0xf]
  %v2788 = vld [vmem:[%s7 + $0x1c] sm:$0xf]
  %v2789 = vunpack.c.l.bf16 %v2785
  %v2790 = vunpack.c.l.bf16 %v2786
  %v2791 = vunpack.c.l.bf16 %v2787
  %v2792 = vunpack.c.l.bf16 %v2788
  %v2794 = vsel %vm2256, %v2770, 0
  %v2797 = vsel %vm2256, %v2772, 0
  %v2800 = vsel %vm2256, %v2774, 0
  %v2803 = vsel %vm2256, %v2776, 0
  %v2806 = vsel %vm2256, %v2778, 0
  %v2809 = vsel %vm2256, %v2780, 0
  %v2812 = vsel %vm2256, %v2782, 0
  %v2815 = vsel %vm2256, %v2784, 0
  %2817 = vmatprep.subr.mxu0 0.0
  %2818 = vmatpush1.msra.mxu0 0.0
  %2819 = vmatprep.subr.mxu0 0.0
  %2820 = vmatpush1.msra.mxu0 0.0
  %2821 = vmatprep.subr.mxu0 0.0
  %2822 = vmatpush1.msra.mxu0 0.0
  %2823 = vmatprep.subr.mxu0 0.0
  %2824 = vmatpush1.msra.mxu0 0.0
  %2825 = vmatprep.subr.mxu0 0.0
  %2826 = vmatpush1.msra.mxu0 0.0
  %2827 = vmatprep.subr.mxu0 0.0
  %2828 = vmatpush1.msra.mxu0 0.0
  %2829 = vmatprep.subr.mxu0 0.0
  %2830 = vmatpush1.msra.mxu0 0.0
  %2831 = vmatprep.subr.mxu0 0.0
  %2832 = vmatpush1.msra.mxu0 0.0
  %2833 = vmatprep.subr.mxu0 0.0
  %2834 = vmatpush1.msra.mxu0 0.0
  %2835 = vmatprep.subr.mxu0 0.0
  %2836 = vmatpush1.msra.mxu0 0.0
  %2837 = vmatprep.subr.mxu0 0.0
  %2838 = vmatpush1.msra.mxu0 0.0
  %2839 = vmatprep.subr.mxu0 0.0
  %2840 = vmatpush1.msra.mxu0 0.0
  %2841 = vmatprep.subr.mxu0 0.0
  %2842 = vmatpush1.msra.mxu0 %v2792
  %2843 = vmatprep.subr.mxu0 0.0
  %2844 = vmatpush1.msra.mxu0 %v2791
  %2845 = vmatprep.subr.mxu0 0.0
  %2846 = vmatpush1.msra.mxu0 %v2790
  %2847 = vmatprep.subr.mxu0 0.0
  %2848 = vmatpush1.msra.mxu0 %v2789
  %2849 = vmatprep.subr.mxu0 0.0
  %2850 = vmatpush2.msra.mxu0 0.0
  %2851 = vmatprep.subr.mxu0 0.0
  %2852 = vmatpush2.msra.mxu0 0.0
  %2853 = vmatprep.subr.mxu0 0.0
  %2854 = vmatpush2.msra.mxu0 0.0
  %2855 = vmatprep.subr.mxu0 0.0
  %2856 = vmatpush2.msra.mxu0 0.0
  %2857 = vmatprep.subr.mxu0 0.0
  %2858 = vmatpush2.msra.mxu0 0.0
  %2859 = vmatprep.subr.mxu0 0.0
  %2860 = vmatpush2.msra.mxu0 0.0
  %2861 = vmatprep.subr.mxu0 0.0
  %2862 = vmatpush2.msra.mxu0 0.0
  %2863 = vmatprep.subr.mxu0 0.0
  %2864 = vmatpush2.msra.mxu0 0.0
  %2865 = vmatprep.subr.mxu0 0.0
  %2866 = vmatpush2.msra.mxu0 0.0
  %2867 = vmatprep.subr.mxu0 0.0
  %2868 = vmatpush2.msra.mxu0 0.0
  %2869 = vmatprep.subr.mxu0 0.0
  %2870 = vmatpush2.msra.mxu0 0.0
  %2871 = vmatprep.subr.mxu0 0.0
  %2872 = vmatpush2.msra.mxu0 0.0
  %2873 = vmatprep.subr.mxu0 0.0
  %2874 = vmatpush2.msra.mxu0 0.0
  %2875 = vmatprep.subr.mxu0 0.0
  %2876 = vmatpush2.msra.mxu0 0.0
  %2877 = vmatprep.subr.mxu0 0.0
  %2878 = vmatpush2.msra.mxu0 0.0
  %2879 = vmatprep.subr.mxu0 0.0
  %2880 = vmatpush2.msra.mxu0 0.0
  %2881 = vmatprep.mubr.f32.mxu0 0.0
  %2882 = vmatmul.mubr.f32.gmra.mxu0 %v2794
  %v2883 = vpop.f32.mrf.mxu0
  %v2884 = vadd.f32 0.0, %v2883
  %v2885 = vpop.f32.mrf.mxu0
  %2886 = vmatprep.mubr.f32.mxu0 0.0
  %2887 = vmatmul.mubr.f32.gmra.mxu0 %v2797
  %v2888 = vpop.f32.mrf.mxu0
  %v2889 = vadd.f32 0.0, %v2888
  %v2890 = vpop.f32.mrf.mxu0
  %2891 = vmatprep.mubr.f32.mxu0 0.0
  %2892 = vmatmul.mubr.f32.gmra.mxu0 %v2800
  %v2893 = vpop.f32.mrf.mxu0
  %v2894 = vadd.f32 0.0, %v2893
  %v2895 = vpop.f32.mrf.mxu0
  %2896 = vmatprep.mubr.f32.mxu0 0.0
  %2897 = vmatmul.mubr.f32.gmra.mxu0 %v2803
  %v2898 = vpop.f32.mrf.mxu0
  %v2899 = vadd.f32 0.0, %v2898
  %v2900 = vpop.f32.mrf.mxu0
  %2901 = vmatprep.mubr.f32.mxu0 0.0
  %2902 = vmatmul.mubr.f32.gmra.mxu0 %v2806
  %v2903 = vpop.f32.mrf.mxu0
  %v2904 = vadd.f32 0.0, %v2903
  %v2905 = vpop.f32.mrf.mxu0
  %2906 = vmatprep.mubr.f32.mxu0 0.0
  %2907 = vmatmul.mubr.f32.gmra.mxu0 %v2809
  %v2908 = vpop.f32.mrf.mxu0
  %v2909 = vadd.f32 0.0, %v2908
  %v2910 = vpop.f32.mrf.mxu0
  %2911 = vmatprep.mubr.f32.mxu0 0.0
  %2912 = vmatmul.mubr.f32.gmra.mxu0 %v2812
  %v2913 = vpop.f32.mrf.mxu0
  %v2914 = vadd.f32 0.0, %v2913
  %v2915 = vpop.f32.mrf.mxu0
  %2916 = vmatprep.mubr.f32.mxu0 0.0
  %2917 = vmatmul.mubr.f32.gmra.mxu0 %v2815
  %v2918 = vpop.f32.mrf.mxu0
  %v2919 = vadd.f32 0.0, %v2918
  %v2920 = vpop.f32.mrf.mxu0
  %2921 = vdwg.mxu0
  %v2922 = vadd.f32 %v2732, %v2884
  %v2923 = vadd.f32 %v2737, %v2889
  %v2924 = vadd.f32 %v2742, %v2894
  %v2925 = vadd.f32 %v2747, %v2899
  %v2926 = vadd.f32 %v2752, %v2904
  %v2927 = vadd.f32 %v2757, %v2909
  %v2928 = vadd.f32 %v2762, %v2914
  %v2929 = vadd.f32 %v2767, %v2919
  %vm2930 = vcmask 523264
  %v2931 = vsel %vm2930, %v2922, 0.0
  %v2932 = vsel %vm2930, %v2923, 0.0
  %v2933 = vadd.f32 %v2931, %v2932
  %v2934 = vsel %vm2930, %v2924, 0.0
  %v2935 = vadd.f32 %v2933, %v2934
  %v2936 = vsel %vm2930, %v2925, 0.0
  %v2937 = vadd.f32 %v2935, %v2936
  %v2938 = vsel %vm2930, %v2926, 0.0
  %v2939 = vadd.f32 %v2937, %v2938
  %v2940 = vsel %vm2930, %v2927, 0.0
  %v2941 = vadd.f32 %v2939, %v2940
  %v2942 = vsel %vm2930, %v2928, 0.0
  %v2943 = vadd.f32 %v2941, %v2942
  %v2944 = vsel %vm2930, %v2929, 0.0
  %v2945 = vadd.f32 %v2943, %v2944
  %v2946 = vrot.slane %v2945, 4
  %v2947 = vadd.f32 %v2945, %v2946
  %v2948 = vrot.slane %v2947, 2
  %v2949 = vadd.f32 %v2947, %v2948
  %v2950 = vrot.slane %v2949, 1
  %v2951 = vadd.f32 %v2949, %v2950
  %v2952 = vmul.f32 %v2951, 0.015625
  %v2953 = vmul.f32 %v2922, %v2922
  %v2954 = vmul.f32 %v2923, %v2923
  %v2955 = vmul.f32 %v2924, %v2924
  %v2956 = vmul.f32 %v2925, %v2925
  %v2957 = vmul.f32 %v2926, %v2926
  %v2958 = vmul.f32 %v2927, %v2927
  %v2959 = vmul.f32 %v2928, %v2928
  %v2960 = vmul.f32 %v2929, %v2929
  %v2961 = vsel %vm2930, %v2953, 0.0
  %v2962 = vsel %vm2930, %v2954, 0.0
  %v2963 = vadd.f32 %v2961, %v2962
  %v2964 = vsel %vm2930, %v2955, 0.0
  %v2965 = vadd.f32 %v2963, %v2964
  %v2966 = vsel %vm2930, %v2956, 0.0
  %v2967 = vadd.f32 %v2965, %v2966
  %v2968 = vsel %vm2930, %v2957, 0.0
  %v2969 = vadd.f32 %v2967, %v2968
  %v2970 = vsel %vm2930, %v2958, 0.0
  %v2971 = vadd.f32 %v2969, %v2970
  %v2972 = vsel %vm2930, %v2959, 0.0
  %v2973 = vadd.f32 %v2971, %v2972
  %v2974 = vsel %vm2930, %v2960, 0.0
  %v2975 = vadd.f32 %v2973, %v2974
  %v2976 = vrot.slane %v2975, 4
  %v2977 = vadd.f32 %v2975, %v2976
  %v2978 = vrot.slane %v2977, 2
  %v2979 = vadd.f32 %v2977, %v2978
  %v2980 = vrot.slane %v2979, 1
  %v2981 = vadd.f32 %v2979, %v2980
  %v2982 = vmul.f32 %v2981, 0.015625
  %v2983 = vmul.f32 %v2952, %v2952
  %v2984 = vsub.f32 %v2982, %v2983
  %v2985 = vld [vmem:[%s8] sm:$0x1]
  %v2986 = vadd.f32 %v2984, 1e-05
  %v2987 = vrsqrt.pop %v2986
  %v2988 = vmul.f32 %v2985, %v2987
  %v2990 = vlaneseq
  %v2991 = vshrl.u32 %v2990, 7
  %v2992 = vsub.s32 0, %v2991
  %v2993 = vrot.slane %v2988, %v2992
  %v2995 = vmul.f32 %v2993, %v2922
  %v2996 = vmul.f32 %v2993, %v2923
  %v2997 = vmul.f32 %v2993, %v2924
  %v2998 = vmul.f32 %v2993, %v2925
  %v2999 = vmul.f32 %v2993, %v2926
  %v3000 = vmul.f32 %v2993, %v2927
  %v3001 = vmul.f32 %v2993, %v2928
  %v3002 = vmul.f32 %v2993, %v2929
  %v3003 = vld [vmem:[%s9] sm:$0x1]
  %v3004 = vmul.f32 %v2988, %v2952
  %v3005 = vsub.f32 %v3003, %v3004
  %v3007 = vlaneseq
  %v3008 = vshrl.u32 %v3007, 7
  %v3009 = vsub.s32 0, %v3008
  %v3010 = vrot.slane %v3005, %v3009
  %v3012 = vadd.f32 %v2995, %v3010
  %v3013 = vadd.f32 %v2996, %v3010
  %v3014 = vadd.f32 %v2997, %v3010
  %v3015 = vadd.f32 %v2998, %v3010
  %v3016 = vadd.f32 %v2999, %v3010
  %v3017 = vadd.f32 %v3000, %v3010
  %v3018 = vadd.f32 %v3001, %v3010
  %v3019 = vadd.f32 %v3002, %v3010
  %vm3020 = vcmp.gt.f32.partialorder %v3012, 0.0
  %vm3021 = vcmp.gt.f32.partialorder %v3013, 0.0
  %vm3022 = vcmp.gt.f32.partialorder %v3014, 0.0
  %vm3023 = vcmp.gt.f32.partialorder %v3015, 0.0
  %vm3024 = vcmp.gt.f32.partialorder %v3016, 0.0
  %vm3025 = vcmp.gt.f32.partialorder %v3017, 0.0
  %vm3026 = vcmp.gt.f32.partialorder %v3018, 0.0
  %vm3027 = vcmp.gt.f32.partialorder %v3019, 0.0
  %v3028 = vmul.f32 %v3012, 0.01
  %v3029 = vmul.f32 %v3013, 0.01
  %v3030 = vmul.f32 %v3014, 0.01
  %v3031 = vmul.f32 %v3015, 0.01
  %v3032 = vmul.f32 %v3016, 0.01
  %v3033 = vmul.f32 %v3017, 0.01
  %v3034 = vmul.f32 %v3018, 0.01
  %v3035 = vmul.f32 %v3019, 0.01
  %v3036 = vsel %vm3020, %v3012, %v3028
  %v3037 = vsel %vm3021, %v3013, %v3029
  %v3038 = vsel %vm3022, %v3014, %v3030
  %v3039 = vsel %vm3023, %v3015, %v3031
  %v3040 = vsel %vm3024, %v3016, %v3032
  %v3041 = vsel %vm3025, %v3017, %v3033
  %v3042 = vsel %vm3026, %v3018, %v3034
  %v3043 = vsel %vm3027, %v3019, %v3035
  %3044 = vst.msk [vmem:[#allocation4] sm:$0xff] %vm2930, %v3036
  %3045 = vst.msk [vmem:[#allocation4 + $0x8] sm:$0xff] %vm2930, %v3037
  %3046 = vst.msk [vmem:[#allocation4 + $0x10] sm:$0xff] %vm2930, %v3038
  %3047 = vst.msk [vmem:[#allocation4 + $0x18] sm:$0xff] %vm2930, %v3039
  %3048 = vst.msk [vmem:[#allocation4 + $0x20] sm:$0xff] %vm2930, %v3040
  %3049 = vst.msk [vmem:[#allocation4 + $0x28] sm:$0xff] %vm2930, %v3041
  %3050 = vst.msk [vmem:[#allocation4 + $0x30] sm:$0xff] %vm2930, %v3042
  %3051 = vst.msk [vmem:[#allocation4 + $0x38] sm:$0xff] %vm2930, %v3043
  %s3052 = scalar_lea.vmem [#allocation4], 1
  %v3053 = vld [vmem:[%s3052] ss:$2 sm:$0xff]
  %s3054 = scalar_lea.vmem [#allocation4], 17
  %v3055 = vld [vmem:[%s3054] ss:$2 sm:$0xff]
  %s3056 = scalar_lea.vmem [#allocation4], 33
  %v3057 = vld [vmem:[%s3056] ss:$2 sm:$0xff]
  %s3058 = scalar_lea.vmem [#allocation4], 49
  %v3059 = vld [vmem:[%s3058] ss:$2 sm:$0xff]
  %v3061 = vrot.slane %v3055, 7
  %v3064 = vrot.slane %v3053, 7
  %v3065 = vsel %vm571, %v3064, %v3061
  %v3068 = vrot.slane %v3059, 7
  %v3071 = vrot.slane %v3057, 7
  %v3072 = vsel %vm571, %v3071, %v3068
  %v3074 = vsel %vm571, %v3061, %v3064
  %v3075 = vsel %vm571, %v3068, %v3071
  %v3076 = vld [vmem:[%s10 + $0x40] sm:$0xf]
  %v3077 = vld [vmem:[%s10 + $0x44] sm:$0xf]
  %v3078 = vld [vmem:[%s10 + $0x48] sm:$0xf]
  %v3079 = vld [vmem:[%s10 + $0x4c] sm:$0xf]
  %v3080 = vld [vmem:[%s10 + $0x50] sm:$0xf]
  %v3081 = vld [vmem:[%s10 + $0x54] sm:$0xf]
  %v3082 = vld [vmem:[%s10 + $0x58] sm:$0xf]
  %v3083 = vld [vmem:[%s10 + $0x5c] sm:$0xf]
  %v3084 = vunpack.c.l.bf16 %v3076
  %v3085 = vunpack.c.l.bf16 %v3077
  %v3086 = vunpack.c.l.bf16 %v3078
  %v3087 = vunpack.c.l.bf16 %v3079
  %v3088 = vunpack.c.l.bf16 %v3080
  %v3089 = vunpack.c.l.bf16 %v3081
  %v3090 = vunpack.c.l.bf16 %v3082
  %v3091 = vunpack.c.l.bf16 %v3083
  %v3092 = vld [vmem:[%s10] sm:$0xf]
  %v3093 = vld [vmem:[%s10 + $0x4] sm:$0xf]
  %v3094 = vld [vmem:[%s10 + $0x8] sm:$0xf]
  %v3095 = vld [vmem:[%s10 + $0xc] sm:$0xf]
  %v3096 = vld [vmem:[%s10 + $0x10] sm:$0xf]
  %v3097 = vld [vmem:[%s10 + $0x14] sm:$0xf]
  %v3098 = vld [vmem:[%s10 + $0x18] sm:$0xf]
  %v3099 = vld [vmem:[%s10 + $0x1c] sm:$0xf]
  %v3100 = vunpack.c.l.bf16 %v3092
  %v3101 = vunpack.c.l.bf16 %v3093
  %v3102 = vunpack.c.l.bf16 %v3094
  %v3103 = vunpack.c.l.bf16 %v3095
  %v3104 = vunpack.c.l.bf16 %v3096
  %v3105 = vunpack.c.l.bf16 %v3097
  %v3106 = vunpack.c.l.bf16 %v3098
  %v3107 = vunpack.c.l.bf16 %v3099
  %v3109 = vsel %vm2930, %v3074, 0
  %v3111 = vsel %vm2930, %v3065, 0
  %v3114 = vsel %vm2930, %v3075, 0
  %v3116 = vsel %vm2930, %v3072, 0
  %3118 = vmatprep.subr.mxu0 0.0
  %3119 = vmatpush1.msra.mxu0 0.0
  %3120 = vmatprep.subr.mxu0 0.0
  %3121 = vmatpush1.msra.mxu0 0.0
  %3122 = vmatprep.subr.mxu0 0.0
  %3123 = vmatpush1.msra.mxu0 0.0
  %3124 = vmatprep.subr.mxu0 0.0
  %3125 = vmatpush1.msra.mxu0 0.0
  %3126 = vmatprep.subr.mxu0 0.0
  %3127 = vmatpush1.msra.mxu0 0.0
  %3128 = vmatprep.subr.mxu0 0.0
  %3129 = vmatpush1.msra.mxu0 0.0
  %3130 = vmatprep.subr.mxu0 0.0
  %3131 = vmatpush1.msra.mxu0 0.0
  %3132 = vmatprep.subr.mxu0 0.0
  %3133 = vmatpush1.msra.mxu0 0.0
  %3134 = vmatprep.subr.mxu0 0.0
  %3135 = vmatpush1.msra.mxu0 %v3107
  %3136 = vmatprep.subr.mxu0 0.0
  %3137 = vmatpush1.msra.mxu0 %v3106
  %3138 = vmatprep.subr.mxu0 0.0
  %3139 = vmatpush1.msra.mxu0 %v3105
  %3140 = vmatprep.subr.mxu0 0.0
  %3141 = vmatpush1.msra.mxu0 %v3104
  %3142 = vmatprep.subr.mxu0 0.0
  %3143 = vmatpush1.msra.mxu0 %v3103
  %3144 = vmatprep.subr.mxu0 0.0
  %3145 = vmatpush1.msra.mxu0 %v3102
  %3146 = vmatprep.subr.mxu0 0.0
  %3147 = vmatpush1.msra.mxu0 %v3101
  %3148 = vmatprep.subr.mxu0 0.0
  %3149 = vmatpush1.msra.mxu0 %v3100
  %3150 = vmatprep.subr.mxu0 0.0
  %3151 = vmatpush2.msra.mxu0 0.0
  %3152 = vmatprep.subr.mxu0 0.0
  %3153 = vmatpush2.msra.mxu0 0.0
  %3154 = vmatprep.subr.mxu0 0.0
  %3155 = vmatpush2.msra.mxu0 0.0
  %3156 = vmatprep.subr.mxu0 0.0
  %3157 = vmatpush2.msra.mxu0 0.0
  %3158 = vmatprep.subr.mxu0 0.0
  %3159 = vmatpush2.msra.mxu0 0.0
  %3160 = vmatprep.subr.mxu0 0.0
  %3161 = vmatpush2.msra.mxu0 0.0
  %3162 = vmatprep.subr.mxu0 0.0
  %3163 = vmatpush2.msra.mxu0 0.0
  %3164 = vmatprep.subr.mxu0 0.0
  %3165 = vmatpush2.msra.mxu0 0.0
  %3166 = vmatprep.subr.mxu0 0.0
  %3167 = vmatpush2.msra.mxu0 0.0
  %3168 = vmatprep.subr.mxu0 0.0
  %3169 = vmatpush2.msra.mxu0 0.0
  %3170 = vmatprep.subr.mxu0 0.0
  %3171 = vmatpush2.msra.mxu0 0.0
  %3172 = vmatprep.subr.mxu0 0.0
  %3173 = vmatpush2.msra.mxu0 0.0
  %3174 = vmatprep.subr.mxu0 0.0
  %3175 = vmatpush2.msra.mxu0 0.0
  %3176 = vmatprep.subr.mxu0 0.0
  %3177 = vmatpush2.msra.mxu0 0.0
  %3178 = vmatprep.subr.mxu0 0.0
  %3179 = vmatpush2.msra.mxu0 0.0
  %3180 = vmatprep.subr.mxu0 0.0
  %3181 = vmatpush2.msra.mxu0 0.0
  %3182 = vmatprep.mubr.f32.mxu0 0.0
  %3183 = vmatmul.mubr.f32.gmra.mxu0 %v3109
  %v3184 = vpop.f32.mrf.mxu0
  %v3185 = vadd.f32 0.0, %v3184
  %v3186 = vpop.f32.mrf.mxu0
  %3187 = vmatprep.mubr.f32.mxu0 0.0
  %3188 = vmatmul.mubr.f32.gmra.mxu0 %v3111
  %v3189 = vpop.f32.mrf.mxu0
  %v3190 = vadd.f32 0.0, %v3189
  %v3191 = vpop.f32.mrf.mxu0
  %3192 = vmatprep.mubr.f32.mxu0 0.0
  %3193 = vmatmul.mubr.f32.gmra.mxu0 %v3114
  %v3194 = vpop.f32.mrf.mxu0
  %v3195 = vadd.f32 0.0, %v3194
  %v3196 = vpop.f32.mrf.mxu0
  %3197 = vmatprep.mubr.f32.mxu0 0.0
  %3198 = vmatmul.mubr.f32.gmra.mxu0 %v3116
  %v3199 = vpop.f32.mrf.mxu0
  %v3200 = vadd.f32 0.0, %v3199
  %v3201 = vpop.f32.mrf.mxu0
  %3202 = vdwg.mxu0
  %v3203 = vsel %vm2930, %v3053, 0
  %v3205 = vsel %vm2930, %v3055, 0
  %v3207 = vsel %vm2930, %v3057, 0
  %v3209 = vsel %vm2930, %v3059, 0
  %3211 = vmatprep.subr.mxu0 0.0
  %3212 = vmatpush1.msra.mxu0 0.0
  %3213 = vmatprep.subr.mxu0 0.0
  %3214 = vmatpush1.msra.mxu0 0.0
  %3215 = vmatprep.subr.mxu0 0.0
  %3216 = vmatpush1.msra.mxu0 0.0
  %3217 = vmatprep.subr.mxu0 0.0
  %3218 = vmatpush1.msra.mxu0 0.0
  %3219 = vmatprep.subr.mxu0 0.0
  %3220 = vmatpush1.msra.mxu0 0.0
  %3221 = vmatprep.subr.mxu0 0.0
  %3222 = vmatpush1.msra.mxu0 0.0
  %3223 = vmatprep.subr.mxu0 0.0
  %3224 = vmatpush1.msra.mxu0 0.0
  %3225 = vmatprep.subr.mxu0 0.0
  %3226 = vmatpush1.msra.mxu0 0.0
  %3227 = vmatprep.subr.mxu0 0.0
  %3228 = vmatpush1.msra.mxu0 %v3091
  %3229 = vmatprep.subr.mxu0 0.0
  %3230 = vmatpush1.msra.mxu0 %v3090
  %3231 = vmatprep.subr.mxu0 0.0
  %3232 = vmatpush1.msra.mxu0 %v3089
  %3233 = vmatprep.subr.mxu0 0.0
  %3234 = vmatpush1.msra.mxu0 %v3088
  %3235 = vmatprep.subr.mxu0 0.0
  %3236 = vmatpush1.msra.mxu0 %v3087
  %3237 = vmatprep.subr.mxu0 0.0
  %3238 = vmatpush1.msra.mxu0 %v3086
  %3239 = vmatprep.subr.mxu0 0.0
  %3240 = vmatpush1.msra.mxu0 %v3085
  %3241 = vmatprep.subr.mxu0 0.0
  %3242 = vmatpush1.msra.mxu0 %v3084
  %3243 = vmatprep.subr.mxu0 0.0
  %3244 = vmatpush2.msra.mxu0 0.0
  %3245 = vmatprep.subr.mxu0 0.0
  %3246 = vmatpush2.msra.mxu0 0.0
  %3247 = vmatprep.subr.mxu0 0.0
  %3248 = vmatpush2.msra.mxu0 0.0
  %3249 = vmatprep.subr.mxu0 0.0
  %3250 = vmatpush2.msra.mxu0 0.0
  %3251 = vmatprep.subr.mxu0 0.0
  %3252 = vmatpush2.msra.mxu0 0.0
  %3253 = vmatprep.subr.mxu0 0.0
  %3254 = vmatpush2.msra.mxu0 0.0
  %3255 = vmatprep.subr.mxu0 0.0
  %3256 = vmatpush2.msra.mxu0 0.0
  %3257 = vmatprep.subr.mxu0 0.0
  %3258 = vmatpush2.msra.mxu0 0.0
  %3259 = vmatprep.subr.mxu0 0.0
  %3260 = vmatpush2.msra.mxu0 0.0
  %3261 = vmatprep.subr.mxu0 0.0
  %3262 = vmatpush2.msra.mxu0 0.0
  %3263 = vmatprep.subr.mxu0 0.0
  %3264 = vmatpush2.msra.mxu0 0.0
  %3265 = vmatprep.subr.mxu0 0.0
  %3266 = vmatpush2.msra.mxu0 0.0
  %3267 = vmatprep.subr.mxu0 0.0
  %3268 = vmatpush2.msra.mxu0 0.0
  %3269 = vmatprep.subr.mxu0 0.0
  %3270 = vmatpush2.msra.mxu0 0.0
  %3271 = vmatprep.subr.mxu0 0.0
  %3272 = vmatpush2.msra.mxu0 0.0
  %3273 = vmatprep.subr.mxu0 0.0
  %3274 = vmatpush2.msra.mxu0 0.0
  %3275 = vmatprep.mubr.f32.mxu0 0.0
  %3276 = vmatmul.mubr.f32.gmra.mxu0 %v3203
  %v3277 = vpop.f32.mrf.mxu0
  %v3278 = vadd.f32 %v3185, %v3277
  %v3279 = vpop.f32.mrf.mxu0
  %3280 = vmatprep.mubr.f32.mxu0 0.0
  %3281 = vmatmul.mubr.f32.gmra.mxu0 %v3205
  %v3282 = vpop.f32.mrf.mxu0
  %v3283 = vadd.f32 %v3190, %v3282
  %v3284 = vpop.f32.mrf.mxu0
  %3285 = vmatprep.mubr.f32.mxu0 0.0
  %3286 = vmatmul.mubr.f32.gmra.mxu0 %v3207
  %v3287 = vpop.f32.mrf.mxu0
  %v3288 = vadd.f32 %v3195, %v3287
  %v3289 = vpop.f32.mrf.mxu0
  %3290 = vmatprep.mubr.f32.mxu0 0.0
  %3291 = vmatmul.mubr.f32.gmra.mxu0 %v3209
  %v3292 = vpop.f32.mrf.mxu0
  %v3293 = vadd.f32 %v3200, %v3292
  %v3294 = vpop.f32.mrf.mxu0
  %3295 = vdwg.mxu0
  %v3296 = vld [vmem:[#allocation4] ss:$2 sm:$0xff]
  %s3297 = scalar_lea.vmem [#allocation4], 16
  %v3298 = vld [vmem:[%s3297] ss:$2 sm:$0xff]
  %s3299 = scalar_lea.vmem [#allocation4], 32
  %v3300 = vld [vmem:[%s3299] ss:$2 sm:$0xff]
  %s3301 = scalar_lea.vmem [#allocation4], 48
  %v3302 = vld [vmem:[%s3301] ss:$2 sm:$0xff]
  %v3303 = vld [vmem:[%s10 + $0x20] sm:$0xf]
  %v3304 = vld [vmem:[%s10 + $0x24] sm:$0xf]
  %v3305 = vld [vmem:[%s10 + $0x28] sm:$0xf]
  %v3306 = vld [vmem:[%s10 + $0x2c] sm:$0xf]
  %v3307 = vld [vmem:[%s10 + $0x30] sm:$0xf]
  %v3308 = vld [vmem:[%s10 + $0x34] sm:$0xf]
  %v3309 = vld [vmem:[%s10 + $0x38] sm:$0xf]
  %v3310 = vld [vmem:[%s10 + $0x3c] sm:$0xf]
  %v3311 = vunpack.c.l.bf16 %v3303
  %v3312 = vunpack.c.l.bf16 %v3304
  %v3313 = vunpack.c.l.bf16 %v3305
  %v3314 = vunpack.c.l.bf16 %v3306
  %v3315 = vunpack.c.l.bf16 %v3307
  %v3316 = vunpack.c.l.bf16 %v3308
  %v3317 = vunpack.c.l.bf16 %v3309
  %v3318 = vunpack.c.l.bf16 %v3310
  %v3320 = vsel %vm2930, %v3296, 0
  %v3323 = vsel %vm2930, %v3298, 0
  %v3326 = vsel %vm2930, %v3300, 0
  %v3329 = vsel %vm2930, %v3302, 0
  %3331 = vmatprep.subr.mxu0 0.0
  %3332 = vmatpush1.msra.mxu0 0.0
  %3333 = vmatprep.subr.mxu0 0.0
  %3334 = vmatpush1.msra.mxu0 0.0
  %3335 = vmatprep.subr.mxu0 0.0
  %3336 = vmatpush1.msra.mxu0 0.0
  %3337 = vmatprep.subr.mxu0 0.0
  %3338 = vmatpush1.msra.mxu0 0.0
  %3339 = vmatprep.subr.mxu0 0.0
  %3340 = vmatpush1.msra.mxu0 0.0
  %3341 = vmatprep.subr.mxu0 0.0
  %3342 = vmatpush1.msra.mxu0 0.0
  %3343 = vmatprep.subr.mxu0 0.0
  %3344 = vmatpush1.msra.mxu0 0.0
  %3345 = vmatprep.subr.mxu0 0.0
  %3346 = vmatpush1.msra.mxu0 0.0
  %3347 = vmatprep.subr.mxu0 0.0
  %3348 = vmatpush1.msra.mxu0 %v3318
  %3349 = vmatprep.subr.mxu0 0.0
  %3350 = vmatpush1.msra.mxu0 %v3317
  %3351 = vmatprep.subr.mxu0 0.0
  %3352 = vmatpush1.msra.mxu0 %v3316
  %3353 = vmatprep.subr.mxu0 0.0
  %3354 = vmatpush1.msra.mxu0 %v3315
  %3355 = vmatprep.subr.mxu0 0.0
  %3356 = vmatpush1.msra.mxu0 %v3314
  %3357 = vmatprep.subr.mxu0 0.0
  %3358 = vmatpush1.msra.mxu0 %v3313
  %3359 = vmatprep.subr.mxu0 0.0
  %3360 = vmatpush1.msra.mxu0 %v3312
  %3361 = vmatprep.subr.mxu0 0.0
  %3362 = vmatpush1.msra.mxu0 %v3311
  %3363 = vmatprep.subr.mxu0 0.0
  %3364 = vmatpush2.msra.mxu0 0.0
  %3365 = vmatprep.subr.mxu0 0.0
  %3366 = vmatpush2.msra.mxu0 0.0
  %3367 = vmatprep.subr.mxu0 0.0
  %3368 = vmatpush2.msra.mxu0 0.0
  %3369 = vmatprep.subr.mxu0 0.0
  %3370 = vmatpush2.msra.mxu0 0.0
  %3371 = vmatprep.subr.mxu0 0.0
  %3372 = vmatpush2.msra.mxu0 0.0
  %3373 = vmatprep.subr.mxu0 0.0
  %3374 = vmatpush2.msra.mxu0 0.0
  %3375 = vmatprep.subr.mxu0 0.0
  %3376 = vmatpush2.msra.mxu0 0.0
  %3377 = vmatprep.subr.mxu0 0.0
  %3378 = vmatpush2.msra.mxu0 0.0
  %3379 = vmatprep.subr.mxu0 0.0
  %3380 = vmatpush2.msra.mxu0 0.0
  %3381 = vmatprep.subr.mxu0 0.0
  %3382 = vmatpush2.msra.mxu0 0.0
  %3383 = vmatprep.subr.mxu0 0.0
  %3384 = vmatpush2.msra.mxu0 0.0
  %3385 = vmatprep.subr.mxu0 0.0
  %3386 = vmatpush2.msra.mxu0 0.0
  %3387 = vmatprep.subr.mxu0 0.0
  %3388 = vmatpush2.msra.mxu0 0.0
  %3389 = vmatprep.subr.mxu0 0.0
  %3390 = vmatpush2.msra.mxu0 0.0
  %3391 = vmatprep.subr.mxu0 0.0
  %3392 = vmatpush2.msra.mxu0 0.0
  %3393 = vmatprep.subr.mxu0 0.0
  %3394 = vmatpush2.msra.mxu0 0.0
  %3395 = vmatprep.mubr.f32.mxu0 0.0
  %3396 = vmatmul.mubr.f32.gmra.mxu0 %v3320
  %v3397 = vpop.f32.mrf.mxu0
  %v3398 = vadd.f32 0.0, %v3397
  %v3399 = vpop.f32.mrf.mxu0
  %3400 = vmatprep.mubr.f32.mxu0 0.0
  %3401 = vmatmul.mubr.f32.gmra.mxu0 %v3323
  %v3402 = vpop.f32.mrf.mxu0
  %v3403 = vadd.f32 0.0, %v3402
  %v3404 = vpop.f32.mrf.mxu0
  %3405 = vmatprep.mubr.f32.mxu0 0.0
  %3406 = vmatmul.mubr.f32.gmra.mxu0 %v3326
  %v3407 = vpop.f32.mrf.mxu0
  %v3408 = vadd.f32 0.0, %v3407
  %v3409 = vpop.f32.mrf.mxu0
  %3410 = vmatprep.mubr.f32.mxu0 0.0
  %3411 = vmatmul.mubr.f32.gmra.mxu0 %v3329
  %v3412 = vpop.f32.mrf.mxu0
  %v3413 = vadd.f32 0.0, %v3412
  %v3414 = vpop.f32.mrf.mxu0
  %3415 = vdwg.mxu0
  %v3416 = vadd.f32 %v3278, %v3398
  %v3417 = vadd.f32 %v3283, %v3403
  %v3418 = vadd.f32 %v3288, %v3408
  %v3419 = vadd.f32 %v3293, %v3413
  %v3420 = vadd.f32 %v3416, %v3417
  %v3421 = vadd.f32 %v3420, %v3418
  %v3422 = vadd.f32 %v3421, %v3419
  %v3423 = vrot.slane %v3422, 4
  %v3424 = vadd.f32 %v3422, %v3423
  %v3425 = vrot.slane %v3424, 2
  %v3426 = vadd.f32 %v3424, %v3425
  %v3427 = vrot.slane %v3426, 1
  %v3428 = vadd.f32 %v3426, %v3427
  %v3429 = vmul.f32 %v3428, 0.03125
  %v3430 = vmul.f32 %v3416, %v3416
  %v3431 = vmul.f32 %v3417, %v3417
  %v3432 = vmul.f32 %v3418, %v3418
  %v3433 = vmul.f32 %v3419, %v3419
  %v3434 = vadd.f32 %v3430, %v3431
  %v3435 = vadd.f32 %v3434, %v3432
  %v3436 = vadd.f32 %v3435, %v3433
  %v3437 = vrot.slane %v3436, 4
  %v3438 = vadd.f32 %v3436, %v3437
  %v3439 = vrot.slane %v3438, 2
  %v3440 = vadd.f32 %v3438, %v3439
  %v3441 = vrot.slane %v3440, 1
  %v3442 = vadd.f32 %v3440, %v3441
  %v3443 = vmul.f32 %v3442, 0.03125
  %v3444 = vmul.f32 %v3429, %v3429
  %v3445 = vsub.f32 %v3443, %v3444
  %v3446 = vld [vmem:[%s11] sm:$0x1]
  %v3447 = vadd.f32 %v3445, 1e-05
  %v3448 = vrsqrt.pop %v3447
  %v3449 = vmul.f32 %v3446, %v3448
  %v3451 = vlaneseq
  %v3452 = vshrl.u32 %v3451, 7
  %v3453 = vsub.s32 0, %v3452
  %v3454 = vrot.slane %v3449, %v3453
  %v3456 = vmul.f32 %v3454, %v3416
  %v3457 = vmul.f32 %v3454, %v3417
  %v3458 = vmul.f32 %v3454, %v3418
  %v3459 = vmul.f32 %v3454, %v3419
  %v3460 = vld [vmem:[%s12] sm:$0x1]
  %v3461 = vmul.f32 %v3449, %v3429
  %v3462 = vsub.f32 %v3460, %v3461
  %v3464 = vlaneseq
  %v3465 = vshrl.u32 %v3464, 7
  %v3466 = vsub.s32 0, %v3465
  %v3467 = vrot.slane %v3462, %v3466
  %v3469 = vadd.f32 %v3456, %v3467
  %v3470 = vadd.f32 %v3457, %v3467
  %v3471 = vadd.f32 %v3458, %v3467
  %v3472 = vadd.f32 %v3459, %v3467
  %vm3473 = vcmp.gt.f32.partialorder %v3469, 0.0
  %vm3474 = vcmp.gt.f32.partialorder %v3470, 0.0
  %vm3475 = vcmp.gt.f32.partialorder %v3471, 0.0
  %vm3476 = vcmp.gt.f32.partialorder %v3472, 0.0
  %v3477 = vmul.f32 %v3469, 0.01
  %v3478 = vmul.f32 %v3470, 0.01
  %v3479 = vmul.f32 %v3471, 0.01
  %v3480 = vmul.f32 %v3472, 0.01
  %v3481 = vsel %vm3473, %v3469, %v3477
  %v3482 = vsel %vm3474, %v3470, %v3478
  %v3483 = vsel %vm3475, %v3471, %v3479
  %v3484 = vsel %vm3476, %v3472, %v3480
  %3485 = vst [vmem:[#allocation5] sm:$0xff] %v3481
  %3486 = vst [vmem:[#allocation5 + $0x8] sm:$0xff] %v3482
  %3487 = vst [vmem:[#allocation5 + $0x10] sm:$0xff] %v3483
  %3488 = vst [vmem:[#allocation5 + $0x18] sm:$0xff] %v3484
  %s3489 = smul.u32 4, 48
  %s3490 = smul.u32 %s3489, 2
  %s3491 = sshll.u32 %s3490, 4
  %3492 = dma.done [#allocation9], %s3491
  %s3493 = scalar_lea.vmem [#allocation5], 1
  %v3494 = vld [vmem:[%s3493] ss:$2 sm:$0xff]
  %s3495 = scalar_lea.vmem [#allocation5], 17
  %v3496 = vld [vmem:[%s3495] ss:$2 sm:$0xff]
  %v3498 = vrot.slane %v3494, 7
  %v3501 = vrot.slane %v3496, 7
  %v3503 = vsel %vm571, %v3498, %v3498
  %v3504 = vsel %vm571, %v3501, %v3501
  %v3505 = vld [vmem:[#allocation7 + $0x100] sm:$0xff]
  %v3506 = vld [vmem:[#allocation7 + $0x108] sm:$0xff]
  %v3507 = vld [vmem:[#allocation7 + $0x110] sm:$0xff]
  %v3508 = vld [vmem:[#allocation7 + $0x118] sm:$0xff]
  %v3509 = vld [vmem:[#allocation7 + $0x120] sm:$0xff]
  %v3510 = vld [vmem:[#allocation7 + $0x128] sm:$0xff]
  %v3511 = vld [vmem:[#allocation7 + $0x130] sm:$0xff]
  %v3512 = vld [vmem:[#allocation7 + $0x138] sm:$0xff]
  %v3513 = vld [vmem:[#allocation7 + $0x140] sm:$0xff]
  %v3514 = vld [vmem:[#allocation7 + $0x148] sm:$0xff]
  %v3515 = vld [vmem:[#allocation7 + $0x150] sm:$0xff]
  %v3516 = vld [vmem:[#allocation7 + $0x158] sm:$0xff]
  %v3517 = vld [vmem:[#allocation7 + $0x160] sm:$0xff]
  %v3518 = vld [vmem:[#allocation7 + $0x168] sm:$0xff]
  %v3519 = vld [vmem:[#allocation7 + $0x170] sm:$0xff]
  %v3520 = vld [vmem:[#allocation7 + $0x178] sm:$0xff]
  %v3521 = vunpack.c.l.bf16 %v3505
  %v3522 = vunpack.c.h.bf16 %v3505
  %v3523 = vunpack.c.l.bf16 %v3506
  %v3524 = vunpack.c.h.bf16 %v3506
  %v3525 = vunpack.c.l.bf16 %v3507
  %v3526 = vunpack.c.h.bf16 %v3507
  %v3527 = vunpack.c.l.bf16 %v3508
  %v3528 = vunpack.c.h.bf16 %v3508
  %v3529 = vunpack.c.l.bf16 %v3509
  %v3530 = vunpack.c.h.bf16 %v3509
  %v3531 = vunpack.c.l.bf16 %v3510
  %v3532 = vunpack.c.h.bf16 %v3510
  %v3533 = vunpack.c.l.bf16 %v3511
  %v3534 = vunpack.c.h.bf16 %v3511
  %v3535 = vunpack.c.l.bf16 %v3512
  %v3536 = vunpack.c.h.bf16 %v3512
  %v3537 = vunpack.c.l.bf16 %v3513
  %v3538 = vunpack.c.h.bf16 %v3513
  %v3539 = vunpack.c.l.bf16 %v3514
  %v3540 = vunpack.c.h.bf16 %v3514
  %v3541 = vunpack.c.l.bf16 %v3515
  %v3542 = vunpack.c.h.bf16 %v3515
  %v3543 = vunpack.c.l.bf16 %v3516
  %v3544 = vunpack.c.h.bf16 %v3516
  %v3545 = vunpack.c.l.bf16 %v3517
  %v3546 = vunpack.c.h.bf16 %v3517
  %v3547 = vunpack.c.l.bf16 %v3518
  %v3548 = vunpack.c.h.bf16 %v3518
  %v3549 = vunpack.c.l.bf16 %v3519
  %v3550 = vunpack.c.h.bf16 %v3519
  %v3551 = vunpack.c.l.bf16 %v3520
  %v3552 = vunpack.c.h.bf16 %v3520
  %v3553 = vld [vmem:[#allocation7] sm:$0xff]
  %v3554 = vld [vmem:[#allocation7 + $0x8] sm:$0xff]
  %v3555 = vld [vmem:[#allocation7 + $0x10] sm:$0xff]
  %v3556 = vld [vmem:[#allocation7 + $0x18] sm:$0xff]
  %v3557 = vld [vmem:[#allocation7 + $0x20] sm:$0xff]
  %v3558 = vld [vmem:[#allocation7 + $0x28] sm:$0xff]
  %v3559 = vld [vmem:[#allocation7 + $0x30] sm:$0xff]
  %v3560 = vld [vmem:[#allocation7 + $0x38] sm:$0xff]
  %v3561 = vld [vmem:[#allocation7 + $0x40] sm:$0xff]
  %v3562 = vld [vmem:[#allocation7 + $0x48] sm:$0xff]
  %v3563 = vld [vmem:[#allocation7 + $0x50] sm:$0xff]
  %v3564 = vld [vmem:[#allocation7 + $0x58] sm:$0xff]
  %v3565 = vld [vmem:[#allocation7 + $0x60] sm:$0xff]
  %v3566 = vld [vmem:[#allocation7 + $0x68] sm:$0xff]
  %v3567 = vld [vmem:[#allocation7 + $0x70] sm:$0xff]
  %v3568 = vld [vmem:[#allocation7 + $0x78] sm:$0xff]
  %v3569 = vunpack.c.l.bf16 %v3553
  %v3570 = vunpack.c.h.bf16 %v3553
  %v3571 = vunpack.c.l.bf16 %v3554
  %v3572 = vunpack.c.h.bf16 %v3554
  %v3573 = vunpack.c.l.bf16 %v3555
  %v3574 = vunpack.c.h.bf16 %v3555
  %v3575 = vunpack.c.l.bf16 %v3556
  %v3576 = vunpack.c.h.bf16 %v3556
  %v3577 = vunpack.c.l.bf16 %v3557
  %v3578 = vunpack.c.h.bf16 %v3557
  %v3579 = vunpack.c.l.bf16 %v3558
  %v3580 = vunpack.c.h.bf16 %v3558
  %v3581 = vunpack.c.l.bf16 %v3559
  %v3582 = vunpack.c.h.bf16 %v3559
  %v3583 = vunpack.c.l.bf16 %v3560
  %v3584 = vunpack.c.h.bf16 %v3560
  %v3585 = vunpack.c.l.bf16 %v3561
  %v3586 = vunpack.c.h.bf16 %v3561
  %v3587 = vunpack.c.l.bf16 %v3562
  %v3588 = vunpack.c.h.bf16 %v3562
  %v3589 = vunpack.c.l.bf16 %v3563
  %v3590 = vunpack.c.h.bf16 %v3563
  %v3591 = vunpack.c.l.bf16 %v3564
  %v3592 = vunpack.c.h.bf16 %v3564
  %v3593 = vunpack.c.l.bf16 %v3565
  %v3594 = vunpack.c.h.bf16 %v3565
  %v3595 = vunpack.c.l.bf16 %v3566
  %v3596 = vunpack.c.h.bf16 %v3566
  %v3597 = vunpack.c.l.bf16 %v3567
  %v3598 = vunpack.c.h.bf16 %v3567
  %v3599 = vunpack.c.l.bf16 %v3568
  %v3600 = vunpack.c.h.bf16 %v3568
  %3601 = vmatprep.subr.mxu0 %v3600
  %3602 = vmatpush1.msra.mxu0 %v3599
  %3603 = vmatprep.subr.mxu0 %v3598
  %3604 = vmatpush1.msra.mxu0 %v3597
  %3605 = vmatprep.subr.mxu0 %v3596
  %3606 = vmatpush1.msra.mxu0 %v3595
  %3607 = vmatprep.subr.mxu0 %v3594
  %3608 = vmatpush1.msra.mxu0 %v3593
  %3609 = vmatprep.subr.mxu0 %v3592
  %3610 = vmatpush1.msra.mxu0 %v3591
  %3611 = vmatprep.subr.mxu0 %v3590
  %3612 = vmatpush1.msra.mxu0 %v3589
  %3613 = vmatprep.subr.mxu0 %v3588
  %3614 = vmatpush1.msra.mxu0 %v3587
  %3615 = vmatprep.subr.mxu0 %v3586
  %3616 = vmatpush1.msra.mxu0 %v3585
  %3617 = vmatprep.subr.mxu0 %v3584
  %3618 = vmatpush1.msra.mxu0 %v3583
  %3619 = vmatprep.subr.mxu0 %v3582
  %3620 = vmatpush1.msra.mxu0 %v3581
  %3621 = vmatprep.subr.mxu0 %v3580
  %3622 = vmatpush1.msra.mxu0 %v3579
  %3623 = vmatprep.subr.mxu0 %v3578
  %3624 = vmatpush1.msra.mxu0 %v3577
  %3625 = vmatprep.subr.mxu0 %v3576
  %3626 = vmatpush1.msra.mxu0 %v3575
  %3627 = vmatprep.subr.mxu0 %v3574
  %3628 = vmatpush1.msra.mxu0 %v3573
  %3629 = vmatprep.subr.mxu0 %v3572
  %3630 = vmatpush1.msra.mxu0 %v3571
  %3631 = vmatprep.subr.mxu0 %v3570
  %3632 = vmatpush1.msra.mxu0 %v3569
  %3633 = vmatprep.subr.mxu0 0.0
  %3634 = vmatpush2.msra.mxu0 0.0
  %3635 = vmatprep.subr.mxu0 0.0
  %3636 = vmatpush2.msra.mxu0 0.0
  %3637 = vmatprep.subr.mxu0 0.0
  %3638 = vmatpush2.msra.mxu0 0.0
  %3639 = vmatprep.subr.mxu0 0.0
  %3640 = vmatpush2.msra.mxu0 0.0
  %3641 = vmatprep.subr.mxu0 0.0
  %3642 = vmatpush2.msra.mxu0 0.0
  %3643 = vmatprep.subr.mxu0 0.0
  %3644 = vmatpush2.msra.mxu0 0.0
  %3645 = vmatprep.subr.mxu0 0.0
  %3646 = vmatpush2.msra.mxu0 0.0
  %3647 = vmatprep.subr.mxu0 0.0
  %3648 = vmatpush2.msra.mxu0 0.0
  %3649 = vmatprep.subr.mxu0 0.0
  %3650 = vmatpush2.msra.mxu0 0.0
  %3651 = vmatprep.subr.mxu0 0.0
  %3652 = vmatpush2.msra.mxu0 0.0
  %3653 = vmatprep.subr.mxu0 0.0
  %3654 = vmatpush2.msra.mxu0 0.0
  %3655 = vmatprep.subr.mxu0 0.0
  %3656 = vmatpush2.msra.mxu0 0.0
  %3657 = vmatprep.subr.mxu0 0.0
  %3658 = vmatpush2.msra.mxu0 0.0
  %3659 = vmatprep.subr.mxu0 0.0
  %3660 = vmatpush2.msra.mxu0 0.0
  %3661 = vmatprep.subr.mxu0 0.0
  %3662 = vmatpush2.msra.mxu0 0.0
  %3663 = vmatprep.subr.mxu0 0.0
  %3664 = vmatpush2.msra.mxu0 0.0
  %3665 = vmatprep.mubr.f32.mxu0 0.0
  %3666 = vmatmul.mubr.f32.gmra.mxu0 %v3503
  %v3667 = vpop.f32.mrf.mxu0
  %v3668 = vadd.f32 0.0, %v3667
  %v3669 = vpop.f32.mrf.mxu0
  %v3670 = vadd.f32 0.0, %v3669
  %3671 = vmatprep.mubr.f32.mxu0 0.0
  %3672 = vmatmul.mubr.f32.gmra.mxu0 %v3504
  %v3673 = vpop.f32.mrf.mxu0
  %v3674 = vadd.f32 0.0, %v3673
  %v3675 = vpop.f32.mrf.mxu0
  %v3676 = vadd.f32 0.0, %v3675
  %3677 = vdwg.mxu0
  %3678 = vmatprep.subr.mxu0 %v3552
  %3679 = vmatpush1.msra.mxu0 %v3551
  %3680 = vmatprep.subr.mxu0 %v3550
  %3681 = vmatpush1.msra.mxu0 %v3549
  %3682 = vmatprep.subr.mxu0 %v3548
  %3683 = vmatpush1.msra.mxu0 %v3547
  %3684 = vmatprep.subr.mxu0 %v3546
  %3685 = vmatpush1.msra.mxu0 %v3545
  %3686 = vmatprep.subr.mxu0 %v3544
  %3687 = vmatpush1.msra.mxu0 %v3543
  %3688 = vmatprep.subr.mxu0 %v3542
  %3689 = vmatpush1.msra.mxu0 %v3541
  %3690 = vmatprep.subr.mxu0 %v3540
  %3691 = vmatpush1.msra.mxu0 %v3539
  %3692 = vmatprep.subr.mxu0 %v3538
  %3693 = vmatpush1.msra.mxu0 %v3537
  %3694 = vmatprep.subr.mxu0 %v3536
  %3695 = vmatpush1.msra.mxu0 %v3535
  %3696 = vmatprep.subr.mxu0 %v3534
  %3697 = vmatpush1.msra.mxu0 %v3533
  %3698 = vmatprep.subr.mxu0 %v3532
  %3699 = vmatpush1.msra.mxu0 %v3531
  %3700 = vmatprep.subr.mxu0 %v3530
  %3701 = vmatpush1.msra.mxu0 %v3529
  %3702 = vmatprep.subr.mxu0 %v3528
  %3703 = vmatpush1.msra.mxu0 %v3527
  %3704 = vmatprep.subr.mxu0 %v3526
  %3705 = vmatpush1.msra.mxu0 %v3525
  %3706 = vmatprep.subr.mxu0 %v3524
  %3707 = vmatpush1.msra.mxu0 %v3523
  %3708 = vmatprep.subr.mxu0 %v3522
  %3709 = vmatpush1.msra.mxu0 %v3521
  %3710 = vmatprep.subr.mxu0 0.0
  %3711 = vmatpush2.msra.mxu0 0.0
  %3712 = vmatprep.subr.mxu0 0.0
  %3713 = vmatpush2.msra.mxu0 0.0
  %3714 = vmatprep.subr.mxu0 0.0
  %3715 = vmatpush2.msra.mxu0 0.0
  %3716 = vmatprep.subr.mxu0 0.0
  %3717 = vmatpush2.msra.mxu0 0.0
  %3718 = vmatprep.subr.mxu0 0.0
  %3719 = vmatpush2.msra.mxu0 0.0
  %3720 = vmatprep.subr.mxu0 0.0
  %3721 = vmatpush2.msra.mxu0 0.0
  %3722 = vmatprep.subr.mxu0 0.0
  %3723 = vmatpush2.msra.mxu0 0.0
  %3724 = vmatprep.subr.mxu0 0.0
  %3725 = vmatpush2.msra.mxu0 0.0
  %3726 = vmatprep.subr.mxu0 0.0
  %3727 = vmatpush2.msra.mxu0 0.0
  %3728 = vmatprep.subr.mxu0 0.0
  %3729 = vmatpush2.msra.mxu0 0.0
  %3730 = vmatprep.subr.mxu0 0.0
  %3731 = vmatpush2.msra.mxu0 0.0
  %3732 = vmatprep.subr.mxu0 0.0
  %3733 = vmatpush2.msra.mxu0 0.0
  %3734 = vmatprep.subr.mxu0 0.0
  %3735 = vmatpush2.msra.mxu0 0.0
  %3736 = vmatprep.subr.mxu0 0.0
  %3737 = vmatpush2.msra.mxu0 0.0
  %3738 = vmatprep.subr.mxu0 0.0
  %3739 = vmatpush2.msra.mxu0 0.0
  %3740 = vmatprep.subr.mxu0 0.0
  %3741 = vmatpush2.msra.mxu0 0.0
  %3742 = vmatprep.mubr.f32.mxu0 0.0
  %3743 = vmatmul.mubr.f32.gmra.mxu0 %v3494
  %v3744 = vpop.f32.mrf.mxu0
  %v3745 = vadd.f32 %v3668, %v3744
  %v3746 = vpop.f32.mrf.mxu0
  %v3747 = vadd.f32 %v3670, %v3746
  %3748 = vmatprep.mubr.f32.mxu0 0.0
  %3749 = vmatmul.mubr.f32.gmra.mxu0 %v3496
  %v3750 = vpop.f32.mrf.mxu0
  %v3751 = vadd.f32 %v3674, %v3750
  %v3752 = vpop.f32.mrf.mxu0
  %v3753 = vadd.f32 %v3676, %v3752
  %3754 = vdwg.mxu0
  %v3755 = vld [vmem:[#allocation5] ss:$2 sm:$0xff]
  %s3756 = scalar_lea.vmem [#allocation5], 16
  %v3757 = vld [vmem:[%s3756] ss:$2 sm:$0xff]
  %v3758 = vld [vmem:[#allocation7 + $0x80] sm:$0xff]
  %v3759 = vld [vmem:[#allocation7 + $0x88] sm:$0xff]
  %v3760 = vld [vmem:[#allocation7 + $0x90] sm:$0xff]
  %v3761 = vld [vmem:[#allocation7 + $0x98] sm:$0xff]
  %v3762 = vld [vmem:[#allocation7 + $0xa0] sm:$0xff]
  %v3763 = vld [vmem:[#allocation7 + $0xa8] sm:$0xff]
  %v3764 = vld [vmem:[#allocation7 + $0xb0] sm:$0xff]
  %v3765 = vld [vmem:[#allocation7 + $0xb8] sm:$0xff]
  %v3766 = vld [vmem:[#allocation7 + $0xc0] sm:$0xff]
  %v3767 = vld [vmem:[#allocation7 + $0xc8] sm:$0xff]
  %v3768 = vld [vmem:[#allocation7 + $0xd0] sm:$0xff]
  %v3769 = vld [vmem:[#allocation7 + $0xd8] sm:$0xff]
  %v3770 = vld [vmem:[#allocation7 + $0xe0] sm:$0xff]
  %v3771 = vld [vmem:[#allocation7 + $0xe8] sm:$0xff]
  %v3772 = vld [vmem:[#allocation7 + $0xf0] sm:$0xff]
  %v3773 = vld [vmem:[#allocation7 + $0xf8] sm:$0xff]
  %v3774 = vunpack.c.l.bf16 %v3758
  %v3775 = vunpack.c.h.bf16 %v3758
  %v3776 = vunpack.c.l.bf16 %v3759
  %v3777 = vunpack.c.h.bf16 %v3759
  %v3778 = vunpack.c.l.bf16 %v3760
  %v3779 = vunpack.c.h.bf16 %v3760
  %v3780 = vunpack.c.l.bf16 %v3761
  %v3781 = vunpack.c.h.bf16 %v3761
  %v3782 = vunpack.c.l.bf16 %v3762
  %v3783 = vunpack.c.h.bf16 %v3762
  %v3784 = vunpack.c.l.bf16 %v3763
  %v3785 = vunpack.c.h.bf16 %v3763
  %v3786 = vunpack.c.l.bf16 %v3764
  %v3787 = vunpack.c.h.bf16 %v3764
  %v3788 = vunpack.c.l.bf16 %v3765
  %v3789 = vunpack.c.h.bf16 %v3765
  %v3790 = vunpack.c.l.bf16 %v3766
  %v3791 = vunpack.c.h.bf16 %v3766
  %v3792 = vunpack.c.l.bf16 %v3767
  %v3793 = vunpack.c.h.bf16 %v3767
  %v3794 = vunpack.c.l.bf16 %v3768
  %v3795 = vunpack.c.h.bf16 %v3768
  %v3796 = vunpack.c.l.bf16 %v3769
  %v3797 = vunpack.c.h.bf16 %v3769
  %v3798 = vunpack.c.l.bf16 %v3770
  %v3799 = vunpack.c.h.bf16 %v3770
  %v3800 = vunpack.c.l.bf16 %v3771
  %v3801 = vunpack.c.h.bf16 %v3771
  %v3802 = vunpack.c.l.bf16 %v3772
  %v3803 = vunpack.c.h.bf16 %v3772
  %v3804 = vunpack.c.l.bf16 %v3773
  %v3805 = vunpack.c.h.bf16 %v3773
  %3806 = vmatprep.subr.mxu0 %v3805
  %3807 = vmatpush1.msra.mxu0 %v3804
  %3808 = vmatprep.subr.mxu0 %v3803
  %3809 = vmatpush1.msra.mxu0 %v3802
  %3810 = vmatprep.subr.mxu0 %v3801
  %3811 = vmatpush1.msra.mxu0 %v3800
  %3812 = vmatprep.subr.mxu0 %v3799
  %3813 = vmatpush1.msra.mxu0 %v3798
  %3814 = vmatprep.subr.mxu0 %v3797
  %3815 = vmatpush1.msra.mxu0 %v3796
  %3816 = vmatprep.subr.mxu0 %v3795
  %3817 = vmatpush1.msra.mxu0 %v3794
  %3818 = vmatprep.subr.mxu0 %v3793
  %3819 = vmatpush1.msra.mxu0 %v3792
  %3820 = vmatprep.subr.mxu0 %v3791
  %3821 = vmatpush1.msra.mxu0 %v3790
  %3822 = vmatprep.subr.mxu0 %v3789
  %3823 = vmatpush1.msra.mxu0 %v3788
  %3824 = vmatprep.subr.mxu0 %v3787
  %3825 = vmatpush1.msra.mxu0 %v3786
  %3826 = vmatprep.subr.mxu0 %v3785
  %3827 = vmatpush1.msra.mxu0 %v3784
  %3828 = vmatprep.subr.mxu0 %v3783
  %3829 = vmatpush1.msra.mxu0 %v3782
  %3830 = vmatprep.subr.mxu0 %v3781
  %3831 = vmatpush1.msra.mxu0 %v3780
  %3832 = vmatprep.subr.mxu0 %v3779
  %3833 = vmatpush1.msra.mxu0 %v3778
  %3834 = vmatprep.subr.mxu0 %v3777
  %3835 = vmatpush1.msra.mxu0 %v3776
  %3836 = vmatprep.subr.mxu0 %v3775
  %3837 = vmatpush1.msra.mxu0 %v3774
  %3838 = vmatprep.subr.mxu0 0.0
  %3839 = vmatpush2.msra.mxu0 0.0
  %3840 = vmatprep.subr.mxu0 0.0
  %3841 = vmatpush2.msra.mxu0 0.0
  %3842 = vmatprep.subr.mxu0 0.0
  %3843 = vmatpush2.msra.mxu0 0.0
  %3844 = vmatprep.subr.mxu0 0.0
  %3845 = vmatpush2.msra.mxu0 0.0
  %3846 = vmatprep.subr.mxu0 0.0
  %3847 = vmatpush2.msra.mxu0 0.0
  %3848 = vmatprep.subr.mxu0 0.0
  %3849 = vmatpush2.msra.mxu0 0.0
  %3850 = vmatprep.subr.mxu0 0.0
  %3851 = vmatpush2.msra.mxu0 0.0
  %3852 = vmatprep.subr.mxu0 0.0
  %3853 = vmatpush2.msra.mxu0 0.0
  %3854 = vmatprep.subr.mxu0 0.0
  %3855 = vmatpush2.msra.mxu0 0.0
  %3856 = vmatprep.subr.mxu0 0.0
  %3857 = vmatpush2.msra.mxu0 0.0
  %3858 = vmatprep.subr.mxu0 0.0
  %3859 = vmatpush2.msra.mxu0 0.0
  %3860 = vmatprep.subr.mxu0 0.0
  %3861 = vmatpush2.msra.mxu0 0.0
  %3862 = vmatprep.subr.mxu0 0.0
  %3863 = vmatpush2.msra.mxu0 0.0
  %3864 = vmatprep.subr.mxu0 0.0
  %3865 = vmatpush2.msra.mxu0 0.0
  %3866 = vmatprep.subr.mxu0 0.0
  %3867 = vmatpush2.msra.mxu0 0.0
  %3868 = vmatprep.subr.mxu0 0.0
  %3869 = vmatpush2.msra.mxu0 0.0
  %3870 = vmatprep.mubr.f32.mxu0 0.0
  %3871 = vmatmul.mubr.f32.gmra.mxu0 %v3755
  %v3872 = vpop.f32.mrf.mxu0
  %v3873 = vadd.f32 0.0, %v3872
  %v3874 = vpop.f32.mrf.mxu0
  %v3875 = vadd.f32 0.0, %v3874
  %3876 = vmatprep.mubr.f32.mxu0 0.0
  %3877 = vmatmul.mubr.f32.gmra.mxu0 %v3757
  %v3878 = vpop.f32.mrf.mxu0
  %v3879 = vadd.f32 0.0, %v3878
  %v3880 = vpop.f32.mrf.mxu0
  %v3881 = vadd.f32 0.0, %v3880
  %3882 = vdwg.mxu0
  %v3883 = vadd.f32 %v3745, %v3873
  %v3884 = vadd.f32 %v3747, %v3875
  %v3885 = vadd.f32 %v3751, %v3879
  %v3886 = vadd.f32 %v3753, %v3881
  %v3887 = vadd.f32 %v3883, %v3885
  %v3888 = vrot.slane %v3887, 4
  %v3889 = vadd.f32 %v3887, %v3888
  %v3890 = vrot.slane %v3889, 2
  %v3891 = vadd.f32 %v3889, %v3890
  %v3892 = vrot.slane %v3891, 1
  %v3893 = vadd.f32 %v3891, %v3892
  %v3894 = vadd.f32 %v3884, %v3886
  %v3895 = vrot.slane %v3894, 4
  %v3896 = vadd.f32 %v3894, %v3895
  %v3897 = vrot.slane %v3896, 2
  %v3898 = vadd.f32 %v3896, %v3897
  %v3899 = vrot.slane %v3898, 1
  %v3900 = vadd.f32 %v3898, %v3899
  %v3901 = vmul.f32 %v3893, 0.0625
  %v3902 = vmul.f32 %v3900, 0.0625
  %v3903 = vmul.f32 %v3883, %v3883
  %v3904 = vmul.f32 %v3884, %v3884
  %v3905 = vmul.f32 %v3885, %v3885
  %v3906 = vmul.f32 %v3886, %v3886
  %v3907 = vadd.f32 %v3903, %v3905
  %v3908 = vrot.slane %v3907, 4
  %v3909 = vadd.f32 %v3907, %v3908
  %v3910 = vrot.slane %v3909, 2
  %v3911 = vadd.f32 %v3909, %v3910
  %v3912 = vrot.slane %v3911, 1
  %v3913 = vadd.f32 %v3911, %v3912
  %v3914 = vadd.f32 %v3904, %v3906
  %v3915 = vrot.slane %v3914, 4
  %v3916 = vadd.f32 %v3914, %v3915
  %v3917 = vrot.slane %v3916, 2
  %v3918 = vadd.f32 %v3916, %v3917
  %v3919 = vrot.slane %v3918, 1
  %v3920 = vadd.f32 %v3918, %v3919
  %v3921 = vmul.f32 %v3913, 0.0625
  %v3922 = vmul.f32 %v3920, 0.0625
  %v3923 = vmul.f32 %v3901, %v3901
  %v3924 = vmul.f32 %v3902, %v3902
  %v3925 = vsub.f32 %v3921, %v3923
  %v3926 = vsub.f32 %v3922, %v3924
  %v3927 = vld [vmem:[%s14] sm:$0x3]
  %v3928 = vadd.f32 %v3925, 1e-05
  %v3929 = vadd.f32 %v3926, 1e-05
  %v3930 = vrsqrt.pop %v3928
  %v3931 = vrsqrt.pop %v3929
  %v3934 = vcombine.low %v3930, %v3931
  %v3936 = vunpack.c.l.s4 1966171168
  %v3937 = vunpack.c.0.s8 %v3936
  %v3938 = vlaneseq
  %v3939 = vshrl.u32 %v3938, 7
  %v3940 = vsub.s32 %v3937, %v3939
  %v3941 = vrot.slane %v3934, %v3940
  %v3943 = vunpack.c.l.s4 1966171168
  %v3944 = vunpack.c.0.s8 %v3943
  %v3945 = vlaneseq
  %v3946 = vshrl.u32 %v3945, 7
  %v3947 = vsub.s32 %v3944, %v3946
  %v3948 = vrot.slane %v3941, %v3947
  %v3950 = vmul.f32 %v3927, %v3948
  %v3952 = vlaneseq
  %v3953 = vshrl.u32 %v3952, 7
  %v3954 = vsub.s32 0, %v3953
  %v3955 = vrot.slane %v3950, %v3954
  %v3956 = vlaneseq
  %v3957 = vshrl.u32 %v3956, 7
  %v3958 = vsub.s32 1, %v3957
  %v3959 = vrot.slane %v3950, %v3958
  %v3962 = vmul.f32 %v3955, %v3883
  %v3963 = vmul.f32 %v3959, %v3884
  %v3964 = vmul.f32 %v3955, %v3885
  %v3965 = vmul.f32 %v3959, %v3886
  %v3966 = vld [vmem:[%s15] sm:$0x3]
  %v3969 = vcombine.low %v3901, %v3902
  %v3971 = vunpack.c.l.s4 1966171168
  %v3972 = vunpack.c.0.s8 %v3971
  %v3973 = vlaneseq
  %v3974 = vshrl.u32 %v3973, 7
  %v3975 = vsub.s32 %v3972, %v3974
  %v3976 = vrot.slane %v3969, %v3975
  %v3978 = vunpack.c.l.s4 1966171168
  %v3979 = vunpack.c.0.s8 %v3978
  %v3980 = vlaneseq
  %v3981 = vshrl.u32 %v3980, 7
  %v3982 = vsub.s32 %v3979, %v3981
  %v3983 = vrot.slane %v3976, %v3982
  %v3985 = vmul.f32 %v3950, %v3983
  %v3986 = vsub.f32 %v3966, %v3985
  %v3988 = vlaneseq
  %v3989 = vshrl.u32 %v3988, 7
  %v3990 = vsub.s32 0, %v3989
  %v3991 = vrot.slane %v3986, %v3990
  %v3992 = vlaneseq
  %v3993 = vshrl.u32 %v3992, 7
  %v3994 = vsub.s32 1, %v3993
  %v3995 = vrot.slane %v3986, %v3994
  %v3998 = vadd.f32 %v3962, %v3991
  %v3999 = vadd.f32 %v3963, %v3995
  %v4000 = vadd.f32 %v3964, %v3991
  %v4001 = vadd.f32 %v3965, %v3995
  %vm4002 = vcmp.gt.f32.partialorder %v3998, 0.0
  %vm4003 = vcmp.gt.f32.partialorder %v3999, 0.0
  %vm4004 = vcmp.gt.f32.partialorder %v4000, 0.0
  %vm4005 = vcmp.gt.f32.partialorder %v4001, 0.0
  %v4006 = vmul.f32 %v3998, 0.01
  %v4007 = vmul.f32 %v3999, 0.01
  %v4008 = vmul.f32 %v4000, 0.01
  %v4009 = vmul.f32 %v4001, 0.01
  %v4010 = vsel %vm4002, %v3998, %v4006
  %v4011 = vsel %vm4003, %v3999, %v4007
  %v4012 = vsel %vm4004, %v4000, %v4008
  %v4013 = vsel %vm4005, %v4001, %v4009
  %4014 = vst [vmem:[#allocation6] sm:$0xff] %v4010
  %4015 = vst [vmem:[#allocation6 + $0x8] sm:$0xff] %v4011
  %4016 = vst [vmem:[#allocation6 + $0x10] sm:$0xff] %v4012
  %4017 = vst [vmem:[#allocation6 + $0x18] sm:$0xff] %v4013
  %s4018 = smul.u32 4, 256
  %s4019 = smul.u32 %s4018, 1
  %s4020 = sshll.u32 %s4019, 4
  %4021 = dma.done %s192, %s4020
  loop: start=0, step=1, limit=8
  $region134: #{encoder_forward.1} parent=0 // loop_pre_header
    _
  $region135: #{encoder_forward.1} parent=0 // loop_header
    %s4023 = sphi 0, %s4027
    %p4024 = scmp.ge.s32.totalorder %s4023, 8
    %v4028 = vphi 0.0, %v4211
  $region136: #{encoder_forward.1} parent=0 // loop_header_branch
    %4026 = sbr.rel (%p4024) target = $region140
  $region137: #{encoder_forward.1} parent=0 // loop_body
    %s4029 = smul.u32 %s4023, 256
    %s4030 = sshra.s32 %s4029, 3
    %s4031 = sand.u32 %s4029, 7
    %s4032 = smul.addr %s4030, 4
    %s4033 = scalar_lea.vmem [#allocation8], %s4032
    %v4034 = vld [vmem:[%s4033] sm:$0xf]
    %v4035 = vld [vmem:[%s4033 + $0x4] sm:$0xf]
    %v4036 = vld [vmem:[%s4033 + $0x8] sm:$0xf]
    %v4037 = vld [vmem:[%s4033 + $0xc] sm:$0xf]
    %v4038 = vld [vmem:[%s4033 + $0x10] sm:$0xf]
    %v4039 = vld [vmem:[%s4033 + $0x14] sm:$0xf]
    %v4040 = vld [vmem:[%s4033 + $0x18] sm:$0xf]
    %v4041 = vld [vmem:[%s4033 + $0x1c] sm:$0xf]
    %v4042 = vld [vmem:[%s4033 + $0x20] sm:$0xf]
    %v4043 = vld [vmem:[%s4033 + $0x24] sm:$0xf]
    %v4044 = vld [vmem:[%s4033 + $0x28] sm:$0xf]
    %v4045 = vld [vmem:[%s4033 + $0x2c] sm:$0xf]
    %v4046 = vld [vmem:[%s4033 + $0x30] sm:$0xf]
    %v4047 = vld [vmem:[%s4033 + $0x34] sm:$0xf]
    %v4048 = vld [vmem:[%s4033 + $0x38] sm:$0xf]
    %v4049 = vld [vmem:[%s4033 + $0x3c] sm:$0xf]
    %v4050 = vld [vmem:[%s4033 + $0x40] sm:$0xf]
    %v4051 = vld [vmem:[%s4033 + $0x44] sm:$0xf]
    %v4052 = vld [vmem:[%s4033 + $0x48] sm:$0xf]
    %v4053 = vld [vmem:[%s4033 + $0x4c] sm:$0xf]
    %v4054 = vld [vmem:[%s4033 + $0x50] sm:$0xf]
    %v4055 = vld [vmem:[%s4033 + $0x54] sm:$0xf]
    %v4056 = vld [vmem:[%s4033 + $0x58] sm:$0xf]
    %v4057 = vld [vmem:[%s4033 + $0x5c] sm:$0xf]
    %v4058 = vld [vmem:[%s4033 + $0x60] sm:$0xf]
    %v4059 = vld [vmem:[%s4033 + $0x64] sm:$0xf]
    %v4060 = vld [vmem:[%s4033 + $0x68] sm:$0xf]
    %v4061 = vld [vmem:[%s4033 + $0x6c] sm:$0xf]
    %v4062 = vld [vmem:[%s4033 + $0x70] sm:$0xf]
    %v4063 = vld [vmem:[%s4033 + $0x74] sm:$0xf]
    %v4064 = vld [vmem:[%s4033 + $0x78] sm:$0xf]
    %v4065 = vld [vmem:[%s4033 + $0x7c] sm:$0xf]
    %v4066 = vunpack.c.l.bf16 %v4034
    %v4067 = vunpack.c.l.bf16 %v4035
    %v4068 = vunpack.c.l.bf16 %v4036
    %v4069 = vunpack.c.l.bf16 %v4037
    %v4070 = vunpack.c.l.bf16 %v4038
    %v4071 = vunpack.c.l.bf16 %v4039
    %v4072 = vunpack.c.l.bf16 %v4040
    %v4073 = vunpack.c.l.bf16 %v4041
    %v4074 = vunpack.c.l.bf16 %v4042
    %v4075 = vunpack.c.l.bf16 %v4043
    %v4076 = vunpack.c.l.bf16 %v4044
    %v4077 = vunpack.c.l.bf16 %v4045
    %v4078 = vunpack.c.l.bf16 %v4046
    %v4079 = vunpack.c.l.bf16 %v4047
    %v4080 = vunpack.c.l.bf16 %v4048
    %v4081 = vunpack.c.l.bf16 %v4049
    %v4082 = vunpack.c.l.bf16 %v4050
    %v4083 = vunpack.c.l.bf16 %v4051
    %v4084 = vunpack.c.l.bf16 %v4052
    %v4085 = vunpack.c.l.bf16 %v4053
    %v4086 = vunpack.c.l.bf16 %v4054
    %v4087 = vunpack.c.l.bf16 %v4055
    %v4088 = vunpack.c.l.bf16 %v4056
    %v4089 = vunpack.c.l.bf16 %v4057
    %v4090 = vunpack.c.l.bf16 %v4058
    %v4091 = vunpack.c.l.bf16 %v4059
    %v4092 = vunpack.c.l.bf16 %v4060
    %v4093 = vunpack.c.l.bf16 %v4061
    %v4094 = vunpack.c.l.bf16 %v4062
    %v4095 = vunpack.c.l.bf16 %v4063
    %v4096 = vunpack.c.l.bf16 %v4064
    %v4097 = vunpack.c.l.bf16 %v4065
    %s4098 = sshra.s32 %s4023, 3
    %s4099 = sand.u32 %s4023, 7
    %s4100 = sshra.s32 %s4023, 3
    %s4101 = sand.u32 %s4023, 7
    %s4102 = smul.u32 %s4098, 2
    %s4103 = smul.u32 %s4102, 8
    %s4104 = sadd.s32 %s4103, %s4101
    %s4105 = scalar_lea.vmem [#allocation6], %s4104
    %v4106 = vld [vmem:[%s4105] ss:$8 sm:$0x3]
    %s4107 = sadd.s32 %s4023, 8
    %s4108 = sshra.s32 %s4107, 3
    %s4109 = sand.u32 %s4107, 7
    %s4110 = sshra.s32 %s4107, 3
    %s4111 = sand.u32 %s4107, 7
    %s4112 = smul.u32 %s4108, 2
    %s4113 = smul.u32 %s4112, 8
    %s4114 = sadd.s32 %s4113, %s4111
    %s4115 = scalar_lea.vmem [#allocation6], %s4114
    %v4116 = vld [vmem:[%s4115] ss:$8 sm:$0x3]
    %v4118 = vlaneseq
    %v4119 = vshrl.u32 %v4118, 7
    %v4120 = vsub.s32 0, %v4119
    %v4121 = vrot.slane %v4106, %v4120
    %v4122 = vlaneseq
    %v4123 = vshrl.u32 %v4122, 7
    %v4124 = vsub.s32 1, %v4123
    %v4125 = vrot.slane %v4106, %v4124
    %v4129 = vlaneseq
    %v4130 = vshrl.u32 %v4129, 7
    %v4131 = vsub.s32 0, %v4130
    %v4132 = vrot.slane %v4116, %v4131
    %v4133 = vlaneseq
    %v4134 = vshrl.u32 %v4133, 7
    %v4135 = vsub.s32 1, %v4134
    %v4136 = vrot.slane %v4116, %v4135
    %v4139 = vsel %vm571, %v4121, %v4132
    %v4140 = vsel %vm571, %v4125, %v4136
    %4141 = vmatprep.subr.mxu0 0.0
    %4142 = vmatpush1.msra.mxu0 %v4081
    %4143 = vmatprep.subr.mxu0 0.0
    %4144 = vmatpush1.msra.mxu0 %v4080
    %4145 = vmatprep.subr.mxu0 0.0
    %4146 = vmatpush1.msra.mxu0 %v4079
    %4147 = vmatprep.subr.mxu0 0.0
    %4148 = vmatpush1.msra.mxu0 %v4078
    %4149 = vmatprep.subr.mxu0 0.0
    %4150 = vmatpush1.msra.mxu0 %v4077
    %4151 = vmatprep.subr.mxu0 0.0
    %4152 = vmatpush1.msra.mxu0 %v4076
    %4153 = vmatprep.subr.mxu0 0.0
    %4154 = vmatpush1.msra.mxu0 %v4075
    %4155 = vmatprep.subr.mxu0 0.0
    %4156 = vmatpush1.msra.mxu0 %v4074
    %4157 = vmatprep.subr.mxu0 0.0
    %4158 = vmatpush1.msra.mxu0 %v4073
    %4159 = vmatprep.subr.mxu0 0.0
    %4160 = vmatpush1.msra.mxu0 %v4072
    %4161 = vmatprep.subr.mxu0 0.0
    %4162 = vmatpush1.msra.mxu0 %v4071
    %4163 = vmatprep.subr.mxu0 0.0
    %4164 = vmatpush1.msra.mxu0 %v4070
    %4165 = vmatprep.subr.mxu0 0.0
    %4166 = vmatpush1.msra.mxu0 %v4069
    %4167 = vmatprep.subr.mxu0 0.0
    %4168 = vmatpush1.msra.mxu0 %v4068
    %4169 = vmatprep.subr.mxu0 0.0
    %4170 = vmatpush1.msra.mxu0 %v4067
    %4171 = vmatprep.subr.mxu0 0.0
    %4172 = vmatpush1.msra.mxu0 %v4066
    %4173 = vmatprep.subr.mxu0 0.0
    %4174 = vmatpush2.msra.mxu0 %v4097
    %4175 = vmatprep.subr.mxu0 0.0
    %4176 = vmatpush2.msra.mxu0 %v4096
    %4177 = vmatprep.subr.mxu0 0.0
    %4178 = vmatpush2.msra.mxu0 %v4095
    %4179 = vmatprep.subr.mxu0 0.0
    %4180 = vmatpush2.msra.mxu0 %v4094
    %4181 = vmatprep.subr.mxu0 0.0
    %4182 = vmatpush2.msra.mxu0 %v4093
    %4183 = vmatprep.subr.mxu0 0.0
    %4184 = vmatpush2.msra.mxu0 %v4092
    %4185 = vmatprep.subr.mxu0 0.0
    %4186 = vmatpush2.msra.mxu0 %v4091
    %4187 = vmatprep.subr.mxu0 0.0
    %4188 = vmatpush2.msra.mxu0 %v4090
    %4189 = vmatprep.subr.mxu0 0.0
    %4190 = vmatpush2.msra.mxu0 %v4089
    %4191 = vmatprep.subr.mxu0 0.0
    %4192 = vmatpush2.msra.mxu0 %v4088
    %4193 = vmatprep.subr.mxu0 0.0
    %4194 = vmatpush2.msra.mxu0 %v4087
    %4195 = vmatprep.subr.mxu0 0.0
    %4196 = vmatpush2.msra.mxu0 %v4086
    %4197 = vmatprep.subr.mxu0 0.0
    %4198 = vmatpush2.msra.mxu0 %v4085
    %4199 = vmatprep.subr.mxu0 0.0
    %4200 = vmatpush2.msra.mxu0 %v4084
    %4201 = vmatprep.subr.mxu0 0.0
    %4202 = vmatpush2.msra.mxu0 %v4083
    %4203 = vmatprep.subr.mxu0 0.0
    %4204 = vmatpush2.msra.mxu0 %v4082
    %4205 = vmatprep.mubr.f32.mxu0 %v4140
    %4206 = vmatmul.mubr.f32.gmra.mxu0 %v4139
    %v4207 = vpop.f32.mrf.mxu0
    %v4208 = vadd.f32 0.0, %v4207
    %v4209 = vpop.f32.mrf.mxu0
    %4210 = vdwg.mxu0
    %v4211 = vadd.f32 %v4028, %v4208
  $region138: #{encoder_forward.1} parent=0 // loop_footer
    %s4027 = sadd.s32 1, %s4023
  $region139: #{encoder_forward.1} parent=0 // loop_footer_branch
    %4022 = sbr.rel target = $region135
  $region140: #{encoder_forward.1} parent=0 // loop_exit
    _
  %v4212 = vld [vmem:[%s17] sm:$0x1]
  %v4214 = vlaneseq
  %v4215 = vshrl.u32 %v4214, 7
  %v4216 = vsub.s32 0, %v4215
  %v4217 = vrot.slane %v4212, %v4216
  %v4219 = vadd.f32 %v4028, %v4217
  %vm4220 = vcmask 254976
  %4221 = vst.msk [vmem:[%s18] sm:$0x3] %vm4220, %v4219
  // Predicated region
  $region141: #{encoder_forward.1} parent=0 // pred_check
    _
  $region142: #{encoder_forward.1} parent=0 // pred_check_branch
    %4223 = sbr.rel (0) target = $region144
  $region143: #{encoder_forward.1} parent=0 // pred_region
    _
  $region144: #{encoder_forward.1} parent=0 // pred_fallthru
    _
  // Predicated region
  $region145: #{encoder_forward.1} parent=0 // pred_check
    _
  $region146: #{encoder_forward.1} parent=0 // pred_check_branch
    %4225 = sbr.rel (0) target = $region148
  $region147: #{encoder_forward.1} parent=0 // pred_region
    _
  $region148: #{encoder_forward.1} parent=0 // pred_fallthru
    _
  %4226 = vsyncmov [#allocation9]
  %s4227 = vpop.sfrf %4226
  %p4228 = scmp.eq.s32.totalorder %s4227, 0
  %p4229 = pneg %p4228
  %4231 = shalt.err (%p4229)
  %s4232 = scalar_lea.sflag [#allocation9], 1
  %4233 = vsyncmov %s4232
  %s4234 = vpop.sfrf %4233
  %p4235 = scmp.eq.s32.totalorder %s4234, 0
  %p4236 = pneg %p4235
  %4238 = shalt.err (%p4236)

</llo_original>
